<compile_context>
chip_gen: v7x
topology: tpu7x:2x2x1
jax: 0.10.0
libtpu: 0.0.40
codegen_flags: <defaults>
</compile_context>

<pallas_src>
from functools import partial

import jax
import jax.numpy as jnp
from jax import lax
from jax.experimental import pallas as pl
from jax.experimental.pallas import tpu as pltpu


# ----------------------------------------------------------------------------
# Kernel
# ----------------------------------------------------------------------------
def make_pesto_kernel(F, TB, n_ch, n_prefilt, residual, num_output_layers,
                      out_dim, use_bf16, alpha=0.3, eps=1e-5):
    K1, PAD = 15, 7
    Fp = F + 2 * PAD                # per-sample padded stripe width
    N = TB * Fp                     # lane width of the activation slabs
    C0 = n_ch[0]
    cdt = jnp.bfloat16 if use_bf16 else jnp.float32

    def leaky(v):
        return jnp.where(v >= 0, v, alpha * v)

    def mm(a, b):
        # MXU matmul; optionally bf16 operands, always f32 accumulation.
        return jnp.dot(a.astype(cdt), b.astype(cdt),
                       preferred_element_type=jnp.float32)

    def kernel(*refs):
        it = iter(refs)
        x_ref = next(it)                       # (TB, F)
        mask_ref = next(it)                    # (1, N) interior-column mask
        g_ref, beta_ref = next(it), next(it)   # layernorm gamma/beta (1, F)
        w1_ref, b1_ref = next(it), next(it)    # (C0, 15), (C0, 1)
        if n_prefilt > 1:
            wp_ref, bp_ref = next(it), next(it)  # (P-1, C0, 15*C0), (P-1, C0, 1)
        w2_ref, b2_ref = next(it), next(it)
        w3_ref, b3_ref = next(it), next(it)
        w4_ref, b4_ref = next(it), next(it)
        w5_ref, b5_ref = next(it), next(it)
        if num_output_layers > 1:
            tpre_ref = next(it)                # (L-1, F, F)
        tfc_ref = next(it)                     # (F, out_dim)
        o_ref = next(it)                       # (TB, out_dim)
        p1_ref = next(it)                      # VMEM (1, N)  padded LN'd input
        a1_ref = next(it)                      # VMEM (15, N) conv1 im2col
        ap_ref = next(it) if n_prefilt > 1 else None   # VMEM (15*C0, N)
        v_ref = next(it)                       # VMEM (TB, F) flatten buffer

        # ---- LayerNorm over [channel=1, freq] per sample (rows) --------------
        x = x_ref[...]                                        # (TB, F)
        mu = jnp.mean(x, axis=-1, keepdims=True)
        var = jnp.mean((x - mu) ** 2, axis=-1, keepdims=True)
        xn = (x - mu) * lax.rsqrt(var + eps) * g_ref[...] + beta_ref[...]

        # ---- scatter rows into per-sample zero-padded lane stripes -----------
        p1_ref[...] = jnp.zeros(p1_ref.shape, p1_ref.dtype)   # 1 row: ~7 vregs
        for b in range(TB):
            p1_ref[:, pl.ds(b * Fp + PAD, F)] = xn[b:b + 1, :]

        # ---- conv1: Conv1d(1 -> C0, k=15, pad=7) as im2col + one MXU matmul --
        p1 = p1_ref[...]                                      # (1, N)
        for k in range(K1):
            src = p1 if k == PAD else pltpu.roll(p1, (PAD - k) % N, axis=1)
            a1_ref[pl.ds(k, 1), :] = src
        h = leaky(mm(w1_ref[...], a1_ref[...]) + b1_ref[...])  # (C0, N)

        # ---- prefilter layers: Conv1d(C0 -> C0, k=15, pad=7) + LeakyReLU -----
        if n_prefilt > 1:
            mask = mask_ref[...]                              # zero at halo cols
            for p in range(n_prefilt - 1):
                hm = h * mask                                 # per-sample zero pad
                for k in range(K1):
                    src = hm if k == PAD else pltpu.roll(hm, (PAD - k) % N, axis=1)
                    ap_ref[pl.ds(k * C0, C0), :] = src
                hn = leaky(mm(wp_ref[p], ap_ref[...]) + bp_ref[p])
                h = hn + hm if residual else hn

        # ---- 1x1 conv stack (channel matmuls over the lane-dense slab) -------
        h = leaky(mm(w2_ref[...], h) + b2_ref[...])
        h = leaky(mm(w3_ref[...], h) + b3_ref[...])
        h = leaky(mm(w4_ref[...], h) + b4_ref[...])
        # nn.Dropout() -> identity at inference time (deterministic kernel)
        h = mm(w5_ref[...], h) + b5_ref[...]                  # (1, N)

        # ---- flatten: gather per-sample interiors into (TB, F) ---------------
        for b in range(TB):
            s = b * Fp + PAD
            v_ref[pl.ds(b, 1), :] = h[:, s:s + F]
        v = v_ref[...]                                        # (TB, F)

        # ---- pre_fc: optional square ToeplitzLinear(F -> F) + LeakyReLU ------
        if num_output_layers > 1:
            for l in range(num_output_layers - 1):
                v = leaky(mm(v, tpre_ref[l]))

        # ---- fc: ToeplitzLinear(F -> out_dim), then Softmax over last dim ----
        y = mm(v, tfc_ref[...])                               # (TB, out_dim)
        y = y - jnp.max(y, axis=-1, keepdims=True)
        e = jnp.exp(y)
        o_ref[...] = e * pl.reciprocal(jnp.sum(e, axis=-1, keepdims=True),
                                       approx=True)

    return kernel


# ----------------------------------------------------------------------------
# Wrapper (parameter plumbing + pallas_call)
# ----------------------------------------------------------------------------
def toeplitz_matrix_T(w, in_features, out_features):
    """Returns T^T with shape (in, out), T^T[j, o] = w[j - o + out - 1]."""
    idx = (jnp.arange(in_features)[:, None]
           - jnp.arange(out_features)[None, :] + out_features - 1)
    return w[idx]


def pesto_encoder_forward(x, params, *, n_ch, out_dim,
                          n_prefilt=1, residual=False, num_output_layers=1,
                          batch_tile=8, use_bf16=False):
    B, _, F = x.shape
    C0 = n_ch[0]
    assert n_ch[4] == 1, "flatten assumes a single output channel (n_ch[4]==1)"
    # TODO(synk): generalize the flatten/Toeplitz stage for n_ch[4] > 1.

    PAD = 7
    Fp = F + 2 * PAD
    TB = max(1, min(batch_tile, B))
    Bp = ((B + TB - 1) // TB) * TB
    N = TB * Fp

    x2 = x[:, 0, :]                                   # (B, F)
    if Bp != B:
        x2 = jnp.concatenate([x2, jnp.zeros((Bp - B, F), x2.dtype)], axis=0)

    # interior-column mask for the (C, TB*Fp) activation slabs
    col = jnp.arange(N) % Fp
    mask = ((col >= PAD) & (col < PAD + F)).astype(jnp.float32)[None, :]

    tfc = toeplitz_matrix_T(params['w_fc'], F, out_dim)           # (F, out)

    inputs = [x2, mask, params['ln_gamma'], params['ln_beta'],
              params['w1'], params['b1']]
    if n_prefilt > 1:
        # (P-1, C0, C0, 15) -> Wm[p, co, k*C0 + ci] = wp[p, co, ci, k]
        wp_mat = jnp.transpose(params['wp'], (0, 1, 3, 2)).reshape(
            n_prefilt - 1, C0, 15 * C0)
        inputs += [wp_mat, params['bp']]
    inputs += [params['w2'], params['b2'], params['w3'], params['b3'],
               params['w4'], params['b4'], params['w5'], params['b5']]
    if num_output_layers > 1:
        tpre = jnp.stack([toeplitz_matrix_T(params['w_pre'][l], F, F)
                          for l in range(num_output_layers - 1)])
        inputs += [tpre]
    inputs += [tfc]

    in_specs = [pl.BlockSpec((TB, F), lambda i: (i, 0))]
    for a in inputs[1:]:
        in_specs.append(pl.BlockSpec(a.shape, lambda i, _nd=a.ndim: (0,) * _nd))
    out_specs = pl.BlockSpec((TB, out_dim), lambda i: (i, 0))

    scratch = [pltpu.VMEM((1, N), jnp.float32),        # padded LN'd input row
               pltpu.VMEM((15, N), jnp.float32)]       # conv1 im2col
    if n_prefilt > 1:
        scratch.append(pltpu.VMEM((15 * C0, N), jnp.float32))   # prefilt im2col
    scratch.append(pltpu.VMEM((TB, F), jnp.float32))   # flatten buffer

    kernel = make_pesto_kernel(F, TB, n_ch, n_prefilt, residual,
                               num_output_layers, out_dim, use_bf16)

    out = pl.pallas_call(
        kernel,
        grid=(Bp // TB,),
        in_specs=in_specs,
        out_specs=out_specs,
        out_shape=jax.ShapeDtypeStruct((Bp, out_dim), jnp.float32),
        scratch_shapes=scratch,
        compiler_params=pltpu.CompilerParams(dimension_semantics=("parallel",)),
    )(*inputs)
    return out[:B]


# ----------------------------------------------------------------------------
# Deterministic parameter init (shapes from PESTOEncoder.__init__)
# ----------------------------------------------------------------------------
def init_params(key, F, n_ch, n_prefilt, out_dim, num_output_layers):
    keys = list(jax.random.split(key, 32))

    def rnd(shape, scale=0.1):
        return scale * jax.random.normal(keys.pop(), shape, dtype=jnp.float32)

    p = dict(
        ln_gamma=1.0 + rnd((1, F)),
        ln_beta=rnd((1, F)),
        w1=rnd((n_ch[0], 15)), b1=rnd((n_ch[0], 1)),        # Conv1d(1, C0, 15)
        w2=rnd((n_ch[1], n_ch[0])), b2=rnd((n_ch[1], 1)),
        w3=rnd((n_ch[2], n_ch[1])), b3=rnd((n_ch[2], 1)),
        w4=rnd((n_ch[3], n_ch[2])), b4=rnd((n_ch[3], 1)),
        w5=rnd((n_ch[4], n_ch[3])), b5=rnd((n_ch[4], 1)),
        w_fc=rnd((F + out_dim - 1,)),                        # ToeplitzLinear(F, out)
    )
    if n_prefilt > 1:
        p['wp'] = rnd((n_prefilt - 1, n_ch[0], n_ch[0], 15))
        p['bp'] = rnd((n_prefilt - 1, n_ch[0], 1))
    if num_output_layers > 1:
        p['w_pre'] = rnd((num_output_layers - 1, 2 * F - 1))
    return p


# ----------------------------------------------------------------------------
# Pure-JAX reference (lax.conv based) for correctness check
# ----------------------------------------------------------------------------
def reference_forward(x, params, *, n_ch, out_dim,
                      n_prefilt=1, residual=False, num_output_layers=1,
                      alpha=0.3, eps=1e-5):
    B, _, F = x.shape
    leaky = lambda v: jnp.where(v >= 0, v, alpha * v)
    hi = lax.Precision.HIGHEST
    dn = ('NCH', 'OIH', 'NCH')

    mu = jnp.mean(x, axis=(1, 2), keepdims=True)
    var = jnp.mean((x - mu) ** 2, axis=(1, 2), keepdims=True)
    xn = (x - mu) / jnp.sqrt(var + eps) * params['ln_gamma'][None] + params['ln_beta'][None]

    h = lax.conv_general_dilated(xn, params['w1'][:, None, :], (1,), [(7, 7)],
                                 dimension_numbers=dn, precision=hi)
    h = leaky(h + params['b1'][None])

    for p in range(n_prefilt - 1):
        hn = lax.conv_general_dilated(h, params['wp'][p], (1,), [(7, 7)],
                                      dimension_numbers=dn, precision=hi)
        hn = leaky(hn + params['bp'][p][None])
        h = hn + h if residual else hn

    def conv1x1(h, w, b):
        return jnp.einsum('oc,bcf->bof', w, h, precision=hi) + b[None]

    h = leaky(conv1x1(h, params['w2'], params['b2']))
    h = leaky(conv1x1(h, params['w3'], params['b3']))
    h = leaky(conv1x1(h, params['w4'], params['b4']))
    h = conv1x1(h, params['w5'], params['b5'])       # (B, 1, F)
    v = h.reshape(B, F)                              # flatten(start_dim=1)

    def toeplitz_apply(v, w, out_features):
        return lax.conv_general_dilated(
            v[:, None, :], w[None, None, :], (1,),
            [(out_features - 1, out_features - 1)],
            dimension_numbers=dn, precision=hi)[:, 0, :]

    for l in range(num_output_layers - 1):
        v = leaky(toeplitz_apply(v, params['w_pre'][l], F))
    y = toeplitz_apply(v, params['w_fc'], out_dim)
    return jax.nn.softmax(y, axis=-1)


# ----------------------------------------------------------------------------
if __name__ == "__main__":
    B = 16
    F = 96            # n_bins_in (small test size; default module uses 216)
    OUT = 64          # output_dim (default module uses 128)
    n_ch = [16, 16, 8, 1]
    if len(n_ch) < 5:
        n_ch.append(1)   # same as the module's __init__

    key = jax.random.PRNGKey(0)
    kx, kp = jax.random.split(key)
    x = jax.random.normal(kx, (B, 1, F), dtype=jnp.float32)

    configs = [
        # module defaults, f32 MXU operands (v5e-friendly path)
        dict(n_prefilt=1, residual=False, num_output_layers=1, use_bf16=False),
        # exercise prefilter/residual/pre_fc paths, f32
        dict(n_prefilt=3, residual=True, num_output_layers=2, use_bf16=False),
        # same config with bf16 MXU operands (v6e/v7x path), looser tolerance
        dict(n_prefilt=3, residual=True, num_output_layers=2, use_bf16=True),
    ]
    for cfg in configs:
        use_bf16 = cfg.pop('use_bf16')
        params = init_params(kp, F, n_ch, cfg['n_prefilt'], OUT,
                             cfg['num_output_layers'])
        out = pesto_encoder_forward(x, params, n_ch=n_ch, out_dim=OUT,
                                    batch_tile=8, use_bf16=use_bf16, **cfg)
        out = jax.block_until_ready(out)
        ref = reference_forward(x, params, n_ch=n_ch, out_dim=OUT, **cfg)
        assert out.shape == (B, OUT), out.shape
        assert jnp.allclose(jnp.sum(out, axis=-1), 1.0, atol=5e-3)
        atol, rtol = (2e-3, 1e-2) if use_bf16 else (2e-4, 1e-3)
        err = float(jnp.max(jnp.abs(out - ref)))
        assert jnp.allclose(out, ref, atol=atol, rtol=rtol), \
            f"max abs err {err} (bf16={use_bf16})"

    print("KERNEL_OK")
</pallas_src>

<mosaic_0001>
module attributes {stable_mosaic.version = 11 : i64} {
  func.func @kernel(%arg0: i32, %arg1: memref<8x96xf32, #tpu.memory_space<vmem>>, %arg2: memref<1x880xf32, #tpu.memory_space<vmem>>, %arg3: memref<1x96xf32, #tpu.memory_space<vmem>>, %arg4: memref<1x96xf32, #tpu.memory_space<vmem>>, %arg5: memref<16x15xf32, #tpu.memory_space<vmem>>, %arg6: memref<16x1xf32, #tpu.memory_space<vmem>>, %arg7: memref<16x16xf32, #tpu.memory_space<vmem>>, %arg8: memref<16x1xf32, #tpu.memory_space<vmem>>, %arg9: memref<8x16xf32, #tpu.memory_space<vmem>>, %arg10: memref<8x1xf32, #tpu.memory_space<vmem>>, %arg11: memref<1x8xf32, #tpu.memory_space<vmem>>, %arg12: memref<1x1xf32, #tpu.memory_space<vmem>>, %arg13: memref<1x1xf32, #tpu.memory_space<vmem>>, %arg14: memref<1x1xf32, #tpu.memory_space<vmem>>, %arg15: memref<96x64xf32, #tpu.memory_space<vmem>>, %arg16: memref<8x64xf32, #tpu.memory_space<vmem>>, %arg17: memref<1x880xf32, #tpu.memory_space<vmem>>, %arg18: memref<15x880xf32, #tpu.memory_space<vmem>>, %arg19: memref<8x96xf32, #tpu.memory_space<vmem>>) attributes {dimension_semantics = [#tpu.dimension_semantics<parallel>], iteration_bounds = array<i64: 2>, scalar_prefetch = 0 : i64, scratch_operands = 3 : i64, tpu.core_type = #tpu.core_type<tc>, window_params = [{transform_indices = @transform_0, window_bounds = array<i64: 8, 96>}, {pipeline_mode = #tpu.pipeline_mode<synchronous>, transform_indices = @transform_1, window_bounds = array<i64: 1, 880>}, {pipeline_mode = #tpu.pipeline_mode<synchronous>, transform_indices = @transform_2, window_bounds = array<i64: 1, 96>}, {pipeline_mode = #tpu.pipeline_mode<synchronous>, transform_indices = @transform_3, window_bounds = array<i64: 1, 96>}, {pipeline_mode = #tpu.pipeline_mode<synchronous>, transform_indices = @transform_4, window_bounds = array<i64: 16, 15>}, {pipeline_mode = #tpu.pipeline_mode<synchronous>, transform_indices = @transform_5, window_bounds = array<i64: 16, 1>}, {pipeline_mode = #tpu.pipeline_mode<synchronous>, transform_indices = @transform_6, window_bounds = array<i64: 16, 16>}, {pipeline_mode = #tpu.pipeline_mode<synchronous>, transform_indices = @transform_7, window_bounds = array<i64: 16, 1>}, {pipeline_mode = #tpu.pipeline_mode<synchronous>, transform_indices = @transform_8, window_bounds = array<i64: 8, 16>}, {pipeline_mode = #tpu.pipeline_mode<synchronous>, transform_indices = @transform_9, window_bounds = array<i64: 8, 1>}, {pipeline_mode = #tpu.pipeline_mode<synchronous>, transform_indices = @transform_10, window_bounds = array<i64: 1, 8>}, {pipeline_mode = #tpu.pipeline_mode<synchronous>, transform_indices = @transform_11, window_bounds = array<i64: 1, 1>}, {pipeline_mode = #tpu.pipeline_mode<synchronous>, transform_indices = @transform_12, window_bounds = array<i64: 1, 1>}, {pipeline_mode = #tpu.pipeline_mode<synchronous>, transform_indices = @transform_13, window_bounds = array<i64: 1, 1>}, {pipeline_mode = #tpu.pipeline_mode<synchronous>, transform_indices = @transform_14, window_bounds = array<i64: 96, 64>}, {transform_indices = @transform_15, window_bounds = array<i64: 8, 64>}]} {
    %c0 = arith.constant 0 : index
    %c0_0 = arith.constant 0 : index
    %0 = vector.load %arg1[%c0, %c0_0] : memref<8x96xf32, #tpu.memory_space<vmem>>, vector<8x96xf32>
    %cst = arith.constant dense<0.000000e+00> : vector<8xf32>
    %1 = vector.multi_reduction <add>, %0, %cst [1] : vector<8x96xf32> to vector<8xf32>
    %2 = vector.shape_cast %1 : vector<8xf32> to vector<8x1xf32>
    %cst_1 = arith.constant 9.600000e+01 : f32
    %3 = vector.broadcast %cst_1 : f32 to vector<8x1xf32>
    %4 = arith.divf %2, %3 : vector<8x1xf32>
    %5 = vector.broadcast %4 : vector<8x1xf32> to vector<8x96xf32>
    %6 = arith.subf %0, %5 : vector<8x96xf32>
    %7 = arith.mulf %6, %6 : vector<8x96xf32>
    %cst_2 = arith.constant dense<0.000000e+00> : vector<8xf32>
    %8 = vector.multi_reduction <add>, %7, %cst_2 [1] : vector<8x96xf32> to vector<8xf32>
    %9 = vector.shape_cast %8 : vector<8xf32> to vector<8x1xf32>
    %cst_3 = arith.constant 9.600000e+01 : f32
    %10 = vector.broadcast %cst_3 : f32 to vector<8x1xf32>
    %11 = arith.divf %9, %10 : vector<8x1xf32>
    %12 = vector.broadcast %4 : vector<8x1xf32> to vector<8x96xf32>
    %13 = arith.subf %0, %12 : vector<8x96xf32>
    %cst_4 = arith.constant 9.99999974E-6 : f32
    %14 = vector.broadcast %cst_4 : f32 to vector<8x1xf32>
    %15 = arith.addf %11, %14 : vector<8x1xf32>
    %16 = math.rsqrt %15 : vector<8x1xf32>
    %17 = vector.broadcast %16 : vector<8x1xf32> to vector<8x96xf32>
    %18 = arith.mulf %13, %17 : vector<8x96xf32>
    %c0_5 = arith.constant 0 : index
    %c0_6 = arith.constant 0 : index
    %19 = vector.load %arg3[%c0_5, %c0_6] : memref<1x96xf32, #tpu.memory_space<vmem>>, vector<1x96xf32>
    %20 = vector.broadcast %19 : vector<1x96xf32> to vector<8x96xf32>
    %21 = arith.mulf %18, %20 : vector<8x96xf32>
    %c0_7 = arith.constant 0 : index
    %c0_8 = arith.constant 0 : index
    %22 = vector.load %arg4[%c0_7, %c0_8] : memref<1x96xf32, #tpu.memory_space<vmem>>, vector<1x96xf32>
    %23 = vector.broadcast %22 : vector<1x96xf32> to vector<8x96xf32>
    %24 = arith.addf %21, %23 : vector<8x96xf32>
    %cst_9 = arith.constant 0.000000e+00 : f32
    %25 = vector.broadcast %cst_9 : f32 to vector<1x880xf32>
    %c0_10 = arith.constant 0 : index
    %c0_11 = arith.constant 0 : index
    %26 = vector.load %arg17[%c0_10, %c0_11] : memref<1x880xf32, #tpu.memory_space<vmem>>, vector<1x880xf32>
    tpu.vector_store %arg17[%c0_10, %c0_11], %25 {strides = array<i32>} : memref<1x880xf32, #tpu.memory_space<vmem>>, vector<1x880xf32>,
    %27 = vector.extract_strided_slice %24 {offsets = [0, 0], sizes = [1, 96], strides = [1, 1]} : vector<8x96xf32> to vector<1x96xf32>
    %c0_12 = arith.constant 0 : index
    %c7 = arith.constant 7 : index
    %28 = vector.load %arg17[%c0_12, %c7] : memref<1x880xf32, #tpu.memory_space<vmem>>, vector<1x96xf32>
    tpu.vector_store %arg17[%c0_12, %c7], %27 {strides = array<i32>} : memref<1x880xf32, #tpu.memory_space<vmem>>, vector<1x96xf32>,
    %29 = vector.extract_strided_slice %24 {offsets = [1, 0], sizes = [1, 96], strides = [1, 1]} : vector<8x96xf32> to vector<1x96xf32>
    %c0_13 = arith.constant 0 : index
    %c117 = arith.constant 117 : index
    %30 = vector.load %arg17[%c0_13, %c117] : memref<1x880xf32, #tpu.memory_space<vmem>>, vector<1x96xf32>
    tpu.vector_store %arg17[%c0_13, %c117], %29 {strides = array<i32>} : memref<1x880xf32, #tpu.memory_space<vmem>>, vector<1x96xf32>,
    %31 = vector.extract_strided_slice %24 {offsets = [2, 0], sizes = [1, 96], strides = [1, 1]} : vector<8x96xf32> to vector<1x96xf32>
    %c0_14 = arith.constant 0 : index
    %c227 = arith.constant 227 : index
    %32 = vector.load %arg17[%c0_14, %c227] : memref<1x880xf32, #tpu.memory_space<vmem>>, vector<1x96xf32>
    tpu.vector_store %arg17[%c0_14, %c227], %31 {strides = array<i32>} : memref<1x880xf32, #tpu.memory_space<vmem>>, vector<1x96xf32>,
    %33 = vector.extract_strided_slice %24 {offsets = [3, 0], sizes = [1, 96], strides = [1, 1]} : vector<8x96xf32> to vector<1x96xf32>
    %c0_15 = arith.constant 0 : index
    %c337 = arith.constant 337 : index
    %34 = vector.load %arg17[%c0_15, %c337] : memref<1x880xf32, #tpu.memory_space<vmem>>, vector<1x96xf32>
    tpu.vector_store %arg17[%c0_15, %c337], %33 {strides = array<i32>} : memref<1x880xf32, #tpu.memory_space<vmem>>, vector<1x96xf32>,
    %35 = vector.extract_strided_slice %24 {offsets = [4, 0], sizes = [1, 96], strides = [1, 1]} : vector<8x96xf32> to vector<1x96xf32>
    %c0_16 = arith.constant 0 : index
    %c447 = arith.constant 447 : index
    %36 = vector.load %arg17[%c0_16, %c447] : memref<1x880xf32, #tpu.memory_space<vmem>>, vector<1x96xf32>
    tpu.vector_store %arg17[%c0_16, %c447], %35 {strides = array<i32>} : memref<1x880xf32, #tpu.memory_space<vmem>>, vector<1x96xf32>,
    %37 = vector.extract_strided_slice %24 {offsets = [5, 0], sizes = [1, 96], strides = [1, 1]} : vector<8x96xf32> to vector<1x96xf32>
    %c0_17 = arith.constant 0 : index
    %c557 = arith.constant 557 : index
    %38 = vector.load %arg17[%c0_17, %c557] : memref<1x880xf32, #tpu.memory_space<vmem>>, vector<1x96xf32>
    tpu.vector_store %arg17[%c0_17, %c557], %37 {strides = array<i32>} : memref<1x880xf32, #tpu.memory_space<vmem>>, vector<1x96xf32>,
    %39 = vector.extract_strided_slice %24 {offsets = [6, 0], sizes = [1, 96], strides = [1, 1]} : vector<8x96xf32> to vector<1x96xf32>
    %c0_18 = arith.constant 0 : index
    %c667 = arith.constant 667 : index
    %40 = vector.load %arg17[%c0_18, %c667] : memref<1x880xf32, #tpu.memory_space<vmem>>, vector<1x96xf32>
    tpu.vector_store %arg17[%c0_18, %c667], %39 {strides = array<i32>} : memref<1x880xf32, #tpu.memory_space<vmem>>, vector<1x96xf32>,
    %41 = vector.extract_strided_slice %24 {offsets = [7, 0], sizes = [1, 96], strides = [1, 1]} : vector<8x96xf32> to vector<1x96xf32>
    %c0_19 = arith.constant 0 : index
    %c777 = arith.constant 777 : index
    %42 = vector.load %arg17[%c0_19, %c777] : memref<1x880xf32, #tpu.memory_space<vmem>>, vector<1x96xf32>
    tpu.vector_store %arg17[%c0_19, %c777], %41 {strides = array<i32>} : memref<1x880xf32, #tpu.memory_space<vmem>>, vector<1x96xf32>,
    %c0_20 = arith.constant 0 : index
    %c0_21 = arith.constant 0 : index
    %43 = vector.load %arg17[%c0_20, %c0_21] : memref<1x880xf32, #tpu.memory_space<vmem>>, vector<1x880xf32>
    %c7_i32 = arith.constant 7 : i32
    %44 = tpu.dynamic_rotate %43 by %c7_i32 dim 1 : vector<1x880xf32>, i32 -> vector<1x880xf32>
    %c0_22 = arith.constant 0 : index
    %c0_23 = arith.constant 0 : index
    %45 = vector.load %arg18[%c0_22, %c0_23] : memref<15x880xf32, #tpu.memory_space<vmem>>, vector<1x880xf32>
    tpu.vector_store %arg18[%c0_22, %c0_23], %44 {strides = array<i32>} : memref<15x880xf32, #tpu.memory_space<vmem>>, vector<1x880xf32>,
    %c6_i32 = arith.constant 6 : i32
    %46 = tpu.dynamic_rotate %43 by %c6_i32 dim 1 : vector<1x880xf32>, i32 -> vector<1x880xf32>
    %c1 = arith.constant 1 : index
    %c0_24 = arith.constant 0 : index
    %47 = vector.load %arg18[%c1, %c0_24] : memref<15x880xf32, #tpu.memory_space<vmem>>, vector<1x880xf32>
    tpu.vector_store %arg18[%c1, %c0_24], %46 {strides = array<i32>} : memref<15x880xf32, #tpu.memory_space<vmem>>, vector<1x880xf32>,
    %c5_i32 = arith.constant 5 : i32
    %48 = tpu.dynamic_rotate %43 by %c5_i32 dim 1 : vector<1x880xf32>, i32 -> vector<1x880xf32>
    %c2 = arith.constant 2 : index
    %c0_25 = arith.constant 0 : index
    %49 = vector.load %arg18[%c2, %c0_25] : memref<15x880xf32, #tpu.memory_space<vmem>>, vector<1x880xf32>
    tpu.vector_store %arg18[%c2, %c0_25], %48 {strides = array<i32>} : memref<15x880xf32, #tpu.memory_space<vmem>>, vector<1x880xf32>,
    %c4_i32 = arith.constant 4 : i32
    %50 = tpu.dynamic_rotate %43 by %c4_i32 dim 1 : vector<1x880xf32>, i32 -> vector<1x880xf32>
    %c3 = arith.constant 3 : index
    %c0_26 = arith.constant 0 : index
    %51 = vector.load %arg18[%c3, %c0_26] : memref<15x880xf32, #tpu.memory_space<vmem>>, vector<1x880xf32>
    tpu.vector_store %arg18[%c3, %c0_26], %50 {strides = array<i32>} : memref<15x880xf32, #tpu.memory_space<vmem>>, vector<1x880xf32>,
    %c3_i32 = arith.constant 3 : i32
    %52 = tpu.dynamic_rotate %43 by %c3_i32 dim 1 : vector<1x880xf32>, i32 -> vector<1x880xf32>
    %c4 = arith.constant 4 : index
    %c0_27 = arith.constant 0 : index
    %53 = vector.load %arg18[%c4, %c0_27] : memref<15x880xf32, #tpu.memory_space<vmem>>, vector<1x880xf32>
    tpu.vector_store %arg18[%c4, %c0_27], %52 {strides = array<i32>} : memref<15x880xf32, #tpu.memory_space<vmem>>, vector<1x880xf32>,
    %c2_i32 = arith.constant 2 : i32
    %54 = tpu.dynamic_rotate %43 by %c2_i32 dim 1 : vector<1x880xf32>, i32 -> vector<1x880xf32>
    %c5 = arith.constant 5 : index
    %c0_28 = arith.constant 0 : index
    %55 = vector.load %arg18[%c5, %c0_28] : memref<15x880xf32, #tpu.memory_space<vmem>>, vector<1x880xf32>
    tpu.vector_store %arg18[%c5, %c0_28], %54 {strides = array<i32>} : memref<15x880xf32, #tpu.memory_space<vmem>>, vector<1x880xf32>,
    %c1_i32 = arith.constant 1 : i32
    %56 = tpu.dynamic_rotate %43 by %c1_i32 dim 1 : vector<1x880xf32>, i32 -> vector<1x880xf32>
    %c6 = arith.constant 6 : index
    %c0_29 = arith.constant 0 : index
    %57 = vector.load %arg18[%c6, %c0_29] : memref<15x880xf32, #tpu.memory_space<vmem>>, vector<1x880xf32>
    tpu.vector_store %arg18[%c6, %c0_29], %56 {strides = array<i32>} : memref<15x880xf32, #tpu.memory_space<vmem>>, vector<1x880xf32>,
    %c7_30 = arith.constant 7 : index
    %c0_31 = arith.constant 0 : index
    %58 = vector.load %arg18[%c7_30, %c0_31] : memref<15x880xf32, #tpu.memory_space<vmem>>, vector<1x880xf32>
    tpu.vector_store %arg18[%c7_30, %c0_31], %43 {strides = array<i32>} : memref<15x880xf32, #tpu.memory_space<vmem>>, vector<1x880xf32>,
    %c879_i32 = arith.constant 879 : i32
    %59 = tpu.dynamic_rotate %43 by %c879_i32 dim 1 : vector<1x880xf32>, i32 -> vector<1x880xf32>
    %c8 = arith.constant 8 : index
    %c0_32 = arith.constant 0 : index
    %60 = vector.load %arg18[%c8, %c0_32] : memref<15x880xf32, #tpu.memory_space<vmem>>, vector<1x880xf32>
    tpu.vector_store %arg18[%c8, %c0_32], %59 {strides = array<i32>} : memref<15x880xf32, #tpu.memory_space<vmem>>, vector<1x880xf32>,
    %c878_i32 = arith.constant 878 : i32
    %61 = tpu.dynamic_rotate %43 by %c878_i32 dim 1 : vector<1x880xf32>, i32 -> vector<1x880xf32>
    %c9 = arith.constant 9 : index
    %c0_33 = arith.constant 0 : index
    %62 = vector.load %arg18[%c9, %c0_33] : memref<15x880xf32, #tpu.memory_space<vmem>>, vector<1x880xf32>
    tpu.vector_store %arg18[%c9, %c0_33], %61 {strides = array<i32>} : memref<15x880xf32, #tpu.memory_space<vmem>>, vector<1x880xf32>,
    %c877_i32 = arith.constant 877 : i32
    %63 = tpu.dynamic_rotate %43 by %c877_i32 dim 1 : vector<1x880xf32>, i32 -> vector<1x880xf32>
    %c10 = arith.constant 10 : index
    %c0_34 = arith.constant 0 : index
    %64 = vector.load %arg18[%c10, %c0_34] : memref<15x880xf32, #tpu.memory_space<vmem>>, vector<1x880xf32>
    tpu.vector_store %arg18[%c10, %c0_34], %63 {strides = array<i32>} : memref<15x880xf32, #tpu.memory_space<vmem>>, vector<1x880xf32>,
    %c876_i32 = arith.constant 876 : i32
    %65 = tpu.dynamic_rotate %43 by %c876_i32 dim 1 : vector<1x880xf32>, i32 -> vector<1x880xf32>
    %c11 = arith.constant 11 : index
    %c0_35 = arith.constant 0 : index
    %66 = vector.load %arg18[%c11, %c0_35] : memref<15x880xf32, #tpu.memory_space<vmem>>, vector<1x880xf32>
    tpu.vector_store %arg18[%c11, %c0_35], %65 {strides = array<i32>} : memref<15x880xf32, #tpu.memory_space<vmem>>, vector<1x880xf32>,
    %c875_i32 = arith.constant 875 : i32
    %67 = tpu.dynamic_rotate %43 by %c875_i32 dim 1 : vector<1x880xf32>, i32 -> vector<1x880xf32>
    %c12 = arith.constant 12 : index
    %c0_36 = arith.constant 0 : index
    %68 = vector.load %arg18[%c12, %c0_36] : memref<15x880xf32, #tpu.memory_space<vmem>>, vector<1x880xf32>
    tpu.vector_store %arg18[%c12, %c0_36], %67 {strides = array<i32>} : memref<15x880xf32, #tpu.memory_space<vmem>>, vector<1x880xf32>,
    %c874_i32 = arith.constant 874 : i32
    %69 = tpu.dynamic_rotate %43 by %c874_i32 dim 1 : vector<1x880xf32>, i32 -> vector<1x880xf32>
    %c13 = arith.constant 13 : index
    %c0_37 = arith.constant 0 : index
    %70 = vector.load %arg18[%c13, %c0_37] : memref<15x880xf32, #tpu.memory_space<vmem>>, vector<1x880xf32>
    tpu.vector_store %arg18[%c13, %c0_37], %69 {strides = array<i32>} : memref<15x880xf32, #tpu.memory_space<vmem>>, vector<1x880xf32>,
    %c873_i32 = arith.constant 873 : i32
    %71 = tpu.dynamic_rotate %43 by %c873_i32 dim 1 : vector<1x880xf32>, i32 -> vector<1x880xf32>
    %c14 = arith.constant 14 : index
    %c0_38 = arith.constant 0 : index
    %72 = vector.load %arg18[%c14, %c0_38] : memref<15x880xf32, #tpu.memory_space<vmem>>, vector<1x880xf32>
    tpu.vector_store %arg18[%c14, %c0_38], %71 {strides = array<i32>} : memref<15x880xf32, #tpu.memory_space<vmem>>, vector<1x880xf32>,
    %c0_39 = arith.constant 0 : index
    %c0_40 = arith.constant 0 : index
    %73 = vector.load %arg5[%c0_39, %c0_40] : memref<16x15xf32, #tpu.memory_space<vmem>>, vector<16x15xf32>
    %c0_41 = arith.constant 0 : index
    %c0_42 = arith.constant 0 : index
    %74 = vector.load %arg18[%c0_41, %c0_42] : memref<15x880xf32, #tpu.memory_space<vmem>>, vector<15x880xf32>
    %cst_43 = arith.constant dense<0.000000e+00> : vector<16x880xf32>
    %75 = tpu.matmul %73, %74, %cst_43 {dimension_numbers = #tpu.dot_dimension_numbers<[1], [0], [0], [1], [0, 0, 1, 1], [], []>} : vector<16x15xf32>, vector<15x880xf32>, vector<16x880xf32> -> vector<16x880xf32>
    %c0_44 = arith.constant 0 : index
    %c0_45 = arith.constant 0 : index
    %76 = vector.load %arg6[%c0_44, %c0_45] : memref<16x1xf32, #tpu.memory_space<vmem>>, vector<16x1xf32>
    %77 = vector.broadcast %76 : vector<16x1xf32> to vector<16x880xf32>
    %78 = arith.addf %75, %77 : vector<16x880xf32>
    %cst_46 = arith.constant 0.000000e+00 : f32
    %79 = vector.broadcast %cst_46 : f32 to vector<16x880xf32>
    %80 = arith.cmpf oge, %78, %79 : vector<16x880xf32>
    %cst_47 = arith.constant 3.000000e-01 : f32
    %81 = vector.broadcast %cst_47 : f32 to vector<16x880xf32>
    %82 = arith.mulf %81, %78 : vector<16x880xf32>
    %83 = arith.select %80, %78, %82 : vector<16x880xi1>, vector<16x880xf32>
    %c0_48 = arith.constant 0 : index
    %c0_49 = arith.constant 0 : index
    %84 = vector.load %arg7[%c0_48, %c0_49] : memref<16x16xf32, #tpu.memory_space<vmem>>, vector<16x16xf32>
    %cst_50 = arith.constant dense<0.000000e+00> : vector<16x880xf32>
    %85 = tpu.matmul %84, %83, %cst_50 {dimension_numbers = #tpu.dot_dimension_numbers<[1], [0], [0], [1], [0, 0, 1, 1], [], []>} : vector<16x16xf32>, vector<16x880xf32>, vector<16x880xf32> -> vector<16x880xf32>
    %c0_51 = arith.constant 0 : index
    %c0_52 = arith.constant 0 : index
    %86 = vector.load %arg8[%c0_51, %c0_52] : memref<16x1xf32, #tpu.memory_space<vmem>>, vector<16x1xf32>
    %87 = vector.broadcast %86 : vector<16x1xf32> to vector<16x880xf32>
    %88 = arith.addf %85, %87 : vector<16x880xf32>
    %cst_53 = arith.constant 0.000000e+00 : f32
    %89 = vector.broadcast %cst_53 : f32 to vector<16x880xf32>
    %90 = arith.cmpf oge, %88, %89 : vector<16x880xf32>
    %cst_54 = arith.constant 3.000000e-01 : f32
    %91 = vector.broadcast %cst_54 : f32 to vector<16x880xf32>
    %92 = arith.mulf %91, %88 : vector<16x880xf32>
    %93 = arith.select %90, %88, %92 : vector<16x880xi1>, vector<16x880xf32>
    %c0_55 = arith.constant 0 : index
    %c0_56 = arith.constant 0 : index
    %94 = vector.load %arg9[%c0_55, %c0_56] : memref<8x16xf32, #tpu.memory_space<vmem>>, vector<8x16xf32>
    %cst_57 = arith.constant dense<0.000000e+00> : vector<8x880xf32>
    %95 = tpu.matmul %94, %93, %cst_57 {dimension_numbers = #tpu.dot_dimension_numbers<[1], [0], [0], [1], [0, 0, 1, 1], [], []>} : vector<8x16xf32>, vector<16x880xf32>, vector<8x880xf32> -> vector<8x880xf32>
    %c0_58 = arith.constant 0 : index
    %c0_59 = arith.constant 0 : index
    %96 = vector.load %arg10[%c0_58, %c0_59] : memref<8x1xf32, #tpu.memory_space<vmem>>, vector<8x1xf32>
    %97 = vector.broadcast %96 : vector<8x1xf32> to vector<8x880xf32>
    %98 = arith.addf %95, %97 : vector<8x880xf32>
    %cst_60 = arith.constant 0.000000e+00 : f32
    %99 = vector.broadcast %cst_60 : f32 to vector<8x880xf32>
    %100 = arith.cmpf oge, %98, %99 : vector<8x880xf32>
    %cst_61 = arith.constant 3.000000e-01 : f32
    %101 = vector.broadcast %cst_61 : f32 to vector<8x880xf32>
    %102 = arith.mulf %101, %98 : vector<8x880xf32>
    %103 = arith.select %100, %98, %102 : vector<8x880xi1>, vector<8x880xf32>
    %c0_62 = arith.constant 0 : index
    %c0_63 = arith.constant 0 : index
    %104 = vector.load %arg11[%c0_62, %c0_63] : memref<1x8xf32, #tpu.memory_space<vmem>>, vector<1x8xf32>
    %cst_64 = arith.constant dense<0.000000e+00> : vector<1x880xf32>
    %105 = tpu.matmul %104, %103, %cst_64 {dimension_numbers = #tpu.dot_dimension_numbers<[1], [0], [0], [1], [0, 0, 1, 1], [], []>} : vector<1x8xf32>, vector<8x880xf32>, vector<1x880xf32> -> vector<1x880xf32>
    %c0_65 = arith.constant 0 : index
    %c0_66 = arith.constant 0 : index
    %106 = vector.load %arg12[%c0_65, %c0_66] : memref<1x1xf32, #tpu.memory_space<vmem>>, vector<1x1xf32>
    %107 = vector.broadcast %106 : vector<1x1xf32> to vector<1x880xf32>
    %108 = arith.addf %105, %107 : vector<1x880xf32>
    %cst_67 = arith.constant 0.000000e+00 : f32
    %109 = vector.broadcast %cst_67 : f32 to vector<1x880xf32>
    %110 = arith.cmpf oge, %108, %109 : vector<1x880xf32>
    %cst_68 = arith.constant 3.000000e-01 : f32
    %111 = vector.broadcast %cst_68 : f32 to vector<1x880xf32>
    %112 = arith.mulf %111, %108 : vector<1x880xf32>
    %113 = arith.select %110, %108, %112 : vector<1x880xi1>, vector<1x880xf32>
    %c0_69 = arith.constant 0 : index
    %c0_70 = arith.constant 0 : index
    %114 = vector.load %arg13[%c0_69, %c0_70] : memref<1x1xf32, #tpu.memory_space<vmem>>, vector<1x1xf32>
    %cst_71 = arith.constant dense<0.000000e+00> : vector<1x880xf32>
    %115 = tpu.matmul %114, %113, %cst_71 {dimension_numbers = #tpu.dot_dimension_numbers<[1], [0], [0], [1], [0, 0, 1, 1], [], []>} : vector<1x1xf32>, vector<1x880xf32>, vector<1x880xf32> -> vector<1x880xf32>
    %c0_72 = arith.constant 0 : index
    %c0_73 = arith.constant 0 : index
    %116 = vector.load %arg14[%c0_72, %c0_73] : memref<1x1xf32, #tpu.memory_space<vmem>>, vector<1x1xf32>
    %117 = vector.broadcast %116 : vector<1x1xf32> to vector<1x880xf32>
    %118 = arith.addf %115, %117 : vector<1x880xf32>
    %119 = vector.extract_strided_slice %118 {offsets = [0, 7], sizes = [1, 96], strides = [1, 1]} : vector<1x880xf32> to vector<1x96xf32>
    %c0_74 = arith.constant 0 : index
    %c0_75 = arith.constant 0 : index
    %120 = vector.load %arg19[%c0_74, %c0_75] : memref<8x96xf32, #tpu.memory_space<vmem>>, vector<1x96xf32>
    tpu.vector_store %arg19[%c0_74, %c0_75], %119 {strides = array<i32>} : memref<8x96xf32, #tpu.memory_space<vmem>>, vector<1x96xf32>,
    %121 = vector.extract_strided_slice %118 {offsets = [0, 117], sizes = [1, 96], strides = [1, 1]} : vector<1x880xf32> to vector<1x96xf32>
    %c1_76 = arith.constant 1 : index
    %c0_77 = arith.constant 0 : index
    %122 = vector.load %arg19[%c1_76, %c0_77] : memref<8x96xf32, #tpu.memory_space<vmem>>, vector<1x96xf32>
    tpu.vector_store %arg19[%c1_76, %c0_77], %121 {strides = array<i32>} : memref<8x96xf32, #tpu.memory_space<vmem>>, vector<1x96xf32>,
    %123 = vector.extract_strided_slice %118 {offsets = [0, 227], sizes = [1, 96], strides = [1, 1]} : vector<1x880xf32> to vector<1x96xf32>
    %c2_78 = arith.constant 2 : index
    %c0_79 = arith.constant 0 : index
    %124 = vector.load %arg19[%c2_78, %c0_79] : memref<8x96xf32, #tpu.memory_space<vmem>>, vector<1x96xf32>
    tpu.vector_store %arg19[%c2_78, %c0_79], %123 {strides = array<i32>} : memref<8x96xf32, #tpu.memory_space<vmem>>, vector<1x96xf32>,
    %125 = vector.extract_strided_slice %118 {offsets = [0, 337], sizes = [1, 96], strides = [1, 1]} : vector<1x880xf32> to vector<1x96xf32>
    %c3_80 = arith.constant 3 : index
    %c0_81 = arith.constant 0 : index
    %126 = vector.load %arg19[%c3_80, %c0_81] : memref<8x96xf32, #tpu.memory_space<vmem>>, vector<1x96xf32>
    tpu.vector_store %arg19[%c3_80, %c0_81], %125 {strides = array<i32>} : memref<8x96xf32, #tpu.memory_space<vmem>>, vector<1x96xf32>,
    %127 = vector.extract_strided_slice %118 {offsets = [0, 447], sizes = [1, 96], strides = [1, 1]} : vector<1x880xf32> to vector<1x96xf32>
    %c4_82 = arith.constant 4 : index
    %c0_83 = arith.constant 0 : index
    %128 = vector.load %arg19[%c4_82, %c0_83] : memref<8x96xf32, #tpu.memory_space<vmem>>, vector<1x96xf32>
    tpu.vector_store %arg19[%c4_82, %c0_83], %127 {strides = array<i32>} : memref<8x96xf32, #tpu.memory_space<vmem>>, vector<1x96xf32>,
    %129 = vector.extract_strided_slice %118 {offsets = [0, 557], sizes = [1, 96], strides = [1, 1]} : vector<1x880xf32> to vector<1x96xf32>
    %c5_84 = arith.constant 5 : index
    %c0_85 = arith.constant 0 : index
    %130 = vector.load %arg19[%c5_84, %c0_85] : memref<8x96xf32, #tpu.memory_space<vmem>>, vector<1x96xf32>
    tpu.vector_store %arg19[%c5_84, %c0_85], %129 {strides = array<i32>} : memref<8x96xf32, #tpu.memory_space<vmem>>, vector<1x96xf32>,
    %131 = vector.extract_strided_slice %118 {offsets = [0, 667], sizes = [1, 96], strides = [1, 1]} : vector<1x880xf32> to vector<1x96xf32>
    %c6_86 = arith.constant 6 : index
    %c0_87 = arith.constant 0 : index
    %132 = vector.load %arg19[%c6_86, %c0_87] : memref<8x96xf32, #tpu.memory_space<vmem>>, vector<1x96xf32>
    tpu.vector_store %arg19[%c6_86, %c0_87], %131 {strides = array<i32>} : memref<8x96xf32, #tpu.memory_space<vmem>>, vector<1x96xf32>,
    %133 = vector.extract_strided_slice %118 {offsets = [0, 777], sizes = [1, 96], strides = [1, 1]} : vector<1x880xf32> to vector<1x96xf32>
    %c7_88 = arith.constant 7 : index
    %c0_89 = arith.constant 0 : index
    %134 = vector.load %arg19[%c7_88, %c0_89] : memref<8x96xf32, #tpu.memory_space<vmem>>, vector<1x96xf32>
    tpu.vector_store %arg19[%c7_88, %c0_89], %133 {strides = array<i32>} : memref<8x96xf32, #tpu.memory_space<vmem>>, vector<1x96xf32>,
    %c0_90 = arith.constant 0 : index
    %c0_91 = arith.constant 0 : index
    %135 = vector.load %arg19[%c0_90, %c0_91] : memref<8x96xf32, #tpu.memory_space<vmem>>, vector<8x96xf32>
    %c0_92 = arith.constant 0 : index
    %c0_93 = arith.constant 0 : index
    %136 = vector.load %arg15[%c0_92, %c0_93] : memref<96x64xf32, #tpu.memory_space<vmem>>, vector<96x64xf32>
    %cst_94 = arith.constant dense<0.000000e+00> : vector<8x64xf32>
    %137 = tpu.matmul %135, %136, %cst_94 {dimension_numbers = #tpu.dot_dimension_numbers<[1], [0], [0], [1], [0, 0, 1, 1], [], []>} : vector<8x96xf32>, vector<96x64xf32>, vector<8x64xf32> -> vector<8x64xf32>
    %cst_95 = arith.constant dense<0xFF800000> : vector<8xf32>
    %138 = vector.multi_reduction <maximumf>, %137, %cst_95 [1] : vector<8x64xf32> to vector<8xf32>
    %139 = vector.shape_cast %138 : vector<8xf32> to vector<8x1xf32>
    %140 = vector.broadcast %139 : vector<8x1xf32> to vector<8x64xf32>
    %141 = arith.subf %137, %140 : vector<8x64xf32>
    %142 = math.exp %141 : vector<8x64xf32>
    %cst_96 = arith.constant dense<0.000000e+00> : vector<8xf32>
    %143 = vector.multi_reduction <add>, %142, %cst_96 [1] : vector<8x64xf32> to vector<8xf32>
    %144 = vector.shape_cast %143 : vector<8xf32> to vector<8x1xf32>
    %145 = tpu.reciprocal %144 {approx = true} : vector<8x1xf32> -> vector<8x1xf32>
    %146 = vector.broadcast %145 : vector<8x1xf32> to vector<8x64xf32>
    %147 = arith.mulf %142, %146 : vector<8x64xf32>
    %c0_97 = arith.constant 0 : index
    %c0_98 = arith.constant 0 : index
    %148 = vector.load %arg16[%c0_97, %c0_98] : memref<8x64xf32, #tpu.memory_space<vmem>>, vector<8x64xf32>
    tpu.vector_store %arg16[%c0_97, %c0_98], %147 {strides = array<i32>} : memref<8x64xf32, #tpu.memory_space<vmem>>, vector<8x64xf32>,
    return
  }
  func.func @transform_0(%arg0: i32) -> (i32, i32) {
    %c0_i32 = arith.constant 0 : i32
    %c0_i32_0 = arith.constant 0 : i32
    return %arg0, %c0_i32 : i32, i32
  }
  func.func @transform_1(%arg0: i32) -> (i32, i32) {
    %c0_i32 = arith.constant 0 : i32
    %c0_i32_0 = arith.constant 0 : i32
    %c0_i32_1 = arith.constant 0 : i32
    return %c0_i32, %c0_i32_0 : i32, i32
  }
  func.func @transform_2(%arg0: i32) -> (i32, i32) {
    %c0_i32 = arith.constant 0 : i32
    %c0_i32_0 = arith.constant 0 : i32
    %c0_i32_1 = arith.constant 0 : i32
    return %c0_i32, %c0_i32_0 : i32, i32
  }
  func.func @transform_3(%arg0: i32) -> (i32, i32) {
    %c0_i32 = arith.constant 0 : i32
    %c0_i32_0 = arith.constant 0 : i32
    %c0_i32_1 = arith.constant 0 : i32
    return %c0_i32, %c0_i32_0 : i32, i32
  }
  func.func @transform_4(%arg0: i32) -> (i32, i32) {
    %c0_i32 = arith.constant 0 : i32
    %c0_i32_0 = arith.constant 0 : i32
    %c0_i32_1 = arith.constant 0 : i32
    return %c0_i32, %c0_i32_0 : i32, i32
  }
  func.func @transform_5(%arg0: i32) -> (i32, i32) {
    %c0_i32 = arith.constant 0 : i32
    %c0_i32_0 = arith.constant 0 : i32
    %c0_i32_1 = arith.constant 0 : i32
    return %c0_i32, %c0_i32_0 : i32, i32
  }
  func.func @transform_6(%arg0: i32) -> (i32, i32) {
    %c0_i32 = arith.constant 0 : i32
    %c0_i32_0 = arith.constant 0 : i32
    %c0_i32_1 = arith.constant 0 : i32
    return %c0_i32, %c0_i32_0 : i32, i32
  }
  func.func @transform_7(%arg0: i32) -> (i32, i32) {
    %c0_i32 = arith.constant 0 : i32
    %c0_i32_0 = arith.constant 0 : i32
    %c0_i32_1 = arith.constant 0 : i32
    return %c0_i32, %c0_i32_0 : i32, i32
  }
  func.func @transform_8(%arg0: i32) -> (i32, i32) {
    %c0_i32 = arith.constant 0 : i32
    %c0_i32_0 = arith.constant 0 : i32
    %c0_i32_1 = arith.constant 0 : i32
    return %c0_i32, %c0_i32_0 : i32, i32
  }
  func.func @transform_9(%arg0: i32) -> (i32, i32) {
    %c0_i32 = arith.constant 0 : i32
    %c0_i32_0 = arith.constant 0 : i32
    %c0_i32_1 = arith.constant 0 : i32
    return %c0_i32, %c0_i32_0 : i32, i32
  }
  func.func @transform_10(%arg0: i32) -> (i32, i32) {
    %c0_i32 = arith.constant 0 : i32
    %c0_i32_0 = arith.constant 0 : i32
    %c0_i32_1 = arith.constant 0 : i32
    return %c0_i32, %c0_i32_0 : i32, i32
  }
  func.func @transform_11(%arg0: i32) -> (i32, i32) {
    %c0_i32 = arith.constant 0 : i32
    %c0_i32_0 = arith.constant 0 : i32
    %c0_i32_1 = arith.constant 0 : i32
    return %c0_i32, %c0_i32_0 : i32, i32
  }
  func.func @transform_12(%arg0: i32) -> (i32, i32) {
    %c0_i32 = arith.constant 0 : i32
    %c0_i32_0 = arith.constant 0 : i32
    %c0_i32_1 = arith.constant 0 : i32
    return %c0_i32, %c0_i32_0 : i32, i32
  }
  func.func @transform_13(%arg0: i32) -> (i32, i32) {
    %c0_i32 = arith.constant 0 : i32
    %c0_i32_0 = arith.constant 0 : i32
    %c0_i32_1 = arith.constant 0 : i32
    return %c0_i32, %c0_i32_0 : i32, i32
  }
  func.func @transform_14(%arg0: i32) -> (i32, i32) {
    %c0_i32 = arith.constant 0 : i32
    %c0_i32_0 = arith.constant 0 : i32
    %c0_i32_1 = arith.constant 0 : i32
    return %c0_i32, %c0_i32_0 : i32, i32
  }
  func.func @transform_15(%arg0: i32) -> (i32, i32) {
    %c0_i32 = arith.constant 0 : i32
    %c0_i32_0 = arith.constant 0 : i32
    return %arg0, %c0_i32 : i32, i32
  }
}

</mosaic_0001>

<llo_original>
// kernel: tpu_custom_call.1
$region0: #{tpu_custom_call.1}
  #allocation0 [shape = 'u32[]', space=smem, size = 0x4, offset = 0x4, fixed_abs, tag = 'smem constant byte address 0x4 - core index']
  #allocation1 [shape = 'u32[144,128]{1,0:T(1,128)}', space=vmem, size = 0x12000, scoped, tag = 'internal scratch']
  #allocation2 [shape = 'f32[1,880]{1,0:T(1,128)}', space=vmem, size = 0xe00, scoped, tag = 'scratch operand']
  #allocation3 [shape = 'f32[15,880]{1,0:T(8,128)}', space=vmem, size = 0xe000, scoped, tag = 'scratch operand']
  #allocation4 [shape = 'f32[8,96]{1,0:T(8,128)}', space=vmem, size = 0x1000, scoped, tag = 'scratch operand']
  #allocation5 [shape = 'f32[1,1]{1,0:T(1,128)S(1)}', space=vmem, size = 0x200, scoped, tag = 'scoped memory for tpu_custom_call.1']
  #allocation6 [shape = 'f32[1,1]{1,0:T(1,128)S(1)}', space=vmem, size = 0x200, scoped, tag = 'scoped memory for tpu_custom_call.1']
  #allocation7 [shape = 'f32[1,1]{1,0:T(1,128)S(1)}', space=vmem, size = 0x200, scoped, tag = 'scoped memory for tpu_custom_call.1']
  %s0 = inlined_call_operand.vmem [shape: f32[16,96], index: 0, kind: input, shape index: {}]
  %s1 = inlined_call_operand.vmem [shape: f32[1,880], index: 1, kind: input, shape index: {}]
  %s2 = inlined_call_operand.vmem [shape: f32[1,96], index: 2, kind: input, shape index: {}]
  %s3 = inlined_call_operand.vmem [shape: f32[1,96], index: 3, kind: input, shape index: {}]
  %s4 = inlined_call_operand.vmem [shape: f32[16,15], index: 4, kind: input, shape index: {}]
  %s5 = inlined_call_operand.vmem [shape: f32[16,1], index: 5, kind: input, shape index: {}]
  %s6 = inlined_call_operand.vmem [shape: f32[16,16], index: 6, kind: input, shape index: {}]
  %s7 = inlined_call_operand.vmem [shape: f32[16,1], index: 7, kind: input, shape index: {}]
  %s8 = inlined_call_operand.vmem [shape: f32[8,16], index: 8, kind: input, shape index: {}]
  %s9 = inlined_call_operand.vmem [shape: f32[8,1], index: 9, kind: input, shape index: {}]
  %s10 = inlined_call_operand.vmem [shape: f32[1,8], index: 10, kind: input, shape index: {}]
  %s11 = inlined_call_operand.<no memory space> [shape: f32[1,1], index: 11, kind: input, shape index: {}]
  %s12 = inlined_call_operand.<no memory space> [shape: f32[1,1], index: 12, kind: input, shape index: {}]
  %s13 = inlined_call_operand.<no memory space> [shape: f32[1,1], index: 13, kind: input, shape index: {}]
  %s14 = inlined_call_operand.vmem [shape: f32[96,64], index: 14, kind: input, shape index: {}]
  %s15 = inlined_call_operand.hbm [shape: f32[16,64], index: 15, kind: output, shape index: {}]
  %s16 = sld [smem:[#allocation0]]
  $region93: #{tpu_custom_call.1} parent=0
    _
  %s18 = ssub.s32 1, %s16
  %s19 = scalar_select 0, %s18, %s16
  %v20 = vstv %s11
  %21 = vst [vmem:[#allocation5] sm:$0x1] %v20
  %v22 = vstv %s12
  %23 = vst [vmem:[#allocation6] sm:$0x1] %v22
  %v24 = vstv %s13
  %25 = vst [vmem:[#allocation7] sm:$0x1] %v24
  $region1: #{tpu_custom_call.1} parent=0
    #allocation8 [shape = 'u8[8192]{0}', space=vmem, size = 0x2000, scoped, tag = 'output window, operand 0']
    #allocation9 [shape = 's32[2]{0}', space=sflag, size = 0x8, scoped, tag = 'scoped memory for tpu_custom_call.1']
    %26 = vsyncpa [#allocation9], 0
    %s27 = scalar_lea.sflag [#allocation9], 1
    %28 = vsyncpa %s27, 0
    loop: start=0, step=1, limit=4
    $region2: #{tpu_custom_call.1} parent=1 // loop_pre_header
      _
    $region3: #{tpu_custom_call.1} parent=1 // loop_header
      %s30 = sphi 0, %s34
      %p31 = scmp.ge.s32.totalorder %s30, 4
      %s40 = sphi 0, %s42
      %s43 = sphi 0, %s40
      %s44 = sphi 0, %s43
      %s60 = sphi 0, %s44
      %s64 = sphi 0, %s64
      %s66 = sphi 0, %s64
      %s67 = sphi 0, %s66
      %s81 = sphi 0, %s67
      %s85 = sphi 0, %s85
      %s87 = sphi 0, %s85
      %s88 = sphi 0, %s87
      %s102 = sphi 0, %s88
      %s106 = sphi 0, %s106
      %s108 = sphi 0, %s106
      %s109 = sphi 0, %s108
      %s123 = sphi 0, %s109
      %s127 = sphi 0, %s127
      %s129 = sphi 0, %s127
      %s130 = sphi 0, %s129
      %s144 = sphi 0, %s130
      %s148 = sphi 0, %s148
      %s150 = sphi 0, %s148
      %s151 = sphi 0, %s150
      %s165 = sphi 0, %s151
      %s169 = sphi 0, %s169
      %s171 = sphi 0, %s169
      %s172 = sphi 0, %s171
      %s186 = sphi 0, %s172
      %s190 = sphi 0, %s190
      %s192 = sphi 0, %s190
      %s193 = sphi 0, %s192
      %s207 = sphi 0, %s193
      %s211 = sphi 0, %s211
      %s213 = sphi 0, %s211
      %s214 = sphi 0, %s213
      %s228 = sphi 0, %s214
      %s232 = sphi 0, %s232
      %s234 = sphi 0, %s232
      %s235 = sphi 0, %s234
      %s249 = sphi 0, %s235
      %s253 = sphi 0, %s253
      %s255 = sphi 0, %s253
      %s256 = sphi 0, %s255
      %s270 = sphi 0, %s256
      %s274 = sphi 0, %s274
      %s276 = sphi 0, %s274
      %s277 = sphi 0, %s276
      %s291 = sphi 0, %s277
      %s295 = sphi 0, %s295
      %s297 = sphi 0, %s295
      %s298 = sphi 0, %s297
      %s312 = sphi 0, %s298
      %s316 = sphi 0, %s316
      %s318 = sphi 0, %s316
      %s319 = sphi 0, %s318
      %s333 = sphi 0, %s319
      %s337 = sphi 0, %s337
      %s339 = sphi 0, %s337
      %s340 = sphi 0, %s339
      %s354 = sphi 0, %s340
      %s360 = sphi 0, %s362
      %s363 = sphi 0, %s360
      %s364 = sphi 0, %s363
      %s380 = sphi 0, %s364
    $region4: #{tpu_custom_call.1} parent=1 // loop_header_branch
      %33 = sbr.rel (%p31) target = $region8
    $region5: #{tpu_custom_call.1} parent=1 // loop_body
      %s35 = ssub.s32 %s30, 1
      %s36 = ssub.s32 %s30, 2
      %s37 = sadd.s32 %s30, 1
      %s38 = ssub.s32 %s30, %s37
      %p39 = scmp.eq.s32.totalorder %s38, 0
      %s41 = sadd.s32 %s40, 1
      %s42 = scalar_select %p39, %s40, %s41
      %p45 = pneg %p39
      %p46 = scmp.eq.s32.totalorder %s30, 1
      %p47 = por %p45, %p46
      %p48 = scmp.ne.s32.totalorder %s40, %s43
      %p49 = scmp.eq.s32.totalorder %s30, 0
      %p50 = por %p48, %p49
      %p51 = scmp.ne.s32.totalorder %s40, %s43
      %p52 = scmp.eq.s32.totalorder %s35, 1
      %p53 = por %p51, %p52
      %p54 = scmp.ne.s32.totalorder %s43, %s44
      %p55 = scmp.eq.s32.totalorder %s35, 0
      %p56 = por %p54, %p55
      %p57 = scmp.ne.s32.totalorder %s43, %s44
      %p58 = scmp.eq.s32.totalorder %s36, 1
      %p59 = por %p57, %p58
      %p61 = scmp.ne.s32.totalorder %s44, %s60
      %p62 = scmp.eq.s32.totalorder %s36, 0
      %p63 = por %p61, %p62
      %s65 = sadd.s32 %s64, 1
      %p68 = scmp.eq.s32.totalorder %s30, 1
      %p69 = scmp.ne.s32.totalorder %s64, %s66
      %p70 = scmp.eq.s32.totalorder %s30, 0
      %p71 = por %p69, %p70
      %p72 = scmp.ne.s32.totalorder %s64, %s66
      %p73 = scmp.eq.s32.totalorder %s35, 1
      %p74 = por %p72, %p73
      %p75 = scmp.ne.s32.totalorder %s66, %s67
      %p76 = scmp.eq.s32.totalorder %s35, 0
      %p77 = por %p75, %p76
      %p78 = scmp.ne.s32.totalorder %s66, %s67
      %p79 = scmp.eq.s32.totalorder %s36, 1
      %p80 = por %p78, %p79
      %p82 = scmp.ne.s32.totalorder %s67, %s81
      %p83 = scmp.eq.s32.totalorder %s36, 0
      %p84 = por %p82, %p83
      %s86 = sadd.s32 %s85, 1
      %p89 = scmp.eq.s32.totalorder %s30, 1
      %p90 = scmp.ne.s32.totalorder %s85, %s87
      %p91 = scmp.eq.s32.totalorder %s30, 0
      %p92 = por %p90, %p91
      %p93 = scmp.ne.s32.totalorder %s85, %s87
      %p94 = scmp.eq.s32.totalorder %s35, 1
      %p95 = por %p93, %p94
      %p96 = scmp.ne.s32.totalorder %s87, %s88
      %p97 = scmp.eq.s32.totalorder %s35, 0
      %p98 = por %p96, %p97
      %p99 = scmp.ne.s32.totalorder %s87, %s88
      %p100 = scmp.eq.s32.totalorder %s36, 1
      %p101 = por %p99, %p100
      %p103 = scmp.ne.s32.totalorder %s88, %s102
      %p104 = scmp.eq.s32.totalorder %s36, 0
      %p105 = por %p103, %p104
      %s107 = sadd.s32 %s106, 1
      %p110 = scmp.eq.s32.totalorder %s30, 1
      %p111 = scmp.ne.s32.totalorder %s106, %s108
      %p112 = scmp.eq.s32.totalorder %s30, 0
      %p113 = por %p111, %p112
      %p114 = scmp.ne.s32.totalorder %s106, %s108
      %p115 = scmp.eq.s32.totalorder %s35, 1
      %p116 = por %p114, %p115
      %p117 = scmp.ne.s32.totalorder %s108, %s109
      %p118 = scmp.eq.s32.totalorder %s35, 0
      %p119 = por %p117, %p118
      %p120 = scmp.ne.s32.totalorder %s108, %s109
      %p121 = scmp.eq.s32.totalorder %s36, 1
      %p122 = por %p120, %p121
      %p124 = scmp.ne.s32.totalorder %s109, %s123
      %p125 = scmp.eq.s32.totalorder %s36, 0
      %p126 = por %p124, %p125
      %s128 = sadd.s32 %s127, 1
      %p131 = scmp.eq.s32.totalorder %s30, 1
      %p132 = scmp.ne.s32.totalorder %s127, %s129
      %p133 = scmp.eq.s32.totalorder %s30, 0
      %p134 = por %p132, %p133
      %p135 = scmp.ne.s32.totalorder %s127, %s129
      %p136 = scmp.eq.s32.totalorder %s35, 1
      %p137 = por %p135, %p136
      %p138 = scmp.ne.s32.totalorder %s129, %s130
      %p139 = scmp.eq.s32.totalorder %s35, 0
      %p140 = por %p138, %p139
      %p141 = scmp.ne.s32.totalorder %s129, %s130
      %p142 = scmp.eq.s32.totalorder %s36, 1
      %p143 = por %p141, %p142
      %p145 = scmp.ne.s32.totalorder %s130, %s144
      %p146 = scmp.eq.s32.totalorder %s36, 0
      %p147 = por %p145, %p146
      %s149 = sadd.s32 %s148, 1
      %p152 = scmp.eq.s32.totalorder %s30, 1
      %p153 = scmp.ne.s32.totalorder %s148, %s150
      %p154 = scmp.eq.s32.totalorder %s30, 0
      %p155 = por %p153, %p154
      %p156 = scmp.ne.s32.totalorder %s148, %s150
      %p157 = scmp.eq.s32.totalorder %s35, 1
      %p158 = por %p156, %p157
      %p159 = scmp.ne.s32.totalorder %s150, %s151
      %p160 = scmp.eq.s32.totalorder %s35, 0
      %p161 = por %p159, %p160
      %p162 = scmp.ne.s32.totalorder %s150, %s151
      %p163 = scmp.eq.s32.totalorder %s36, 1
      %p164 = por %p162, %p163
      %p166 = scmp.ne.s32.totalorder %s151, %s165
      %p167 = scmp.eq.s32.totalorder %s36, 0
      %p168 = por %p166, %p167
      %s170 = sadd.s32 %s169, 1
      %p173 = scmp.eq.s32.totalorder %s30, 1
      %p174 = scmp.ne.s32.totalorder %s169, %s171
      %p175 = scmp.eq.s32.totalorder %s30, 0
      %p176 = por %p174, %p175
      %p177 = scmp.ne.s32.totalorder %s169, %s171
      %p178 = scmp.eq.s32.totalorder %s35, 1
      %p179 = por %p177, %p178
      %p180 = scmp.ne.s32.totalorder %s171, %s172
      %p181 = scmp.eq.s32.totalorder %s35, 0
      %p182 = por %p180, %p181
      %p183 = scmp.ne.s32.totalorder %s171, %s172
      %p184 = scmp.eq.s32.totalorder %s36, 1
      %p185 = por %p183, %p184
      %p187 = scmp.ne.s32.totalorder %s172, %s186
      %p188 = scmp.eq.s32.totalorder %s36, 0
      %p189 = por %p187, %p188
      %s191 = sadd.s32 %s190, 1
      %p194 = scmp.eq.s32.totalorder %s30, 1
      %p195 = scmp.ne.s32.totalorder %s190, %s192
      %p196 = scmp.eq.s32.totalorder %s30, 0
      %p197 = por %p195, %p196
      %p198 = scmp.ne.s32.totalorder %s190, %s192
      %p199 = scmp.eq.s32.totalorder %s35, 1
      %p200 = por %p198, %p199
      %p201 = scmp.ne.s32.totalorder %s192, %s193
      %p202 = scmp.eq.s32.totalorder %s35, 0
      %p203 = por %p201, %p202
      %p204 = scmp.ne.s32.totalorder %s192, %s193
      %p205 = scmp.eq.s32.totalorder %s36, 1
      %p206 = por %p204, %p205
      %p208 = scmp.ne.s32.totalorder %s193, %s207
      %p209 = scmp.eq.s32.totalorder %s36, 0
      %p210 = por %p208, %p209
      %s212 = sadd.s32 %s211, 1
      %p215 = scmp.eq.s32.totalorder %s30, 1
      %p216 = scmp.ne.s32.totalorder %s211, %s213
      %p217 = scmp.eq.s32.totalorder %s30, 0
      %p218 = por %p216, %p217
      %p219 = scmp.ne.s32.totalorder %s211, %s213
      %p220 = scmp.eq.s32.totalorder %s35, 1
      %p221 = por %p219, %p220
      %p222 = scmp.ne.s32.totalorder %s213, %s214
      %p223 = scmp.eq.s32.totalorder %s35, 0
      %p224 = por %p222, %p223
      %p225 = scmp.ne.s32.totalorder %s213, %s214
      %p226 = scmp.eq.s32.totalorder %s36, 1
      %p227 = por %p225, %p226
      %p229 = scmp.ne.s32.totalorder %s214, %s228
      %p230 = scmp.eq.s32.totalorder %s36, 0
      %p231 = por %p229, %p230
      %s233 = sadd.s32 %s232, 1
      %p236 = scmp.eq.s32.totalorder %s30, 1
      %p237 = scmp.ne.s32.totalorder %s232, %s234
      %p238 = scmp.eq.s32.totalorder %s30, 0
      %p239 = por %p237, %p238
      %p240 = scmp.ne.s32.totalorder %s232, %s234
      %p241 = scmp.eq.s32.totalorder %s35, 1
      %p242 = por %p240, %p241
      %p243 = scmp.ne.s32.totalorder %s234, %s235
      %p244 = scmp.eq.s32.totalorder %s35, 0
      %p245 = por %p243, %p244
      %p246 = scmp.ne.s32.totalorder %s234, %s235
      %p247 = scmp.eq.s32.totalorder %s36, 1
      %p248 = por %p246, %p247
      %p250 = scmp.ne.s32.totalorder %s235, %s249
      %p251 = scmp.eq.s32.totalorder %s36, 0
      %p252 = por %p250, %p251
      %s254 = sadd.s32 %s253, 1
      %p257 = scmp.eq.s32.totalorder %s30, 1
      %p258 = scmp.ne.s32.totalorder %s253, %s255
      %p259 = scmp.eq.s32.totalorder %s30, 0
      %p260 = por %p258, %p259
      %p261 = scmp.ne.s32.totalorder %s253, %s255
      %p262 = scmp.eq.s32.totalorder %s35, 1
      %p263 = por %p261, %p262
      %p264 = scmp.ne.s32.totalorder %s255, %s256
      %p265 = scmp.eq.s32.totalorder %s35, 0
      %p266 = por %p264, %p265
      %p267 = scmp.ne.s32.totalorder %s255, %s256
      %p268 = scmp.eq.s32.totalorder %s36, 1
      %p269 = por %p267, %p268
      %p271 = scmp.ne.s32.totalorder %s256, %s270
      %p272 = scmp.eq.s32.totalorder %s36, 0
      %p273 = por %p271, %p272
      %s275 = sadd.s32 %s274, 1
      %p278 = scmp.eq.s32.totalorder %s30, 1
      %p279 = scmp.ne.s32.totalorder %s274, %s276
      %p280 = scmp.eq.s32.totalorder %s30, 0
      %p281 = por %p279, %p280
      %p282 = scmp.ne.s32.totalorder %s274, %s276
      %p283 = scmp.eq.s32.totalorder %s35, 1
      %p284 = por %p282, %p283
      %p285 = scmp.ne.s32.totalorder %s276, %s277
      %p286 = scmp.eq.s32.totalorder %s35, 0
      %p287 = por %p285, %p286
      %p288 = scmp.ne.s32.totalorder %s276, %s277
      %p289 = scmp.eq.s32.totalorder %s36, 1
      %p290 = por %p288, %p289
      %p292 = scmp.ne.s32.totalorder %s277, %s291
      %p293 = scmp.eq.s32.totalorder %s36, 0
      %p294 = por %p292, %p293
      %s296 = sadd.s32 %s295, 1
      %p299 = scmp.eq.s32.totalorder %s30, 1
      %p300 = scmp.ne.s32.totalorder %s295, %s297
      %p301 = scmp.eq.s32.totalorder %s30, 0
      %p302 = por %p300, %p301
      %p303 = scmp.ne.s32.totalorder %s295, %s297
      %p304 = scmp.eq.s32.totalorder %s35, 1
      %p305 = por %p303, %p304
      %p306 = scmp.ne.s32.totalorder %s297, %s298
      %p307 = scmp.eq.s32.totalorder %s35, 0
      %p308 = por %p306, %p307
      %p309 = scmp.ne.s32.totalorder %s297, %s298
      %p310 = scmp.eq.s32.totalorder %s36, 1
      %p311 = por %p309, %p310
      %p313 = scmp.ne.s32.totalorder %s298, %s312
      %p314 = scmp.eq.s32.totalorder %s36, 0
      %p315 = por %p313, %p314
      %s317 = sadd.s32 %s316, 1
      %p320 = scmp.eq.s32.totalorder %s30, 1
      %p321 = scmp.ne.s32.totalorder %s316, %s318
      %p322 = scmp.eq.s32.totalorder %s30, 0
      %p323 = por %p321, %p322
      %p324 = scmp.ne.s32.totalorder %s316, %s318
      %p325 = scmp.eq.s32.totalorder %s35, 1
      %p326 = por %p324, %p325
      %p327 = scmp.ne.s32.totalorder %s318, %s319
      %p328 = scmp.eq.s32.totalorder %s35, 0
      %p329 = por %p327, %p328
      %p330 = scmp.ne.s32.totalorder %s318, %s319
      %p331 = scmp.eq.s32.totalorder %s36, 1
      %p332 = por %p330, %p331
      %p334 = scmp.ne.s32.totalorder %s319, %s333
      %p335 = scmp.eq.s32.totalorder %s36, 0
      %p336 = por %p334, %p335
      %s338 = sadd.s32 %s337, 1
      %p341 = scmp.eq.s32.totalorder %s30, 1
      %p342 = scmp.ne.s32.totalorder %s337, %s339
      %p343 = scmp.eq.s32.totalorder %s30, 0
      %p344 = por %p342, %p343
      %p345 = scmp.ne.s32.totalorder %s337, %s339
      %p346 = scmp.eq.s32.totalorder %s35, 1
      %p347 = por %p345, %p346
      %p348 = scmp.ne.s32.totalorder %s339, %s340
      %p349 = scmp.eq.s32.totalorder %s35, 0
      %p350 = por %p348, %p349
      %p351 = scmp.ne.s32.totalorder %s339, %s340
      %p352 = scmp.eq.s32.totalorder %s36, 1
      %p353 = por %p351, %p352
      %p355 = scmp.ne.s32.totalorder %s340, %s354
      %p356 = scmp.eq.s32.totalorder %s36, 0
      %p357 = por %p355, %p356
      %s358 = ssub.s32 %s30, %s37
      %p359 = scmp.eq.s32.totalorder %s358, 0
      %s361 = sadd.s32 %s360, 1
      %s362 = scalar_select %p359, %s360, %s361
      %p365 = pneg %p359
      %p366 = scmp.eq.s32.totalorder %s30, 1
      %p367 = por %p365, %p366
      %p368 = scmp.ne.s32.totalorder %s360, %s363
      %p369 = scmp.eq.s32.totalorder %s30, 0
      %p370 = por %p368, %p369
      %p371 = scmp.ne.s32.totalorder %s360, %s363
      %p372 = scmp.eq.s32.totalorder %s35, 1
      %p373 = por %p371, %p372
      %p374 = scmp.ne.s32.totalorder %s363, %s364
      %p375 = scmp.eq.s32.totalorder %s35, 0
      %p376 = por %p374, %p375
      %p377 = scmp.ne.s32.totalorder %s363, %s364
      %p378 = scmp.eq.s32.totalorder %s36, 1
      %p379 = por %p377, %p378
      %p381 = scmp.ne.s32.totalorder %s364, %s380
      %p382 = scmp.eq.s32.totalorder %s36, 0
      %p383 = por %p381, %p382
      %p384 = scmp.le.s32.totalorder 1, %s30
      %p385 = scmp.lt.s32.totalorder %s30, 3
      %p386 = pnand %p384, %p385
      %p387 = pneg %p386
      // Predicated region
      $region9: #{tpu_custom_call.1} parent=5 // pred_check
        _
      $region10: #{tpu_custom_call.1} parent=5 // pred_check_branch
        %389 = sbr.rel (%p386) target = $region12
      $region11: #{tpu_custom_call.1} parent=5 // pred_region
        %s390 = ssub.s32 %s30, 1
        // Predicated region
        $region13: #{tpu_custom_call.1} parent=11 // pred_check
          %p391 = pneg %p77
        $region14: #{tpu_custom_call.1} parent=11 // pred_check_branch
          %393 = sbr.rel (%p391) target = $region16
        $region15: #{tpu_custom_call.1} parent=11 // pred_region
          _
        $region16: #{tpu_custom_call.1} parent=11 // pred_fallthru
          _
        // Predicated region
        $region17: #{tpu_custom_call.1} parent=11 // pred_check
          %p394 = pneg %p98
        $region18: #{tpu_custom_call.1} parent=11 // pred_check_branch
          %396 = sbr.rel (%p394) target = $region20
        $region19: #{tpu_custom_call.1} parent=11 // pred_region
          _
        $region20: #{tpu_custom_call.1} parent=11 // pred_fallthru
          _
        // Predicated region
        $region21: #{tpu_custom_call.1} parent=11 // pred_check
          %p397 = pneg %p119
        $region22: #{tpu_custom_call.1} parent=11 // pred_check_branch
          %399 = sbr.rel (%p397) target = $region24
        $region23: #{tpu_custom_call.1} parent=11 // pred_region
          _
        $region24: #{tpu_custom_call.1} parent=11 // pred_fallthru
          _
        // Predicated region
        $region25: #{tpu_custom_call.1} parent=11 // pred_check
          %p400 = pneg %p140
        $region26: #{tpu_custom_call.1} parent=11 // pred_check_branch
          %402 = sbr.rel (%p400) target = $region28
        $region27: #{tpu_custom_call.1} parent=11 // pred_region
          _
        $region28: #{tpu_custom_call.1} parent=11 // pred_fallthru
          _
        // Predicated region
        $region29: #{tpu_custom_call.1} parent=11 // pred_check
          %p403 = pneg %p161
        $region30: #{tpu_custom_call.1} parent=11 // pred_check_branch
          %405 = sbr.rel (%p403) target = $region32
        $region31: #{tpu_custom_call.1} parent=11 // pred_region
          _
        $region32: #{tpu_custom_call.1} parent=11 // pred_fallthru
          _
        // Predicated region
        $region33: #{tpu_custom_call.1} parent=11 // pred_check
          %p406 = pneg %p182
        $region34: #{tpu_custom_call.1} parent=11 // pred_check_branch
          %408 = sbr.rel (%p406) target = $region36
        $region35: #{tpu_custom_call.1} parent=11 // pred_region
          _
        $region36: #{tpu_custom_call.1} parent=11 // pred_fallthru
          _
        // Predicated region
        $region37: #{tpu_custom_call.1} parent=11 // pred_check
          %p409 = pneg %p203
        $region38: #{tpu_custom_call.1} parent=11 // pred_check_branch
          %411 = sbr.rel (%p409) target = $region40
        $region39: #{tpu_custom_call.1} parent=11 // pred_region
          _
        $region40: #{tpu_custom_call.1} parent=11 // pred_fallthru
          _
        // Predicated region
        $region41: #{tpu_custom_call.1} parent=11 // pred_check
          %p412 = pneg %p224
        $region42: #{tpu_custom_call.1} parent=11 // pred_check_branch
          %414 = sbr.rel (%p412) target = $region44
        $region43: #{tpu_custom_call.1} parent=11 // pred_region
          _
        $region44: #{tpu_custom_call.1} parent=11 // pred_fallthru
          _
        // Predicated region
        $region45: #{tpu_custom_call.1} parent=11 // pred_check
          %p415 = pneg %p245
        $region46: #{tpu_custom_call.1} parent=11 // pred_check_branch
          %417 = sbr.rel (%p415) target = $region48
        $region47: #{tpu_custom_call.1} parent=11 // pred_region
          _
        $region48: #{tpu_custom_call.1} parent=11 // pred_fallthru
          _
        // Predicated region
        $region49: #{tpu_custom_call.1} parent=11 // pred_check
          %p418 = pneg %p266
        $region50: #{tpu_custom_call.1} parent=11 // pred_check_branch
          %420 = sbr.rel (%p418) target = $region52
        $region51: #{tpu_custom_call.1} parent=11 // pred_region
          _
        $region52: #{tpu_custom_call.1} parent=11 // pred_fallthru
          _
        // Predicated region
        $region53: #{tpu_custom_call.1} parent=11 // pred_check
          %p421 = pneg %p287
        $region54: #{tpu_custom_call.1} parent=11 // pred_check_branch
          %423 = sbr.rel (%p421) target = $region56
        $region55: #{tpu_custom_call.1} parent=11 // pred_region
          _
        $region56: #{tpu_custom_call.1} parent=11 // pred_fallthru
          _
        // Predicated region
        $region57: #{tpu_custom_call.1} parent=11 // pred_check
          %p424 = pneg %p308
        $region58: #{tpu_custom_call.1} parent=11 // pred_check_branch
          %426 = sbr.rel (%p424) target = $region60
        $region59: #{tpu_custom_call.1} parent=11 // pred_region
          _
        $region60: #{tpu_custom_call.1} parent=11 // pred_fallthru
          _
        // Predicated region
        $region61: #{tpu_custom_call.1} parent=11 // pred_check
          %p427 = pneg %p329
        $region62: #{tpu_custom_call.1} parent=11 // pred_check_branch
          %429 = sbr.rel (%p427) target = $region64
        $region63: #{tpu_custom_call.1} parent=11 // pred_region
          _
        $region64: #{tpu_custom_call.1} parent=11 // pred_fallthru
          _
        // Predicated region
        $region65: #{tpu_custom_call.1} parent=11 // pred_check
          %p430 = pneg %p350
        $region66: #{tpu_custom_call.1} parent=11 // pred_check_branch
          %432 = sbr.rel (%p430) target = $region68
        $region67: #{tpu_custom_call.1} parent=11 // pred_region
          _
        $region68: #{tpu_custom_call.1} parent=11 // pred_fallthru
          _
      $region12: #{tpu_custom_call.1} parent=5 // pred_fallthru
        _
      %p433 = scmp.lt.s32.totalorder %s30, 2
      // Predicated region
      $region69: #{tpu_custom_call.1} parent=5 // pred_check
        %p434 = pneg %p433
      $region70: #{tpu_custom_call.1} parent=5 // pred_check_branch
        %436 = sbr.rel (%p434) target = $region72
      $region71: #{tpu_custom_call.1} parent=5 // pred_region
        // Predicated region
        $region73: #{tpu_custom_call.1} parent=71 // pred_check
          %p437 = pneg %p50
        $region74: #{tpu_custom_call.1} parent=71 // pred_check_branch
          %439 = sbr.rel (%p437) target = $region76
        $region75: #{tpu_custom_call.1} parent=71 // pred_region
          %p440 = scmp.lt.s32.totalorder %s30, 1
          %s441 = scalar_select %p440, %s30, 1
          %s442 = smul.addr %s441, 8
          %s443 = scalar_lea.vmem %s0, %s442
        $region76: #{tpu_custom_call.1} parent=71 // pred_fallthru
          _
      $region72: #{tpu_custom_call.1} parent=5 // pred_fallthru
        _
      %p444 = scmp.le.s32.totalorder 1, %s30
      %p445 = scmp.lt.s32.totalorder %s30, 3
      %p446 = pnand %p444, %p445
      %p447 = pneg %p446
      // Predicated region
      $region77: #{tpu_custom_call.1} parent=5 // pred_check
        _
      $region78: #{tpu_custom_call.1} parent=5 // pred_check_branch
        %449 = sbr.rel (%p446) target = $region80
      $region79: #{tpu_custom_call.1} parent=5 // pred_region
        %s450 = ssub.s32 %s30, 1
        %p451 = scmp.lt.s32.totalorder %s35, 1
        %s452 = scalar_select %p451, %s35, 1
        %s453 = smul.addr %s452, 8
        %s454 = scalar_lea.vmem %s0, %s453
        %p455 = pneg %p56
        %p456 = pneg %p53
        %p457 = pneg %p77
        %p458 = pneg %p74
        %p459 = pneg %p98
        %p460 = pneg %p95
        %p461 = pneg %p119
        %p462 = pneg %p116
        %p463 = pneg %p140
        %p464 = pneg %p137
        %p465 = pneg %p161
        %p466 = pneg %p158
        %p467 = pneg %p182
        %p468 = pneg %p179
        %p469 = pneg %p203
        %p470 = pneg %p200
        %p471 = pneg %p224
        %p472 = pneg %p221
        %p473 = pneg %p245
        %p474 = pneg %p242
        %p475 = pneg %p266
        %p476 = pneg %p263
        %p477 = pneg %p287
        %p478 = pneg %p284
        %p479 = pneg %p308
        %p480 = pneg %p305
        %p481 = pneg %p329
        %p482 = pneg %p326
        %p483 = pneg %p350
        %p484 = pneg %p347
        %p485 = pneg %p376
        %p486 = pneg %p373
        %s487 = sand.u32 %s363, 1
        %s488 = scalar_lea.sflag [#allocation9], %s487
        %s489 = sand.u32 %s363, 1
        %s490 = smul.addr %s489, 8
        %s491 = scalar_lea.vmem [#allocation8], %s490
        %p492 = scmp.lt.s32.totalorder %s35, 1
        %s493 = scalar_select %p492, %s35, 1
        %s494 = smul.addr %s493, 8
        %s495 = scalar_lea.vmem %s0, %s494
        %v496 = vld [vmem:[%s495] sm:$0xff]
        %vm497 = vcmask 785408
        %v498 = vsel %vm497, %v496, 0.0
        %499 = vadd.xlane.f32.xlu0 %v498
        %v500 = vpop.xlane.xlu0 %499
        %v501 = vrcp.pop 96.0
        %v502 = vmul.f32 %v500, %v501
        %v503 = vsub.f32 %v496, %v502
        %v504 = vmul.f32 %v503, %v503
        %v505 = vsel %vm497, %v504, 0.0
        %506 = vadd.xlane.f32.xlu0 %v505
        %v507 = vpop.xlane.xlu0 %506
        %v508 = vmul.f32 %v507, %v501
        %v509 = vadd.f32 %v508, 1e-05
        %v510 = vrsqrt.pop %v509
        %v511 = vmul.f32 %v503, %v510
        %v512 = vld [vmem:[%s2] sm:$0x1]
        %v514 = vlaneseq
        %v515 = vshrl.u32 %v514, 7
        %v516 = vsub.s32 0, %v515
        %v517 = vrot.slane %v512, %v516
        %v519 = vmul.f32 %v511, %v517
        %v520 = vld [vmem:[%s3] sm:$0x1]
        %v522 = vlaneseq
        %v523 = vshrl.u32 %v522, 7
        %v524 = vsub.s32 0, %v523
        %v525 = vrot.slane %v520, %v524
        %v527 = vadd.f32 %v519, %v525
        %v528 = vlaneseq
        %vm529 = vcmp.ge.s32.totalorder %v528, 0
        %vm530 = vcmp.lt.s32.totalorder %v528, 880
        %vm531 = vmand %vm529, %vm530
        %532 = vst.msk [vmem:[#allocation2] sm:$0x7f] %vm531, 0.0
        %v535 = vunpack.c.l.s4 1966171168
        %v536 = vunpack.c.0.s8 %v535
        %v537 = vlaneseq
        %v538 = vshrl.u32 %v537, 7
        %v539 = vsub.s32 %v536, %v538
        %v540 = vrot.slane %v527, %v539
        %v542 = vunpack.c.l.s4 1966171168
        %v543 = vunpack.c.0.s8 %v542
        %v544 = vlaneseq
        %v545 = vshrl.u32 %v544, 7
        %v546 = vsub.s32 %v543, %v545
        %v547 = vrot.slane %v540, %v546
        %548 = vrot.lane.b32.xlu0 %v547, 7
        %v549 = vpop.permute.xlu0 %548
        %vm551 = vcmp.ge.s32.totalorder %v528, 7
        %vm552 = vcmp.lt.s32.totalorder %v528, 103
        %vm553 = vmand %vm551, %vm552
        %554 = vst.msk [vmem:[#allocation2] sm:$0x1] %vm553, %v549
        %v555 = vcombine.high %v540, %v540
        %v557 = vunpack.c.l.s4 1966171168
        %v558 = vunpack.c.0.s8 %v557
        %v559 = vlaneseq
        %v560 = vshrl.u32 %v559, 7
        %v561 = vsub.s32 %v558, %v560
        %v562 = vrot.slane %v555, %v561
        %563 = vrot.lane.b32.xlu0 %v562, 117
        %v564 = vpop.permute.xlu0 %563
        %v565 = vrot.slane %v564, 7
        %vm566 = vcmask 957440
        %v567 = vsel %vm566, %v565, %v564
        %vm569 = vcmp.ge.s32.totalorder %v528, 117
        %vm570 = vcmp.lt.s32.totalorder %v528, 213
        %vm571 = vmand %vm569, %vm570
        %572 = vst.msk [vmem:[#allocation2] sm:$0x3] %vm571, %v567
        %v573 = vcombine.high %v547, %v547
        %574 = vrot.lane.b32.xlu0 %v573, 99
        %v575 = vpop.permute.xlu0 %574
        %v576 = vrot.slane %v575, 7
        %vm577 = vcmask 809984
        %v578 = vsel %vm577, %v576, %v575
        %vm580 = vcmp.ge.s32.totalorder %v528, 99
        %vm581 = vcmp.lt.s32.totalorder %v528, 195
        %vm582 = vmand %vm580, %vm581
        %583 = vst.msk [vmem:[#allocation2 + $0x1] sm:$0x3] %vm582, %v578
        %v584 = vcombine.high %v562, %v562
        %585 = vrot.lane.b32.xlu0 %v584, 81
        %v586 = vpop.permute.xlu0 %585
        %v587 = vrot.slane %v586, 7
        %vm588 = vcmask 662528
        %v589 = vsel %vm588, %v587, %v586
        %vm591 = vcmp.ge.s32.totalorder %v528, 81
        %vm592 = vcmp.lt.s32.totalorder %v528, 177
        %vm593 = vmand %vm591, %vm592
        %594 = vst.msk [vmem:[#allocation2 + $0x2] sm:$0x3] %vm593, %v589
        %v595 = vcombine.high %v527, %v527
        %v597 = vunpack.c.l.s4 1966171168
        %v598 = vunpack.c.0.s8 %v597
        %v599 = vlaneseq
        %v600 = vshrl.u32 %v599, 7
        %v601 = vsub.s32 %v598, %v600
        %v602 = vrot.slane %v595, %v601
        %v604 = vunpack.c.l.s4 1966171168
        %v605 = vunpack.c.0.s8 %v604
        %v606 = vlaneseq
        %v607 = vshrl.u32 %v606, 7
        %v608 = vsub.s32 %v605, %v607
        %v609 = vrot.slane %v602, %v608
        %610 = vrot.lane.b32.xlu0 %v609, 63
        %v611 = vpop.permute.xlu0 %610
        %v612 = vrot.slane %v611, 7
        %vm613 = vcmask 515072
        %v614 = vsel %vm613, %v612, %v611
        %vm616 = vcmp.ge.s32.totalorder %v528, 63
        %vm617 = vcmp.lt.s32.totalorder %v528, 159
        %vm618 = vmand %vm616, %vm617
        %619 = vst.msk [vmem:[#allocation2 + $0x3] sm:$0x3] %vm618, %v614
        %v620 = vcombine.high %v602, %v602
        %v622 = vunpack.c.l.s4 1966171168
        %v623 = vunpack.c.0.s8 %v622
        %v624 = vlaneseq
        %v625 = vshrl.u32 %v624, 7
        %v626 = vsub.s32 %v623, %v625
        %v627 = vrot.slane %v620, %v626
        %628 = vrot.lane.b32.xlu0 %v627, 45
        %v629 = vpop.permute.xlu0 %628
        %v630 = vrot.slane %v629, 7
        %vm631 = vcmask 367616
        %v632 = vsel %vm631, %v630, %v629
        %vm634 = vcmp.ge.s32.totalorder %v528, 45
        %vm635 = vcmp.lt.s32.totalorder %v528, 141
        %vm636 = vmand %vm634, %vm635
        %637 = vst.msk [vmem:[#allocation2 + $0x4] sm:$0x3] %vm636, %v632
        %v638 = vcombine.high %v609, %v609
        %639 = vrot.lane.b32.xlu0 %v638, 27
        %v640 = vpop.permute.xlu0 %639
        %vm642 = vcmp.ge.s32.totalorder %v528, 27
        %vm643 = vcmp.lt.s32.totalorder %v528, 123
        %vm644 = vmand %vm642, %vm643
        %645 = vst.msk [vmem:[#allocation2 + $0x5] sm:$0x1] %vm644, %v640
        %v646 = vcombine.high %v627, %v627
        %647 = vrot.lane.b32.xlu0 %v646, 9
        %v648 = vpop.permute.xlu0 %647
        %vm650 = vcmp.ge.s32.totalorder %v528, 9
        %vm651 = vcmp.lt.s32.totalorder %v528, 105
        %vm652 = vmand %vm650, %vm651
        %653 = vst.msk [vmem:[#allocation2 + $0x6] sm:$0x1] %vm652, %v648
        %v654 = vld [vmem:[#allocation2] sm:$0x7f]
        %v656 = vlaneseq
        %v657 = vshrl.u32 %v656, 7
        %v658 = vsub.s32 0, %v657
        %v659 = vrot.slane %v654, %v658
        %v660 = vlaneseq
        %v661 = vshrl.u32 %v660, 7
        %v662 = vsub.s32 1, %v661
        %v663 = vrot.slane %v654, %v662
        %v664 = vlaneseq
        %v665 = vshrl.u32 %v664, 7
        %v666 = vsub.s32 2, %v665
        %v667 = vrot.slane %v654, %v666
        %v668 = vlaneseq
        %v669 = vshrl.u32 %v668, 7
        %v670 = vsub.s32 3, %v669
        %v671 = vrot.slane %v654, %v670
        %v672 = vlaneseq
        %v673 = vshrl.u32 %v672, 7
        %v674 = vsub.s32 4, %v673
        %v675 = vrot.slane %v654, %v674
        %v676 = vlaneseq
        %v677 = vshrl.u32 %v676, 7
        %v678 = vsub.s32 5, %v677
        %v679 = vrot.slane %v654, %v678
        %v680 = vlaneseq
        %v681 = vshrl.u32 %v680, 7
        %v682 = vsub.s32 6, %v681
        %v683 = vrot.slane %v654, %v682
        %vm691 = vcmask 1048448
        %692 = vrot.lane.b32.xlu0 %v659, 112
        %v693 = vpop.permute.xlu0 %692
        %v694 = vsel %vm691, %v693, %v683
        %695 = vrot.lane.b32.xlu0 %v663, 112
        %v696 = vpop.permute.xlu0 %695
        %697 = vrot.lane.b32.xlu0 %v667, 112
        %v698 = vpop.permute.xlu0 %697
        %699 = vrot.lane.b32.xlu0 %v671, 112
        %v700 = vpop.permute.xlu0 %699
        %701 = vrot.lane.b32.xlu0 %v675, 112
        %v702 = vpop.permute.xlu0 %701
        %703 = vrot.lane.b32.xlu0 %v679, 112
        %v704 = vpop.permute.xlu0 %703
        %705 = vrot.lane.b32.xlu0 %v694, 112
        %v706 = vpop.permute.xlu0 %705
        %v707 = vsel %vm691, %v696, %v693
        %v708 = vsel %vm691, %v698, %v696
        %v709 = vsel %vm691, %v700, %v698
        %v710 = vsel %vm691, %v702, %v700
        %v711 = vsel %vm691, %v704, %v702
        %v712 = vsel %vm691, %v706, %v704
        %v721 = vcombine.low %v694, %v707
        %v722 = vcombine.low %v708, %v709
        %v723 = vcombine.low %v710, %v711
        %v724 = vcombine.low %v712, %v706
        %v726 = vunpack.c.l.s4 1966171168
        %v727 = vunpack.c.0.s8 %v726
        %v728 = vlaneseq
        %v729 = vshrl.u32 %v728, 7
        %v730 = vsub.s32 %v727, %v729
        %v731 = vrot.slane %v721, %v730
        %v733 = vunpack.c.l.s4 1966171168
        %v734 = vunpack.c.0.s8 %v733
        %v735 = vlaneseq
        %v736 = vshrl.u32 %v735, 7
        %v737 = vsub.s32 %v734, %v736
        %v738 = vrot.slane %v722, %v737
        %v740 = vunpack.c.l.s4 1966171168
        %v741 = vunpack.c.0.s8 %v740
        %v742 = vlaneseq
        %v743 = vshrl.u32 %v742, 7
        %v744 = vsub.s32 %v741, %v743
        %v745 = vrot.slane %v723, %v744
        %v747 = vunpack.c.l.s4 1966171168
        %v748 = vunpack.c.0.s8 %v747
        %v749 = vlaneseq
        %v750 = vshrl.u32 %v749, 7
        %v751 = vsub.s32 %v748, %v750
        %v752 = vrot.slane %v724, %v751
        %v753 = vcombine.low %v731, %v738
        %v754 = vcombine.low %v745, %v752
        %v756 = vunpack.c.l.s4 1966171168
        %v757 = vunpack.c.0.s8 %v756
        %v758 = vlaneseq
        %v759 = vshrl.u32 %v758, 7
        %v760 = vsub.s32 %v757, %v759
        %v761 = vrot.slane %v753, %v760
        %v763 = vunpack.c.l.s4 1966171168
        %v764 = vunpack.c.0.s8 %v763
        %v765 = vlaneseq
        %v766 = vshrl.u32 %v765, 7
        %v767 = vsub.s32 %v764, %v766
        %v768 = vrot.slane %v754, %v767
        %v769 = vcombine.low %v761, %v768
        %770 = vrot.lane.b32.xlu0 %v769, 23
        %v771 = vpop.permute.xlu0 %770
        %v772 = vrot.slane %v771, 1
        %vm773 = vcmask 187392
        %v774 = vsel %vm773, %v771, %v772
        %776 = vst.msk [vmem:[#allocation3] ss:$8 sm:$0xf] %vm531, %v774
        %777 = vst.msk [vmem:[#allocation3] ss:$8 sm:$0x70] %vm531, %v774
        %778 = vrot.lane.b32.xlu0 %v769, 22
        %v779 = vpop.permute.xlu0 %778
        %v780 = vrot.slane %v779, 1
        %vm781 = vcmask 179200
        %v782 = vsel %vm781, %v779, %v780
        %s784 = scalar_lea.vmem [#allocation3], 1
        %785 = vst.msk [vmem:[%s784] ss:$8 sm:$0xf] %vm531, %v782
        %786 = vst.msk [vmem:[%s784] ss:$8 sm:$0x70] %vm531, %v782
        %787 = vrot.lane.b32.xlu0 %v769, 21
        %v788 = vpop.permute.xlu0 %787
        %v789 = vrot.slane %v788, 1
        %vm790 = vcmask 171008
        %v791 = vsel %vm790, %v788, %v789
        %s793 = scalar_lea.vmem [#allocation3], 2
        %794 = vst.msk [vmem:[%s793] ss:$8 sm:$0xf] %vm531, %v791
        %795 = vst.msk [vmem:[%s793] ss:$8 sm:$0x70] %vm531, %v791
        %796 = vrot.lane.b32.xlu0 %v769, 20
        %v797 = vpop.permute.xlu0 %796
        %v798 = vrot.slane %v797, 1
        %vm799 = vcmask 162816
        %v800 = vsel %vm799, %v797, %v798
        %s802 = scalar_lea.vmem [#allocation3], 3
        %803 = vst.msk [vmem:[%s802] ss:$8 sm:$0xf] %vm531, %v800
        %804 = vst.msk [vmem:[%s802] ss:$8 sm:$0x70] %vm531, %v800
        %805 = vrot.lane.b32.xlu0 %v769, 19
        %v806 = vpop.permute.xlu0 %805
        %v807 = vrot.slane %v806, 1
        %vm808 = vcmask 154624
        %v809 = vsel %vm808, %v806, %v807
        %s811 = scalar_lea.vmem [#allocation3], 4
        %812 = vst.msk [vmem:[%s811] ss:$8 sm:$0xf] %vm531, %v809
        %813 = vst.msk [vmem:[%s811] ss:$8 sm:$0x70] %vm531, %v809
        %814 = vrot.lane.b32.xlu0 %v769, 18
        %v815 = vpop.permute.xlu0 %814
        %v816 = vrot.slane %v815, 1
        %vm817 = vcmask 146432
        %v818 = vsel %vm817, %v815, %v816
        %s820 = scalar_lea.vmem [#allocation3], 5
        %821 = vst.msk [vmem:[%s820] ss:$8 sm:$0xf] %vm531, %v818
        %822 = vst.msk [vmem:[%s820] ss:$8 sm:$0x70] %vm531, %v818
        %823 = vrot.lane.b32.xlu0 %v769, 17
        %v824 = vpop.permute.xlu0 %823
        %v825 = vrot.slane %v824, 1
        %vm826 = vcmask 138240
        %v827 = vsel %vm826, %v824, %v825
        %s829 = scalar_lea.vmem [#allocation3], 6
        %830 = vst.msk [vmem:[%s829] ss:$8 sm:$0xf] %vm531, %v827
        %831 = vst.msk [vmem:[%s829] ss:$8 sm:$0x70] %vm531, %v827
        %s832 = scalar_lea.vmem [#allocation3], 7
        %833 = vst.msk [vmem:[%s832] ss:$8 sm:$0xf] %vm531, %v654
        %834 = vst.msk [vmem:[%s832] ss:$8 sm:$0x70] %vm531, %v654
        %v835 = vcombine.low %v659, %v663
        %v836 = vcombine.low %v667, %v671
        %v837 = vcombine.low %v675, %v679
        %v839 = vunpack.c.l.s4 1966171168
        %v840 = vunpack.c.0.s8 %v839
        %v841 = vlaneseq
        %v842 = vshrl.u32 %v841, 7
        %v843 = vsub.s32 %v840, %v842
        %v844 = vrot.slane %v835, %v843
        %v846 = vunpack.c.l.s4 1966171168
        %v847 = vunpack.c.0.s8 %v846
        %v848 = vlaneseq
        %v849 = vshrl.u32 %v848, 7
        %v850 = vsub.s32 %v847, %v849
        %v851 = vrot.slane %v836, %v850
        %v853 = vunpack.c.l.s4 1966171168
        %v854 = vunpack.c.0.s8 %v853
        %v855 = vlaneseq
        %v856 = vshrl.u32 %v855, 7
        %v857 = vsub.s32 %v854, %v856
        %v858 = vrot.slane %v837, %v857
        %v860 = vunpack.c.l.s4 1966171168
        %v861 = vunpack.c.0.s8 %v860
        %v862 = vlaneseq
        %v863 = vshrl.u32 %v862, 7
        %v864 = vsub.s32 %v861, %v863
        %v865 = vrot.slane %v694, %v864
        %v866 = vcombine.low %v844, %v851
        %v867 = vcombine.low %v858, %v865
        %v869 = vunpack.c.l.s4 1966171168
        %v870 = vunpack.c.0.s8 %v869
        %v871 = vlaneseq
        %v872 = vshrl.u32 %v871, 7
        %v873 = vsub.s32 %v870, %v872
        %v874 = vrot.slane %v866, %v873
        %v876 = vunpack.c.l.s4 1966171168
        %v877 = vunpack.c.0.s8 %v876
        %v878 = vlaneseq
        %v879 = vshrl.u32 %v878, 7
        %v880 = vsub.s32 %v877, %v879
        %v881 = vrot.slane %v867, %v880
        %v882 = vcombine.low %v874, %v881
        %883 = vrot.lane.b32.xlu0 %v882, 127
        %v884 = vpop.permute.xlu0 %883
        %v885 = vrot.slane %v884, 1
        %vm886 = vcmask 1039360
        %v887 = vsel %vm886, %v884, %v885
        %s889 = scalar_lea.vmem [#allocation3], 56
        %890 = vst.msk [vmem:[%s889] ss:$8 sm:$0xf] %vm531, %v887
        %891 = vst.msk [vmem:[%s889] ss:$8 sm:$0x70] %vm531, %v887
        %892 = vrot.lane.b32.xlu0 %v882, 126
        %v893 = vpop.permute.xlu0 %892
        %v894 = vrot.slane %v893, 1
        %vm895 = vcmask 1031168
        %v896 = vsel %vm895, %v893, %v894
        %s898 = scalar_lea.vmem [#allocation3], 57
        %899 = vst.msk [vmem:[%s898] ss:$8 sm:$0xf] %vm531, %v896
        %900 = vst.msk [vmem:[%s898] ss:$8 sm:$0x70] %vm531, %v896
        %901 = vrot.lane.b32.xlu0 %v882, 125
        %v902 = vpop.permute.xlu0 %901
        %v903 = vrot.slane %v902, 1
        %vm904 = vcmask 1022976
        %v905 = vsel %vm904, %v902, %v903
        %s907 = scalar_lea.vmem [#allocation3], 58
        %908 = vst.msk [vmem:[%s907] ss:$8 sm:$0xf] %vm531, %v905
        %909 = vst.msk [vmem:[%s907] ss:$8 sm:$0x70] %vm531, %v905
        %910 = vrot.lane.b32.xlu0 %v882, 124
        %v911 = vpop.permute.xlu0 %910
        %v912 = vrot.slane %v911, 1
        %vm913 = vcmask 1014784
        %v914 = vsel %vm913, %v911, %v912
        %s916 = scalar_lea.vmem [#allocation3], 59
        %917 = vst.msk [vmem:[%s916] ss:$8 sm:$0xf] %vm531, %v914
        %918 = vst.msk [vmem:[%s916] ss:$8 sm:$0x70] %vm531, %v914
        %919 = vrot.lane.b32.xlu0 %v882, 123
        %v920 = vpop.permute.xlu0 %919
        %v921 = vrot.slane %v920, 1
        %vm922 = vcmask 1006592
        %v923 = vsel %vm922, %v920, %v921
        %s925 = scalar_lea.vmem [#allocation3], 60
        %926 = vst.msk [vmem:[%s925] ss:$8 sm:$0xf] %vm531, %v923
        %927 = vst.msk [vmem:[%s925] ss:$8 sm:$0x70] %vm531, %v923
        %928 = vrot.lane.b32.xlu0 %v882, 122
        %v929 = vpop.permute.xlu0 %928
        %v930 = vrot.slane %v929, 1
        %vm931 = vcmask 998400
        %v932 = vsel %vm931, %v929, %v930
        %s934 = scalar_lea.vmem [#allocation3], 61
        %935 = vst.msk [vmem:[%s934] ss:$8 sm:$0xf] %vm531, %v932
        %936 = vst.msk [vmem:[%s934] ss:$8 sm:$0x70] %vm531, %v932
        %937 = vrot.lane.b32.xlu0 %v882, 121
        %v938 = vpop.permute.xlu0 %937
        %v939 = vrot.slane %v938, 1
        %vm940 = vcmask 990208
        %v941 = vsel %vm940, %v938, %v939
        %s943 = scalar_lea.vmem [#allocation3], 62
        %944 = vst.msk [vmem:[%s943] ss:$8 sm:$0xf] %vm531, %v941
        %945 = vst.msk [vmem:[%s943] ss:$8 sm:$0x70] %vm531, %v941
        %v946 = vld [vmem:[%s4] sm:$0xff]
        %v947 = vld [vmem:[%s4 + $0x8] sm:$0xff]
        %v948 = vld [vmem:[#allocation3] sm:$0xff]
        %v949 = vld [vmem:[#allocation3 + $0x8] sm:$0xff]
        %v950 = vld [vmem:[#allocation3 + $0x10] sm:$0xff]
        %v951 = vld [vmem:[#allocation3 + $0x18] sm:$0xff]
        %v952 = vld [vmem:[#allocation3 + $0x20] sm:$0xff]
        %v953 = vld [vmem:[#allocation3 + $0x28] sm:$0xff]
        %v954 = vld [vmem:[#allocation3 + $0x30] sm:$0xff]
        %v955 = vld [vmem:[#allocation3 + $0x38] sm:$0x7f]
        %v956 = vld [vmem:[#allocation3 + $0x40] sm:$0x7f]
        %v957 = vld [vmem:[#allocation3 + $0x48] sm:$0x7f]
        %v958 = vld [vmem:[#allocation3 + $0x50] sm:$0x7f]
        %v959 = vld [vmem:[#allocation3 + $0x58] sm:$0x7f]
        %v960 = vld [vmem:[#allocation3 + $0x60] sm:$0x7f]
        %v961 = vld [vmem:[#allocation3 + $0x68] sm:$0x7f]
        %v962 = vld [vmem:[%s5] sm:$0xff]
        %v963 = vld [vmem:[%s5 + $0x8] sm:$0xff]
        %965 = vset.pattern.permute.xlu0 0
        %966 = vperm.xlu0 %965, %v962
        %v967 = vpop.permute.xlu0 %966
        %970 = vset.pattern.permute.xlu0 0
        %971 = vperm.xlu0 %970, %v963
        %v972 = vpop.permute.xlu0 %971
        %vm974 = vcmask 121856
        %v976 = vsel %vm974, %v946, 0
        %v979 = vsel %vm974, %v947, 0
        %vm981 = vcmask 1046528
        %v983 = vsel %vm981, %v955, 0
        %v986 = vsel %vm981, %v956, 0
        %v989 = vsel %vm981, %v957, 0
        %v992 = vsel %vm981, %v958, 0
        %v995 = vsel %vm981, %v959, 0
        %v998 = vsel %vm981, %v960, 0
        %v1001 = vsel %vm981, %v961, 0
        %1003 = vmatprep.subr.mxu0 %v949
        %1004 = vmatpush1.msra.mxu0 %v948
        %1005 = vmatprep.subr.mxu0 %v986
        %1006 = vmatpush1.msra.mxu0 %v983
        %1007 = vmatprep.subr.mxu0 0.0
        %1008 = vmatpush1.msra.mxu0 0.0
        %1009 = vmatprep.subr.mxu0 0.0
        %1010 = vmatpush1.msra.mxu0 0.0
        %1011 = vmatprep.subr.mxu0 0.0
        %1012 = vmatpush1.msra.mxu0 0.0
        %1013 = vmatprep.subr.mxu0 0.0
        %1014 = vmatpush1.msra.mxu0 0.0
        %1015 = vmatprep.subr.mxu0 0.0
        %1016 = vmatpush1.msra.mxu0 0.0
        %1017 = vmatprep.subr.mxu0 0.0
        %1018 = vmatpush1.msra.mxu0 0.0
        %1019 = vmatprep.subr.mxu0 0.0
        %1020 = vmatpush1.msra.mxu0 0.0
        %1021 = vmatprep.subr.mxu0 0.0
        %1022 = vmatpush1.msra.mxu0 0.0
        %1023 = vmatprep.subr.mxu0 0.0
        %1024 = vmatpush1.msra.mxu0 0.0
        %1025 = vmatprep.subr.mxu0 0.0
        %1026 = vmatpush1.msra.mxu0 0.0
        %1027 = vmatprep.subr.mxu0 0.0
        %1028 = vmatpush1.msra.mxu0 0.0
        %1029 = vmatprep.subr.mxu0 0.0
        %1030 = vmatpush1.msra.mxu0 0.0
        %1031 = vmatprep.subr.mxu0 0.0
        %1032 = vmatpush1.msra.mxu0 0.0
        %1033 = vmatprep.subr.mxu0 0.0
        %1034 = vmatpush1.msra.mxu0 0.0
        %1035 = vmatprep.subr.mxu0 0.0
        %1036 = vmatpush1.msra.mxu0 0.0
        %1037 = vmatprep.subr.mxu0 0.0
        %1038 = vmatpush1.msra.mxu0 0.0
        %1039 = vmatprep.subr.mxu0 0.0
        %1040 = vmatpush1.msra.mxu0 0.0
        %1041 = vmatprep.subr.mxu0 0.0
        %1042 = vmatpush1.msra.mxu0 0.0
        %1043 = vmatprep.subr.mxu0 0.0
        %1044 = vmatpush1.msra.mxu0 0.0
        %1045 = vmatprep.subr.mxu0 0.0
        %1046 = vmatpush1.msra.mxu0 0.0
        %1047 = vmatprep.subr.mxu0 0.0
        %1048 = vmatpush1.msra.mxu0 0.0
        %1049 = vmatprep.subr.mxu0 0.0
        %1050 = vmatpush1.msra.mxu0 0.0
        %1051 = vmatprep.subr.mxu0 0.0
        %1052 = vmatpush1.msra.mxu0 0.0
        %1053 = vmatprep.subr.mxu0 0.0
        %1054 = vmatpush1.msra.mxu0 0.0
        %1055 = vmatprep.subr.mxu0 0.0
        %1056 = vmatpush1.msra.mxu0 0.0
        %1057 = vmatprep.subr.mxu0 0.0
        %1058 = vmatpush1.msra.mxu0 0.0
        %1059 = vmatprep.subr.mxu0 0.0
        %1060 = vmatpush1.msra.mxu0 0.0
        %1061 = vmatprep.subr.mxu0 0.0
        %1062 = vmatpush1.msra.mxu0 0.0
        %1063 = vmatprep.subr.mxu0 0.0
        %1064 = vmatpush1.msra.mxu0 0.0
        %1065 = vmatprep.subr.mxu0 0.0
        %1066 = vmatpush1.msra.mxu0 0.0
        %1067 = vmatprep.mubr.f32.mxu0 0.0
        %1068 = vmatmul.mubr.f32.gmra.mrb[0].mxu0 %v976
        %v1069 = vpop.f32.mrb[0].mxu0
        %v1070 = vadd.f32 %v967, %v1069
        %v1071 = vpop.f32.mrb[0].mxu0
        %v1072 = vadd.f32 %v967, %v1071
        %1073 = vmatprep.mubr.f32.mxu0 0.0
        %1074 = vmatmul.mubr.f32.gmra.mrb[0].mxu0 %v979
        %v1075 = vpop.f32.mrb[0].mxu0
        %v1076 = vadd.f32 %v972, %v1075
        %v1077 = vpop.f32.mrb[0].mxu0
        %v1078 = vadd.f32 %v972, %v1077
        %1079 = vdwg.mxu0
        %1080 = vmatprep.subr.mxu0 %v951
        %1081 = vmatpush1.msra.mxu0 %v950
        %1082 = vmatprep.subr.mxu0 %v992
        %1083 = vmatpush1.msra.mxu0 %v989
        %1084 = vmatprep.subr.mxu0 0.0
        %1085 = vmatpush1.msra.mxu0 0.0
        %1086 = vmatprep.subr.mxu0 0.0
        %1087 = vmatpush1.msra.mxu0 0.0
        %1088 = vmatprep.subr.mxu0 0.0
        %1089 = vmatpush1.msra.mxu0 0.0
        %1090 = vmatprep.subr.mxu0 0.0
        %1091 = vmatpush1.msra.mxu0 0.0
        %1092 = vmatprep.subr.mxu0 0.0
        %1093 = vmatpush1.msra.mxu0 0.0
        %1094 = vmatprep.subr.mxu0 0.0
        %1095 = vmatpush1.msra.mxu0 0.0
        %1096 = vmatprep.subr.mxu0 0.0
        %1097 = vmatpush1.msra.mxu0 0.0
        %1098 = vmatprep.subr.mxu0 0.0
        %1099 = vmatpush1.msra.mxu0 0.0
        %1100 = vmatprep.subr.mxu0 0.0
        %1101 = vmatpush1.msra.mxu0 0.0
        %1102 = vmatprep.subr.mxu0 0.0
        %1103 = vmatpush1.msra.mxu0 0.0
        %1104 = vmatprep.subr.mxu0 0.0
        %1105 = vmatpush1.msra.mxu0 0.0
        %1106 = vmatprep.subr.mxu0 0.0
        %1107 = vmatpush1.msra.mxu0 0.0
        %1108 = vmatprep.subr.mxu0 0.0
        %1109 = vmatpush1.msra.mxu0 0.0
        %1110 = vmatprep.subr.mxu0 0.0
        %1111 = vmatpush1.msra.mxu0 0.0
        %1112 = vmatprep.subr.mxu0 0.0
        %1113 = vmatpush1.msra.mxu0 0.0
        %1114 = vmatprep.subr.mxu0 0.0
        %1115 = vmatpush1.msra.mxu0 0.0
        %1116 = vmatprep.subr.mxu0 0.0
        %1117 = vmatpush1.msra.mxu0 0.0
        %1118 = vmatprep.subr.mxu0 0.0
        %1119 = vmatpush1.msra.mxu0 0.0
        %1120 = vmatprep.subr.mxu0 0.0
        %1121 = vmatpush1.msra.mxu0 0.0
        %1122 = vmatprep.subr.mxu0 0.0
        %1123 = vmatpush1.msra.mxu0 0.0
        %1124 = vmatprep.subr.mxu0 0.0
        %1125 = vmatpush1.msra.mxu0 0.0
        %1126 = vmatprep.subr.mxu0 0.0
        %1127 = vmatpush1.msra.mxu0 0.0
        %1128 = vmatprep.subr.mxu0 0.0
        %1129 = vmatpush1.msra.mxu0 0.0
        %1130 = vmatprep.subr.mxu0 0.0
        %1131 = vmatpush1.msra.mxu0 0.0
        %1132 = vmatprep.subr.mxu0 0.0
        %1133 = vmatpush1.msra.mxu0 0.0
        %1134 = vmatprep.subr.mxu0 0.0
        %1135 = vmatpush1.msra.mxu0 0.0
        %1136 = vmatprep.subr.mxu0 0.0
        %1137 = vmatpush1.msra.mxu0 0.0
        %1138 = vmatprep.subr.mxu0 0.0
        %1139 = vmatpush1.msra.mxu0 0.0
        %1140 = vmatprep.subr.mxu0 0.0
        %1141 = vmatpush1.msra.mxu0 0.0
        %1142 = vmatprep.subr.mxu0 0.0
        %1143 = vmatpush1.msra.mxu0 0.0
        %1144 = vmatprep.mubr.f32.mxu0 0.0
        %1145 = vmatmul.mubr.f32.gmra.mrb[0].mxu0 %v976
        %v1146 = vpop.f32.mrb[0].mxu0
        %v1147 = vadd.f32 %v967, %v1146
        %v1148 = vpop.f32.mrb[0].mxu0
        %v1149 = vadd.f32 %v967, %v1148
        %1150 = vmatprep.mubr.f32.mxu0 0.0
        %1151 = vmatmul.mubr.f32.gmra.mrb[0].mxu0 %v979
        %v1152 = vpop.f32.mrb[0].mxu0
        %v1153 = vadd.f32 %v972, %v1152
        %v1154 = vpop.f32.mrb[0].mxu0
        %v1155 = vadd.f32 %v972, %v1154
        %1156 = vdwg.mxu0
        %1157 = vmatprep.subr.mxu0 %v953
        %1158 = vmatpush1.msra.mxu0 %v952
        %1159 = vmatprep.subr.mxu0 %v998
        %1160 = vmatpush1.msra.mxu0 %v995
        %1161 = vmatprep.subr.mxu0 0.0
        %1162 = vmatpush1.msra.mxu0 0.0
        %1163 = vmatprep.subr.mxu0 0.0
        %1164 = vmatpush1.msra.mxu0 0.0
        %1165 = vmatprep.subr.mxu0 0.0
        %1166 = vmatpush1.msra.mxu0 0.0
        %1167 = vmatprep.subr.mxu0 0.0
        %1168 = vmatpush1.msra.mxu0 0.0
        %1169 = vmatprep.subr.mxu0 0.0
        %1170 = vmatpush1.msra.mxu0 0.0
        %1171 = vmatprep.subr.mxu0 0.0
        %1172 = vmatpush1.msra.mxu0 0.0
        %1173 = vmatprep.subr.mxu0 0.0
        %1174 = vmatpush1.msra.mxu0 0.0
        %1175 = vmatprep.subr.mxu0 0.0
        %1176 = vmatpush1.msra.mxu0 0.0
        %1177 = vmatprep.subr.mxu0 0.0
        %1178 = vmatpush1.msra.mxu0 0.0
        %1179 = vmatprep.subr.mxu0 0.0
        %1180 = vmatpush1.msra.mxu0 0.0
        %1181 = vmatprep.subr.mxu0 0.0
        %1182 = vmatpush1.msra.mxu0 0.0
        %1183 = vmatprep.subr.mxu0 0.0
        %1184 = vmatpush1.msra.mxu0 0.0
        %1185 = vmatprep.subr.mxu0 0.0
        %1186 = vmatpush1.msra.mxu0 0.0
        %1187 = vmatprep.subr.mxu0 0.0
        %1188 = vmatpush1.msra.mxu0 0.0
        %1189 = vmatprep.subr.mxu0 0.0
        %1190 = vmatpush1.msra.mxu0 0.0
        %1191 = vmatprep.subr.mxu0 0.0
        %1192 = vmatpush1.msra.mxu0 0.0
        %1193 = vmatprep.subr.mxu0 0.0
        %1194 = vmatpush1.msra.mxu0 0.0
        %1195 = vmatprep.subr.mxu0 0.0
        %1196 = vmatpush1.msra.mxu0 0.0
        %1197 = vmatprep.subr.mxu0 0.0
        %1198 = vmatpush1.msra.mxu0 0.0
        %1199 = vmatprep.subr.mxu0 0.0
        %1200 = vmatpush1.msra.mxu0 0.0
        %1201 = vmatprep.subr.mxu0 0.0
        %1202 = vmatpush1.msra.mxu0 0.0
        %1203 = vmatprep.subr.mxu0 0.0
        %1204 = vmatpush1.msra.mxu0 0.0
        %1205 = vmatprep.subr.mxu0 0.0
        %1206 = vmatpush1.msra.mxu0 0.0
        %1207 = vmatprep.subr.mxu0 0.0
        %1208 = vmatpush1.msra.mxu0 0.0
        %1209 = vmatprep.subr.mxu0 0.0
        %1210 = vmatpush1.msra.mxu0 0.0
        %1211 = vmatprep.subr.mxu0 0.0
        %1212 = vmatpush1.msra.mxu0 0.0
        %1213 = vmatprep.subr.mxu0 0.0
        %1214 = vmatpush1.msra.mxu0 0.0
        %1215 = vmatprep.subr.mxu0 0.0
        %1216 = vmatpush1.msra.mxu0 0.0
        %1217 = vmatprep.subr.mxu0 0.0
        %1218 = vmatpush1.msra.mxu0 0.0
        %1219 = vmatprep.subr.mxu0 0.0
        %1220 = vmatpush1.msra.mxu0 0.0
        %1221 = vmatprep.mubr.f32.mxu0 0.0
        %1222 = vmatmul.mubr.f32.gmra.mrb[0].mxu0 %v976
        %v1223 = vpop.f32.mrb[0].mxu0
        %v1224 = vadd.f32 %v967, %v1223
        %v1225 = vpop.f32.mrb[0].mxu0
        %v1226 = vadd.f32 %v967, %v1225
        %1227 = vmatprep.mubr.f32.mxu0 0.0
        %1228 = vmatmul.mubr.f32.gmra.mrb[0].mxu0 %v979
        %v1229 = vpop.f32.mrb[0].mxu0
        %v1230 = vadd.f32 %v972, %v1229
        %v1231 = vpop.f32.mrb[0].mxu0
        %v1232 = vadd.f32 %v972, %v1231
        %1233 = vdwg.mxu0
        %1234 = vmatprep.subr.mxu0 0.0
        %1235 = vmatpush1.msra.mxu0 %v954
        %1236 = vmatprep.subr.mxu0 0.0
        %1237 = vmatpush1.msra.mxu0 %v1001
        %1238 = vmatprep.subr.mxu0 0.0
        %1239 = vmatpush1.msra.mxu0 0.0
        %1240 = vmatprep.subr.mxu0 0.0
        %1241 = vmatpush1.msra.mxu0 0.0
        %1242 = vmatprep.subr.mxu0 0.0
        %1243 = vmatpush1.msra.mxu0 0.0
        %1244 = vmatprep.subr.mxu0 0.0
        %1245 = vmatpush1.msra.mxu0 0.0
        %1246 = vmatprep.subr.mxu0 0.0
        %1247 = vmatpush1.msra.mxu0 0.0
        %1248 = vmatprep.subr.mxu0 0.0
        %1249 = vmatpush1.msra.mxu0 0.0
        %1250 = vmatprep.subr.mxu0 0.0
        %1251 = vmatpush1.msra.mxu0 0.0
        %1252 = vmatprep.subr.mxu0 0.0
        %1253 = vmatpush1.msra.mxu0 0.0
        %1254 = vmatprep.subr.mxu0 0.0
        %1255 = vmatpush1.msra.mxu0 0.0
        %1256 = vmatprep.subr.mxu0 0.0
        %1257 = vmatpush1.msra.mxu0 0.0
        %1258 = vmatprep.subr.mxu0 0.0
        %1259 = vmatpush1.msra.mxu0 0.0
        %1260 = vmatprep.subr.mxu0 0.0
        %1261 = vmatpush1.msra.mxu0 0.0
        %1262 = vmatprep.subr.mxu0 0.0
        %1263 = vmatpush1.msra.mxu0 0.0
        %1264 = vmatprep.subr.mxu0 0.0
        %1265 = vmatpush1.msra.mxu0 0.0
        %1266 = vmatprep.subr.mxu0 0.0
        %1267 = vmatpush1.msra.mxu0 0.0
        %1268 = vmatprep.subr.mxu0 0.0
        %1269 = vmatpush1.msra.mxu0 0.0
        %1270 = vmatprep.subr.mxu0 0.0
        %1271 = vmatpush1.msra.mxu0 0.0
        %1272 = vmatprep.subr.mxu0 0.0
        %1273 = vmatpush1.msra.mxu0 0.0
        %1274 = vmatprep.subr.mxu0 0.0
        %1275 = vmatpush1.msra.mxu0 0.0
        %1276 = vmatprep.subr.mxu0 0.0
        %1277 = vmatpush1.msra.mxu0 0.0
        %1278 = vmatprep.subr.mxu0 0.0
        %1279 = vmatpush1.msra.mxu0 0.0
        %1280 = vmatprep.subr.mxu0 0.0
        %1281 = vmatpush1.msra.mxu0 0.0
        %1282 = vmatprep.subr.mxu0 0.0
        %1283 = vmatpush1.msra.mxu0 0.0
        %1284 = vmatprep.subr.mxu0 0.0
        %1285 = vmatpush1.msra.mxu0 0.0
        %1286 = vmatprep.subr.mxu0 0.0
        %1287 = vmatpush1.msra.mxu0 0.0
        %1288 = vmatprep.subr.mxu0 0.0
        %1289 = vmatpush1.msra.mxu0 0.0
        %1290 = vmatprep.subr.mxu0 0.0
        %1291 = vmatpush1.msra.mxu0 0.0
        %1292 = vmatprep.subr.mxu0 0.0
        %1293 = vmatpush1.msra.mxu0 0.0
        %1294 = vmatprep.subr.mxu0 0.0
        %1295 = vmatpush1.msra.mxu0 0.0
        %1296 = vmatprep.subr.mxu0 0.0
        %1297 = vmatpush1.msra.mxu0 0.0
        %1298 = vmatprep.mubr.f32.mxu0 0.0
        %1299 = vmatmul.mubr.f32.gmra.mrb[0].mxu0 %v976
        %v1300 = vpop.f32.mrb[0].mxu0
        %v1301 = vadd.f32 %v967, %v1300
        %v1302 = vpop.f32.mrb[0].mxu0
        %1303 = vmatprep.mubr.f32.mxu0 0.0
        %1304 = vmatmul.mubr.f32.gmra.mrb[0].mxu0 %v979
        %v1305 = vpop.f32.mrb[0].mxu0
        %v1306 = vadd.f32 %v972, %v1305
        %v1307 = vpop.f32.mrb[0].mxu0
        %1308 = vdwg.mxu0
        %vm1309 = vcmp.ge.f32.partialorder %v1070, 0.0
        %vm1310 = vcmp.ge.f32.partialorder %v1072, 0.0
        %vm1311 = vcmp.ge.f32.partialorder %v1147, 0.0
        %vm1312 = vcmp.ge.f32.partialorder %v1149, 0.0
        %vm1313 = vcmp.ge.f32.partialorder %v1224, 0.0
        %vm1314 = vcmp.ge.f32.partialorder %v1226, 0.0
        %vm1315 = vcmp.ge.f32.partialorder %v1301, 0.0
        %vm1316 = vcmp.ge.f32.partialorder %v1076, 0.0
        %vm1317 = vcmp.ge.f32.partialorder %v1078, 0.0
        %vm1318 = vcmp.ge.f32.partialorder %v1153, 0.0
        %vm1319 = vcmp.ge.f32.partialorder %v1155, 0.0
        %vm1320 = vcmp.ge.f32.partialorder %v1230, 0.0
        %vm1321 = vcmp.ge.f32.partialorder %v1232, 0.0
        %vm1322 = vcmp.ge.f32.partialorder %v1306, 0.0
        %v1323 = vmul.f32 %v1070, 0.3
        %v1324 = vmul.f32 %v1072, 0.3
        %v1325 = vmul.f32 %v1147, 0.3
        %v1326 = vmul.f32 %v1149, 0.3
        %v1327 = vmul.f32 %v1224, 0.3
        %v1328 = vmul.f32 %v1226, 0.3
        %v1329 = vmul.f32 %v1301, 0.3
        %v1330 = vmul.f32 %v1076, 0.3
        %v1331 = vmul.f32 %v1078, 0.3
        %v1332 = vmul.f32 %v1153, 0.3
        %v1333 = vmul.f32 %v1155, 0.3
        %v1334 = vmul.f32 %v1230, 0.3
        %v1335 = vmul.f32 %v1232, 0.3
        %v1336 = vmul.f32 %v1306, 0.3
        %v1337 = vsel %vm1309, %v1070, %v1323
        %v1338 = vsel %vm1310, %v1072, %v1324
        %v1339 = vsel %vm1311, %v1147, %v1325
        %v1340 = vsel %vm1312, %v1149, %v1326
        %v1341 = vsel %vm1313, %v1224, %v1327
        %v1342 = vsel %vm1314, %v1226, %v1328
        %v1343 = vsel %vm1315, %v1301, %v1329
        %v1344 = vsel %vm1316, %v1076, %v1330
        %v1345 = vsel %vm1317, %v1078, %v1331
        %v1346 = vsel %vm1318, %v1153, %v1332
        %v1347 = vsel %vm1319, %v1155, %v1333
        %v1348 = vsel %vm1320, %v1230, %v1334
        %v1349 = vsel %vm1321, %v1232, %v1335
        %v1350 = vsel %vm1322, %v1306, %v1336
        %v1351 = vld [vmem:[%s6] sm:$0xff]
        %v1352 = vld [vmem:[%s6 + $0x8] sm:$0xff]
        %v1353 = vld [vmem:[%s7] sm:$0xff]
        %v1354 = vld [vmem:[%s7 + $0x8] sm:$0xff]
        %1356 = vset.pattern.permute.xlu0 0
        %1357 = vperm.xlu0 %1356, %v1353
        %v1358 = vpop.permute.xlu0 %1357
        %1361 = vset.pattern.permute.xlu0 0
        %1362 = vperm.xlu0 %1361, %v1354
        %v1363 = vpop.permute.xlu0 %1362
        %vm1365 = vcmask 130048
        %v1367 = vsel %vm1365, %v1351, 0
        %v1370 = vsel %vm1365, %v1352, 0
        %1372 = vmatprep.subr.mxu0 %v1338
        %1373 = vmatpush1.msra.mxu0 %v1337
        %1374 = vmatprep.subr.mxu0 %v1345
        %1375 = vmatpush1.msra.mxu0 %v1344
        %1376 = vmatprep.subr.mxu0 0.0
        %1377 = vmatpush1.msra.mxu0 0.0
        %1378 = vmatprep.subr.mxu0 0.0
        %1379 = vmatpush1.msra.mxu0 0.0
        %1380 = vmatprep.subr.mxu0 0.0
        %1381 = vmatpush1.msra.mxu0 0.0
        %1382 = vmatprep.subr.mxu0 0.0
        %1383 = vmatpush1.msra.mxu0 0.0
        %1384 = vmatprep.subr.mxu0 0.0
        %1385 = vmatpush1.msra.mxu0 0.0
        %1386 = vmatprep.subr.mxu0 0.0
        %1387 = vmatpush1.msra.mxu0 0.0
        %1388 = vmatprep.subr.mxu0 0.0
        %1389 = vmatpush1.msra.mxu0 0.0
        %1390 = vmatprep.subr.mxu0 0.0
        %1391 = vmatpush1.msra.mxu0 0.0
        %1392 = vmatprep.subr.mxu0 0.0
        %1393 = vmatpush1.msra.mxu0 0.0
        %1394 = vmatprep.subr.mxu0 0.0
        %1395 = vmatpush1.msra.mxu0 0.0
        %1396 = vmatprep.subr.mxu0 0.0
        %1397 = vmatpush1.msra.mxu0 0.0
        %1398 = vmatprep.subr.mxu0 0.0
        %1399 = vmatpush1.msra.mxu0 0.0
        %1400 = vmatprep.subr.mxu0 0.0
        %1401 = vmatpush1.msra.mxu0 0.0
        %1402 = vmatprep.subr.mxu0 0.0
        %1403 = vmatpush1.msra.mxu0 0.0
        %1404 = vmatprep.subr.mxu0 0.0
        %1405 = vmatpush1.msra.mxu0 0.0
        %1406 = vmatprep.subr.mxu0 0.0
        %1407 = vmatpush1.msra.mxu0 0.0
        %1408 = vmatprep.subr.mxu0 0.0
        %1409 = vmatpush1.msra.mxu0 0.0
        %1410 = vmatprep.subr.mxu0 0.0
        %1411 = vmatpush1.msra.mxu0 0.0
        %1412 = vmatprep.subr.mxu0 0.0
        %1413 = vmatpush1.msra.mxu0 0.0
        %1414 = vmatprep.subr.mxu0 0.0
        %1415 = vmatpush1.msra.mxu0 0.0
        %1416 = vmatprep.subr.mxu0 0.0
        %1417 = vmatpush1.msra.mxu0 0.0
        %1418 = vmatprep.subr.mxu0 0.0
        %1419 = vmatpush1.msra.mxu0 0.0
        %1420 = vmatprep.subr.mxu0 0.0
        %1421 = vmatpush1.msra.mxu0 0.0
        %1422 = vmatprep.subr.mxu0 0.0
        %1423 = vmatpush1.msra.mxu0 0.0
        %1424 = vmatprep.subr.mxu0 0.0
        %1425 = vmatpush1.msra.mxu0 0.0
        %1426 = vmatprep.subr.mxu0 0.0
        %1427 = vmatpush1.msra.mxu0 0.0
        %1428 = vmatprep.subr.mxu0 0.0
        %1429 = vmatpush1.msra.mxu0 0.0
        %1430 = vmatprep.subr.mxu0 0.0
        %1431 = vmatpush1.msra.mxu0 0.0
        %1432 = vmatprep.subr.mxu0 0.0
        %1433 = vmatpush1.msra.mxu0 0.0
        %1434 = vmatprep.subr.mxu0 0.0
        %1435 = vmatpush1.msra.mxu0 0.0
        %1436 = vmatprep.mubr.f32.mxu0 0.0
        %1437 = vmatmul.mubr.f32.gmra.mrb[0].mxu0 %v1367
        %v1438 = vpop.f32.mrb[0].mxu0
        %v1439 = vadd.f32 %v1358, %v1438
        %v1440 = vpop.f32.mrb[0].mxu0
        %v1441 = vadd.f32 %v1358, %v1440
        %1442 = vmatprep.mubr.f32.mxu0 0.0
        %1443 = vmatmul.mubr.f32.gmra.mrb[0].mxu0 %v1370
        %v1444 = vpop.f32.mrb[0].mxu0
        %v1445 = vadd.f32 %v1363, %v1444
        %v1446 = vpop.f32.mrb[0].mxu0
        %v1447 = vadd.f32 %v1363, %v1446
        %1448 = vdwg.mxu0
        %1449 = vmatprep.subr.mxu0 %v1340
        %1450 = vmatpush1.msra.mxu0 %v1339
        %1451 = vmatprep.subr.mxu0 %v1347
        %1452 = vmatpush1.msra.mxu0 %v1346
        %1453 = vmatprep.subr.mxu0 0.0
        %1454 = vmatpush1.msra.mxu0 0.0
        %1455 = vmatprep.subr.mxu0 0.0
        %1456 = vmatpush1.msra.mxu0 0.0
        %1457 = vmatprep.subr.mxu0 0.0
        %1458 = vmatpush1.msra.mxu0 0.0
        %1459 = vmatprep.subr.mxu0 0.0
        %1460 = vmatpush1.msra.mxu0 0.0
        %1461 = vmatprep.subr.mxu0 0.0
        %1462 = vmatpush1.msra.mxu0 0.0
        %1463 = vmatprep.subr.mxu0 0.0
        %1464 = vmatpush1.msra.mxu0 0.0
        %1465 = vmatprep.subr.mxu0 0.0
        %1466 = vmatpush1.msra.mxu0 0.0
        %1467 = vmatprep.subr.mxu0 0.0
        %1468 = vmatpush1.msra.mxu0 0.0
        %1469 = vmatprep.subr.mxu0 0.0
        %1470 = vmatpush1.msra.mxu0 0.0
        %1471 = vmatprep.subr.mxu0 0.0
        %1472 = vmatpush1.msra.mxu0 0.0
        %1473 = vmatprep.subr.mxu0 0.0
        %1474 = vmatpush1.msra.mxu0 0.0
        %1475 = vmatprep.subr.mxu0 0.0
        %1476 = vmatpush1.msra.mxu0 0.0
        %1477 = vmatprep.subr.mxu0 0.0
        %1478 = vmatpush1.msra.mxu0 0.0
        %1479 = vmatprep.subr.mxu0 0.0
        %1480 = vmatpush1.msra.mxu0 0.0
        %1481 = vmatprep.subr.mxu0 0.0
        %1482 = vmatpush1.msra.mxu0 0.0
        %1483 = vmatprep.subr.mxu0 0.0
        %1484 = vmatpush1.msra.mxu0 0.0
        %1485 = vmatprep.subr.mxu0 0.0
        %1486 = vmatpush1.msra.mxu0 0.0
        %1487 = vmatprep.subr.mxu0 0.0
        %1488 = vmatpush1.msra.mxu0 0.0
        %1489 = vmatprep.subr.mxu0 0.0
        %1490 = vmatpush1.msra.mxu0 0.0
        %1491 = vmatprep.subr.mxu0 0.0
        %1492 = vmatpush1.msra.mxu0 0.0
        %1493 = vmatprep.subr.mxu0 0.0
        %1494 = vmatpush1.msra.mxu0 0.0
        %1495 = vmatprep.subr.mxu0 0.0
        %1496 = vmatpush1.msra.mxu0 0.0
        %1497 = vmatprep.subr.mxu0 0.0
        %1498 = vmatpush1.msra.mxu0 0.0
        %1499 = vmatprep.subr.mxu0 0.0
        %1500 = vmatpush1.msra.mxu0 0.0
        %1501 = vmatprep.subr.mxu0 0.0
        %1502 = vmatpush1.msra.mxu0 0.0
        %1503 = vmatprep.subr.mxu0 0.0
        %1504 = vmatpush1.msra.mxu0 0.0
        %1505 = vmatprep.subr.mxu0 0.0
        %1506 = vmatpush1.msra.mxu0 0.0
        %1507 = vmatprep.subr.mxu0 0.0
        %1508 = vmatpush1.msra.mxu0 0.0
        %1509 = vmatprep.subr.mxu0 0.0
        %1510 = vmatpush1.msra.mxu0 0.0
        %1511 = vmatprep.subr.mxu0 0.0
        %1512 = vmatpush1.msra.mxu0 0.0
        %1513 = vmatprep.mubr.f32.mxu0 0.0
        %1514 = vmatmul.mubr.f32.gmra.mrb[0].mxu0 %v1367
        %v1515 = vpop.f32.mrb[0].mxu0
        %v1516 = vadd.f32 %v1358, %v1515
        %v1517 = vpop.f32.mrb[0].mxu0
        %v1518 = vadd.f32 %v1358, %v1517
        %1519 = vmatprep.mubr.f32.mxu0 0.0
        %1520 = vmatmul.mubr.f32.gmra.mrb[0].mxu0 %v1370
        %v1521 = vpop.f32.mrb[0].mxu0
        %v1522 = vadd.f32 %v1363, %v1521
        %v1523 = vpop.f32.mrb[0].mxu0
        %v1524 = vadd.f32 %v1363, %v1523
        %1525 = vdwg.mxu0
        %1526 = vmatprep.subr.mxu0 %v1342
        %1527 = vmatpush1.msra.mxu0 %v1341
        %1528 = vmatprep.subr.mxu0 %v1349
        %1529 = vmatpush1.msra.mxu0 %v1348
        %1530 = vmatprep.subr.mxu0 0.0
        %1531 = vmatpush1.msra.mxu0 0.0
        %1532 = vmatprep.subr.mxu0 0.0
        %1533 = vmatpush1.msra.mxu0 0.0
        %1534 = vmatprep.subr.mxu0 0.0
        %1535 = vmatpush1.msra.mxu0 0.0
        %1536 = vmatprep.subr.mxu0 0.0
        %1537 = vmatpush1.msra.mxu0 0.0
        %1538 = vmatprep.subr.mxu0 0.0
        %1539 = vmatpush1.msra.mxu0 0.0
        %1540 = vmatprep.subr.mxu0 0.0
        %1541 = vmatpush1.msra.mxu0 0.0
        %1542 = vmatprep.subr.mxu0 0.0
        %1543 = vmatpush1.msra.mxu0 0.0
        %1544 = vmatprep.subr.mxu0 0.0
        %1545 = vmatpush1.msra.mxu0 0.0
        %1546 = vmatprep.subr.mxu0 0.0
        %1547 = vmatpush1.msra.mxu0 0.0
        %1548 = vmatprep.subr.mxu0 0.0
        %1549 = vmatpush1.msra.mxu0 0.0
        %1550 = vmatprep.subr.mxu0 0.0
        %1551 = vmatpush1.msra.mxu0 0.0
        %1552 = vmatprep.subr.mxu0 0.0
        %1553 = vmatpush1.msra.mxu0 0.0
        %1554 = vmatprep.subr.mxu0 0.0
        %1555 = vmatpush1.msra.mxu0 0.0
        %1556 = vmatprep.subr.mxu0 0.0
        %1557 = vmatpush1.msra.mxu0 0.0
        %1558 = vmatprep.subr.mxu0 0.0
        %1559 = vmatpush1.msra.mxu0 0.0
        %1560 = vmatprep.subr.mxu0 0.0
        %1561 = vmatpush1.msra.mxu0 0.0
        %1562 = vmatprep.subr.mxu0 0.0
        %1563 = vmatpush1.msra.mxu0 0.0
        %1564 = vmatprep.subr.mxu0 0.0
        %1565 = vmatpush1.msra.mxu0 0.0
        %1566 = vmatprep.subr.mxu0 0.0
        %1567 = vmatpush1.msra.mxu0 0.0
        %1568 = vmatprep.subr.mxu0 0.0
        %1569 = vmatpush1.msra.mxu0 0.0
        %1570 = vmatprep.subr.mxu0 0.0
        %1571 = vmatpush1.msra.mxu0 0.0
        %1572 = vmatprep.subr.mxu0 0.0
        %1573 = vmatpush1.msra.mxu0 0.0
        %1574 = vmatprep.subr.mxu0 0.0
        %1575 = vmatpush1.msra.mxu0 0.0
        %1576 = vmatprep.subr.mxu0 0.0
        %1577 = vmatpush1.msra.mxu0 0.0
        %1578 = vmatprep.subr.mxu0 0.0
        %1579 = vmatpush1.msra.mxu0 0.0
        %1580 = vmatprep.subr.mxu0 0.0
        %1581 = vmatpush1.msra.mxu0 0.0
        %1582 = vmatprep.subr.mxu0 0.0
        %1583 = vmatpush1.msra.mxu0 0.0
        %1584 = vmatprep.subr.mxu0 0.0
        %1585 = vmatpush1.msra.mxu0 0.0
        %1586 = vmatprep.subr.mxu0 0.0
        %1587 = vmatpush1.msra.mxu0 0.0
        %1588 = vmatprep.subr.mxu0 0.0
        %1589 = vmatpush1.msra.mxu0 0.0
        %1590 = vmatprep.mubr.f32.mxu0 0.0
        %1591 = vmatmul.mubr.f32.gmra.mrb[0].mxu0 %v1367
        %v1592 = vpop.f32.mrb[0].mxu0
        %v1593 = vadd.f32 %v1358, %v1592
        %v1594 = vpop.f32.mrb[0].mxu0
        %v1595 = vadd.f32 %v1358, %v1594
        %1596 = vmatprep.mubr.f32.mxu0 0.0
        %1597 = vmatmul.mubr.f32.gmra.mrb[0].mxu0 %v1370
        %v1598 = vpop.f32.mrb[0].mxu0
        %v1599 = vadd.f32 %v1363, %v1598
        %v1600 = vpop.f32.mrb[0].mxu0
        %v1601 = vadd.f32 %v1363, %v1600
        %1602 = vdwg.mxu0
        %1603 = vmatprep.subr.mxu0 0.0
        %1604 = vmatpush1.msra.mxu0 %v1343
        %1605 = vmatprep.subr.mxu0 0.0
        %1606 = vmatpush1.msra.mxu0 %v1350
        %1607 = vmatprep.subr.mxu0 0.0
        %1608 = vmatpush1.msra.mxu0 0.0
        %1609 = vmatprep.subr.mxu0 0.0
        %1610 = vmatpush1.msra.mxu0 0.0
        %1611 = vmatprep.subr.mxu0 0.0
        %1612 = vmatpush1.msra.mxu0 0.0
        %1613 = vmatprep.subr.mxu0 0.0
        %1614 = vmatpush1.msra.mxu0 0.0
        %1615 = vmatprep.subr.mxu0 0.0
        %1616 = vmatpush1.msra.mxu0 0.0
        %1617 = vmatprep.subr.mxu0 0.0
        %1618 = vmatpush1.msra.mxu0 0.0
        %1619 = vmatprep.subr.mxu0 0.0
        %1620 = vmatpush1.msra.mxu0 0.0
        %1621 = vmatprep.subr.mxu0 0.0
        %1622 = vmatpush1.msra.mxu0 0.0
        %1623 = vmatprep.subr.mxu0 0.0
        %1624 = vmatpush1.msra.mxu0 0.0
        %1625 = vmatprep.subr.mxu0 0.0
        %1626 = vmatpush1.msra.mxu0 0.0
        %1627 = vmatprep.subr.mxu0 0.0
        %1628 = vmatpush1.msra.mxu0 0.0
        %1629 = vmatprep.subr.mxu0 0.0
        %1630 = vmatpush1.msra.mxu0 0.0
        %1631 = vmatprep.subr.mxu0 0.0
        %1632 = vmatpush1.msra.mxu0 0.0
        %1633 = vmatprep.subr.mxu0 0.0
        %1634 = vmatpush1.msra.mxu0 0.0
        %1635 = vmatprep.subr.mxu0 0.0
        %1636 = vmatpush1.msra.mxu0 0.0
        %1637 = vmatprep.subr.mxu0 0.0
        %1638 = vmatpush1.msra.mxu0 0.0
        %1639 = vmatprep.subr.mxu0 0.0
        %1640 = vmatpush1.msra.mxu0 0.0
        %1641 = vmatprep.subr.mxu0 0.0
        %1642 = vmatpush1.msra.mxu0 0.0
        %1643 = vmatprep.subr.mxu0 0.0
        %1644 = vmatpush1.msra.mxu0 0.0
        %1645 = vmatprep.subr.mxu0 0.0
        %1646 = vmatpush1.msra.mxu0 0.0
        %1647 = vmatprep.subr.mxu0 0.0
        %1648 = vmatpush1.msra.mxu0 0.0
        %1649 = vmatprep.subr.mxu0 0.0
        %1650 = vmatpush1.msra.mxu0 0.0
        %1651 = vmatprep.subr.mxu0 0.0
        %1652 = vmatpush1.msra.mxu0 0.0
        %1653 = vmatprep.subr.mxu0 0.0
        %1654 = vmatpush1.msra.mxu0 0.0
        %1655 = vmatprep.subr.mxu0 0.0
        %1656 = vmatpush1.msra.mxu0 0.0
        %1657 = vmatprep.subr.mxu0 0.0
        %1658 = vmatpush1.msra.mxu0 0.0
        %1659 = vmatprep.subr.mxu0 0.0
        %1660 = vmatpush1.msra.mxu0 0.0
        %1661 = vmatprep.subr.mxu0 0.0
        %1662 = vmatpush1.msra.mxu0 0.0
        %1663 = vmatprep.subr.mxu0 0.0
        %1664 = vmatpush1.msra.mxu0 0.0
        %1665 = vmatprep.subr.mxu0 0.0
        %1666 = vmatpush1.msra.mxu0 0.0
        %1667 = vmatprep.mubr.f32.mxu0 0.0
        %1668 = vmatmul.mubr.f32.gmra.mrb[0].mxu0 %v1367
        %v1669 = vpop.f32.mrb[0].mxu0
        %v1670 = vadd.f32 %v1358, %v1669
        %v1671 = vpop.f32.mrb[0].mxu0
        %1672 = vmatprep.mubr.f32.mxu0 0.0
        %1673 = vmatmul.mubr.f32.gmra.mrb[0].mxu0 %v1370
        %v1674 = vpop.f32.mrb[0].mxu0
        %v1675 = vadd.f32 %v1363, %v1674
        %v1676 = vpop.f32.mrb[0].mxu0
        %1677 = vdwg.mxu0
        %vm1678 = vcmp.ge.f32.partialorder %v1439, 0.0
        %vm1679 = vcmp.ge.f32.partialorder %v1441, 0.0
        %vm1680 = vcmp.ge.f32.partialorder %v1516, 0.0
        %vm1681 = vcmp.ge.f32.partialorder %v1518, 0.0
        %vm1682 = vcmp.ge.f32.partialorder %v1593, 0.0
        %vm1683 = vcmp.ge.f32.partialorder %v1595, 0.0
        %vm1684 = vcmp.ge.f32.partialorder %v1670, 0.0
        %vm1685 = vcmp.ge.f32.partialorder %v1445, 0.0
        %vm1686 = vcmp.ge.f32.partialorder %v1447, 0.0
        %vm1687 = vcmp.ge.f32.partialorder %v1522, 0.0
        %vm1688 = vcmp.ge.f32.partialorder %v1524, 0.0
        %vm1689 = vcmp.ge.f32.partialorder %v1599, 0.0
        %vm1690 = vcmp.ge.f32.partialorder %v1601, 0.0
        %vm1691 = vcmp.ge.f32.partialorder %v1675, 0.0
        %v1692 = vmul.f32 %v1439, 0.3
        %v1693 = vmul.f32 %v1441, 0.3
        %v1694 = vmul.f32 %v1516, 0.3
        %v1695 = vmul.f32 %v1518, 0.3
        %v1696 = vmul.f32 %v1593, 0.3
        %v1697 = vmul.f32 %v1595, 0.3
        %v1698 = vmul.f32 %v1670, 0.3
        %v1699 = vmul.f32 %v1445, 0.3
        %v1700 = vmul.f32 %v1447, 0.3
        %v1701 = vmul.f32 %v1522, 0.3
        %v1702 = vmul.f32 %v1524, 0.3
        %v1703 = vmul.f32 %v1599, 0.3
        %v1704 = vmul.f32 %v1601, 0.3
        %v1705 = vmul.f32 %v1675, 0.3
        %v1706 = vsel %vm1678, %v1439, %v1692
        %v1707 = vsel %vm1679, %v1441, %v1693
        %v1708 = vsel %vm1680, %v1516, %v1694
        %v1709 = vsel %vm1681, %v1518, %v1695
        %v1710 = vsel %vm1682, %v1593, %v1696
        %v1711 = vsel %vm1683, %v1595, %v1697
        %v1712 = vsel %vm1684, %v1670, %v1698
        %v1713 = vsel %vm1685, %v1445, %v1699
        %v1714 = vsel %vm1686, %v1447, %v1700
        %v1715 = vsel %vm1687, %v1522, %v1701
        %v1716 = vsel %vm1688, %v1524, %v1702
        %v1717 = vsel %vm1689, %v1599, %v1703
        %v1718 = vsel %vm1690, %v1601, %v1704
        %v1719 = vsel %vm1691, %v1675, %v1705
        %v1720 = vld [vmem:[%s8] sm:$0xff]
        %v1721 = vld [vmem:[%s9] sm:$0xff]
        %1723 = vset.pattern.permute.xlu0 0
        %1724 = vperm.xlu0 %1723, %v1721
        %v1725 = vpop.permute.xlu0 %1724
        %v1728 = vsel %vm1365, %v1720, 0
        %1730 = vmatprep.subr.mxu0 %v1707
        %1731 = vmatpush1.msra.mxu0 %v1706
        %1732 = vmatprep.subr.mxu0 %v1714
        %1733 = vmatpush1.msra.mxu0 %v1713
        %1734 = vmatprep.subr.mxu0 0.0
        %1735 = vmatpush1.msra.mxu0 0.0
        %1736 = vmatprep.subr.mxu0 0.0
        %1737 = vmatpush1.msra.mxu0 0.0
        %1738 = vmatprep.subr.mxu0 0.0
        %1739 = vmatpush1.msra.mxu0 0.0
        %1740 = vmatprep.subr.mxu0 0.0
        %1741 = vmatpush1.msra.mxu0 0.0
        %1742 = vmatprep.subr.mxu0 0.0
        %1743 = vmatpush1.msra.mxu0 0.0
        %1744 = vmatprep.subr.mxu0 0.0
        %1745 = vmatpush1.msra.mxu0 0.0
        %1746 = vmatprep.subr.mxu0 0.0
        %1747 = vmatpush1.msra.mxu0 0.0
        %1748 = vmatprep.subr.mxu0 0.0
        %1749 = vmatpush1.msra.mxu0 0.0
        %1750 = vmatprep.subr.mxu0 0.0
        %1751 = vmatpush1.msra.mxu0 0.0
        %1752 = vmatprep.subr.mxu0 0.0
        %1753 = vmatpush1.msra.mxu0 0.0
        %1754 = vmatprep.subr.mxu0 0.0
        %1755 = vmatpush1.msra.mxu0 0.0
        %1756 = vmatprep.subr.mxu0 0.0
        %1757 = vmatpush1.msra.mxu0 0.0
        %1758 = vmatprep.subr.mxu0 0.0
        %1759 = vmatpush1.msra.mxu0 0.0
        %1760 = vmatprep.subr.mxu0 0.0
        %1761 = vmatpush1.msra.mxu0 0.0
        %1762 = vmatprep.subr.mxu0 0.0
        %1763 = vmatpush1.msra.mxu0 0.0
        %1764 = vmatprep.subr.mxu0 0.0
        %1765 = vmatpush1.msra.mxu0 0.0
        %1766 = vmatprep.subr.mxu0 0.0
        %1767 = vmatpush1.msra.mxu0 0.0
        %1768 = vmatprep.subr.mxu0 0.0
        %1769 = vmatpush1.msra.mxu0 0.0
        %1770 = vmatprep.subr.mxu0 0.0
        %1771 = vmatpush1.msra.mxu0 0.0
        %1772 = vmatprep.subr.mxu0 0.0
        %1773 = vmatpush1.msra.mxu0 0.0
        %1774 = vmatprep.subr.mxu0 0.0
        %1775 = vmatpush1.msra.mxu0 0.0
        %1776 = vmatprep.subr.mxu0 0.0
        %1777 = vmatpush1.msra.mxu0 0.0
        %1778 = vmatprep.subr.mxu0 0.0
        %1779 = vmatpush1.msra.mxu0 0.0
        %1780 = vmatprep.subr.mxu0 0.0
        %1781 = vmatpush1.msra.mxu0 0.0
        %1782 = vmatprep.subr.mxu0 0.0
        %1783 = vmatpush1.msra.mxu0 0.0
        %1784 = vmatprep.subr.mxu0 0.0
        %1785 = vmatpush1.msra.mxu0 0.0
        %1786 = vmatprep.subr.mxu0 0.0
        %1787 = vmatpush1.msra.mxu0 0.0
        %1788 = vmatprep.subr.mxu0 0.0
        %1789 = vmatpush1.msra.mxu0 0.0
        %1790 = vmatprep.subr.mxu0 0.0
        %1791 = vmatpush1.msra.mxu0 0.0
        %1792 = vmatprep.subr.mxu0 0.0
        %1793 = vmatpush1.msra.mxu0 0.0
        %1794 = vmatprep.mubr.f32.mxu0 0.0
        %1795 = vmatmul.mubr.f32.gmra.mrb[0].mxu0 %v1728
        %v1796 = vpop.f32.mrb[0].mxu0
        %v1797 = vadd.f32 %v1725, %v1796
        %v1798 = vpop.f32.mrb[0].mxu0
        %v1799 = vadd.f32 %v1725, %v1798
        %1800 = vdwg.mxu0
        %1801 = vmatprep.subr.mxu0 %v1709
        %1802 = vmatpush1.msra.mxu0 %v1708
        %1803 = vmatprep.subr.mxu0 %v1716
        %1804 = vmatpush1.msra.mxu0 %v1715
        %1805 = vmatprep.subr.mxu0 0.0
        %1806 = vmatpush1.msra.mxu0 0.0
        %1807 = vmatprep.subr.mxu0 0.0
        %1808 = vmatpush1.msra.mxu0 0.0
        %1809 = vmatprep.subr.mxu0 0.0
        %1810 = vmatpush1.msra.mxu0 0.0
        %1811 = vmatprep.subr.mxu0 0.0
        %1812 = vmatpush1.msra.mxu0 0.0
        %1813 = vmatprep.subr.mxu0 0.0
        %1814 = vmatpush1.msra.mxu0 0.0
        %1815 = vmatprep.subr.mxu0 0.0
        %1816 = vmatpush1.msra.mxu0 0.0
        %1817 = vmatprep.subr.mxu0 0.0
        %1818 = vmatpush1.msra.mxu0 0.0
        %1819 = vmatprep.subr.mxu0 0.0
        %1820 = vmatpush1.msra.mxu0 0.0
        %1821 = vmatprep.subr.mxu0 0.0
        %1822 = vmatpush1.msra.mxu0 0.0
        %1823 = vmatprep.subr.mxu0 0.0
        %1824 = vmatpush1.msra.mxu0 0.0
        %1825 = vmatprep.subr.mxu0 0.0
        %1826 = vmatpush1.msra.mxu0 0.0
        %1827 = vmatprep.subr.mxu0 0.0
        %1828 = vmatpush1.msra.mxu0 0.0
        %1829 = vmatprep.subr.mxu0 0.0
        %1830 = vmatpush1.msra.mxu0 0.0
        %1831 = vmatprep.subr.mxu0 0.0
        %1832 = vmatpush1.msra.mxu0 0.0
        %1833 = vmatprep.subr.mxu0 0.0
        %1834 = vmatpush1.msra.mxu0 0.0
        %1835 = vmatprep.subr.mxu0 0.0
        %1836 = vmatpush1.msra.mxu0 0.0
        %1837 = vmatprep.subr.mxu0 0.0
        %1838 = vmatpush1.msra.mxu0 0.0
        %1839 = vmatprep.subr.mxu0 0.0
        %1840 = vmatpush1.msra.mxu0 0.0
        %1841 = vmatprep.subr.mxu0 0.0
        %1842 = vmatpush1.msra.mxu0 0.0
        %1843 = vmatprep.subr.mxu0 0.0
        %1844 = vmatpush1.msra.mxu0 0.0
        %1845 = vmatprep.subr.mxu0 0.0
        %1846 = vmatpush1.msra.mxu0 0.0
        %1847 = vmatprep.subr.mxu0 0.0
        %1848 = vmatpush1.msra.mxu0 0.0
        %1849 = vmatprep.subr.mxu0 0.0
        %1850 = vmatpush1.msra.mxu0 0.0
        %1851 = vmatprep.subr.mxu0 0.0
        %1852 = vmatpush1.msra.mxu0 0.0
        %1853 = vmatprep.subr.mxu0 0.0
        %1854 = vmatpush1.msra.mxu0 0.0
        %1855 = vmatprep.subr.mxu0 0.0
        %1856 = vmatpush1.msra.mxu0 0.0
        %1857 = vmatprep.subr.mxu0 0.0
        %1858 = vmatpush1.msra.mxu0 0.0
        %1859 = vmatprep.subr.mxu0 0.0
        %1860 = vmatpush1.msra.mxu0 0.0
        %1861 = vmatprep.subr.mxu0 0.0
        %1862 = vmatpush1.msra.mxu0 0.0
        %1863 = vmatprep.subr.mxu0 0.0
        %1864 = vmatpush1.msra.mxu0 0.0
        %1865 = vmatprep.mubr.f32.mxu0 0.0
        %1866 = vmatmul.mubr.f32.gmra.mrb[0].mxu0 %v1728
        %v1867 = vpop.f32.mrb[0].mxu0
        %v1868 = vadd.f32 %v1725, %v1867
        %v1869 = vpop.f32.mrb[0].mxu0
        %v1870 = vadd.f32 %v1725, %v1869
        %1871 = vdwg.mxu0
        %1872 = vmatprep.subr.mxu0 %v1711
        %1873 = vmatpush1.msra.mxu0 %v1710
        %1874 = vmatprep.subr.mxu0 %v1718
        %1875 = vmatpush1.msra.mxu0 %v1717
        %1876 = vmatprep.subr.mxu0 0.0
        %1877 = vmatpush1.msra.mxu0 0.0
        %1878 = vmatprep.subr.mxu0 0.0
        %1879 = vmatpush1.msra.mxu0 0.0
        %1880 = vmatprep.subr.mxu0 0.0
        %1881 = vmatpush1.msra.mxu0 0.0
        %1882 = vmatprep.subr.mxu0 0.0
        %1883 = vmatpush1.msra.mxu0 0.0
        %1884 = vmatprep.subr.mxu0 0.0
        %1885 = vmatpush1.msra.mxu0 0.0
        %1886 = vmatprep.subr.mxu0 0.0
        %1887 = vmatpush1.msra.mxu0 0.0
        %1888 = vmatprep.subr.mxu0 0.0
        %1889 = vmatpush1.msra.mxu0 0.0
        %1890 = vmatprep.subr.mxu0 0.0
        %1891 = vmatpush1.msra.mxu0 0.0
        %1892 = vmatprep.subr.mxu0 0.0
        %1893 = vmatpush1.msra.mxu0 0.0
        %1894 = vmatprep.subr.mxu0 0.0
        %1895 = vmatpush1.msra.mxu0 0.0
        %1896 = vmatprep.subr.mxu0 0.0
        %1897 = vmatpush1.msra.mxu0 0.0
        %1898 = vmatprep.subr.mxu0 0.0
        %1899 = vmatpush1.msra.mxu0 0.0
        %1900 = vmatprep.subr.mxu0 0.0
        %1901 = vmatpush1.msra.mxu0 0.0
        %1902 = vmatprep.subr.mxu0 0.0
        %1903 = vmatpush1.msra.mxu0 0.0
        %1904 = vmatprep.subr.mxu0 0.0
        %1905 = vmatpush1.msra.mxu0 0.0
        %1906 = vmatprep.subr.mxu0 0.0
        %1907 = vmatpush1.msra.mxu0 0.0
        %1908 = vmatprep.subr.mxu0 0.0
        %1909 = vmatpush1.msra.mxu0 0.0
        %1910 = vmatprep.subr.mxu0 0.0
        %1911 = vmatpush1.msra.mxu0 0.0
        %1912 = vmatprep.subr.mxu0 0.0
        %1913 = vmatpush1.msra.mxu0 0.0
        %1914 = vmatprep.subr.mxu0 0.0
        %1915 = vmatpush1.msra.mxu0 0.0
        %1916 = vmatprep.subr.mxu0 0.0
        %1917 = vmatpush1.msra.mxu0 0.0
        %1918 = vmatprep.subr.mxu0 0.0
        %1919 = vmatpush1.msra.mxu0 0.0
        %1920 = vmatprep.subr.mxu0 0.0
        %1921 = vmatpush1.msra.mxu0 0.0
        %1922 = vmatprep.subr.mxu0 0.0
        %1923 = vmatpush1.msra.mxu0 0.0
        %1924 = vmatprep.subr.mxu0 0.0
        %1925 = vmatpush1.msra.mxu0 0.0
        %1926 = vmatprep.subr.mxu0 0.0
        %1927 = vmatpush1.msra.mxu0 0.0
        %1928 = vmatprep.subr.mxu0 0.0
        %1929 = vmatpush1.msra.mxu0 0.0
        %1930 = vmatprep.subr.mxu0 0.0
        %1931 = vmatpush1.msra.mxu0 0.0
        %1932 = vmatprep.subr.mxu0 0.0
        %1933 = vmatpush1.msra.mxu0 0.0
        %1934 = vmatprep.subr.mxu0 0.0
        %1935 = vmatpush1.msra.mxu0 0.0
        %1936 = vmatprep.mubr.f32.mxu0 0.0
        %1937 = vmatmul.mubr.f32.gmra.mrb[0].mxu0 %v1728
        %v1938 = vpop.f32.mrb[0].mxu0
        %v1939 = vadd.f32 %v1725, %v1938
        %v1940 = vpop.f32.mrb[0].mxu0
        %v1941 = vadd.f32 %v1725, %v1940
        %1942 = vdwg.mxu0
        %1943 = vmatprep.subr.mxu0 0.0
        %1944 = vmatpush1.msra.mxu0 %v1712
        %1945 = vmatprep.subr.mxu0 0.0
        %1946 = vmatpush1.msra.mxu0 %v1719
        %1947 = vmatprep.subr.mxu0 0.0
        %1948 = vmatpush1.msra.mxu0 0.0
        %1949 = vmatprep.subr.mxu0 0.0
        %1950 = vmatpush1.msra.mxu0 0.0
        %1951 = vmatprep.subr.mxu0 0.0
        %1952 = vmatpush1.msra.mxu0 0.0
        %1953 = vmatprep.subr.mxu0 0.0
        %1954 = vmatpush1.msra.mxu0 0.0
        %1955 = vmatprep.subr.mxu0 0.0
        %1956 = vmatpush1.msra.mxu0 0.0
        %1957 = vmatprep.subr.mxu0 0.0
        %1958 = vmatpush1.msra.mxu0 0.0
        %1959 = vmatprep.subr.mxu0 0.0
        %1960 = vmatpush1.msra.mxu0 0.0
        %1961 = vmatprep.subr.mxu0 0.0
        %1962 = vmatpush1.msra.mxu0 0.0
        %1963 = vmatprep.subr.mxu0 0.0
        %1964 = vmatpush1.msra.mxu0 0.0
        %1965 = vmatprep.subr.mxu0 0.0
        %1966 = vmatpush1.msra.mxu0 0.0
        %1967 = vmatprep.subr.mxu0 0.0
        %1968 = vmatpush1.msra.mxu0 0.0
        %1969 = vmatprep.subr.mxu0 0.0
        %1970 = vmatpush1.msra.mxu0 0.0
        %1971 = vmatprep.subr.mxu0 0.0
        %1972 = vmatpush1.msra.mxu0 0.0
        %1973 = vmatprep.subr.mxu0 0.0
        %1974 = vmatpush1.msra.mxu0 0.0
        %1975 = vmatprep.subr.mxu0 0.0
        %1976 = vmatpush1.msra.mxu0 0.0
        %1977 = vmatprep.subr.mxu0 0.0
        %1978 = vmatpush1.msra.mxu0 0.0
        %1979 = vmatprep.subr.mxu0 0.0
        %1980 = vmatpush1.msra.mxu0 0.0
        %1981 = vmatprep.subr.mxu0 0.0
        %1982 = vmatpush1.msra.mxu0 0.0
        %1983 = vmatprep.subr.mxu0 0.0
        %1984 = vmatpush1.msra.mxu0 0.0
        %1985 = vmatprep.subr.mxu0 0.0
        %1986 = vmatpush1.msra.mxu0 0.0
        %1987 = vmatprep.subr.mxu0 0.0
        %1988 = vmatpush1.msra.mxu0 0.0
        %1989 = vmatprep.subr.mxu0 0.0
        %1990 = vmatpush1.msra.mxu0 0.0
        %1991 = vmatprep.subr.mxu0 0.0
        %1992 = vmatpush1.msra.mxu0 0.0
        %1993 = vmatprep.subr.mxu0 0.0
        %1994 = vmatpush1.msra.mxu0 0.0
        %1995 = vmatprep.subr.mxu0 0.0
        %1996 = vmatpush1.msra.mxu0 0.0
        %1997 = vmatprep.subr.mxu0 0.0
        %1998 = vmatpush1.msra.mxu0 0.0
        %1999 = vmatprep.subr.mxu0 0.0
        %2000 = vmatpush1.msra.mxu0 0.0
        %2001 = vmatprep.subr.mxu0 0.0
        %2002 = vmatpush1.msra.mxu0 0.0
        %2003 = vmatprep.subr.mxu0 0.0
        %2004 = vmatpush1.msra.mxu0 0.0
        %2005 = vmatprep.subr.mxu0 0.0
        %2006 = vmatpush1.msra.mxu0 0.0
        %2007 = vmatprep.mubr.f32.mxu0 0.0
        %2008 = vmatmul.mubr.f32.gmra.mrb[0].mxu0 %v1728
        %v2009 = vpop.f32.mrb[0].mxu0
        %v2010 = vadd.f32 %v1725, %v2009
        %v2011 = vpop.f32.mrb[0].mxu0
        %2012 = vdwg.mxu0
        %vm2013 = vcmp.ge.f32.partialorder %v1797, 0.0
        %vm2014 = vcmp.ge.f32.partialorder %v1799, 0.0
        %vm2015 = vcmp.ge.f32.partialorder %v1868, 0.0
        %vm2016 = vcmp.ge.f32.partialorder %v1870, 0.0
        %vm2017 = vcmp.ge.f32.partialorder %v1939, 0.0
        %vm2018 = vcmp.ge.f32.partialorder %v1941, 0.0
        %vm2019 = vcmp.ge.f32.partialorder %v2010, 0.0
        %v2020 = vmul.f32 %v1797, 0.3
        %v2021 = vmul.f32 %v1799, 0.3
        %v2022 = vmul.f32 %v1868, 0.3
        %v2023 = vmul.f32 %v1870, 0.3
        %v2024 = vmul.f32 %v1939, 0.3
        %v2025 = vmul.f32 %v1941, 0.3
        %v2026 = vmul.f32 %v2010, 0.3
        %v2027 = vsel %vm2013, %v1797, %v2020
        %v2028 = vsel %vm2014, %v1799, %v2021
        %v2029 = vsel %vm2015, %v1868, %v2022
        %v2030 = vsel %vm2016, %v1870, %v2023
        %v2031 = vsel %vm2017, %v1939, %v2024
        %v2032 = vsel %vm2018, %v1941, %v2025
        %v2033 = vsel %vm2019, %v2010, %v2026
        %v2034 = vld [vmem:[%s10] sm:$0x1]
        %v2035 = vld [vmem:[#allocation5] sm:$0x1]
        %2037 = vset.pattern.permute.xlu0 0
        %2038 = vperm.xlu0 %2037, %v2035
        %v2039 = vpop.permute.xlu0 %2038
        %v2041 = vlaneseq
        %v2042 = vshrl.u32 %v2041, 7
        %v2043 = vsub.s32 0, %v2042
        %v2044 = vrot.slane %v2039, %v2043
        %vm2045 = vcmask 64512
        %v2047 = vsel %vm2045, %v2034, 0
        %2049 = vmatprep.subr.mxu0 %v2028
        %2050 = vmatpush1.msra.mxu0 %v2027
        %2051 = vmatprep.subr.mxu0 0.0
        %2052 = vmatpush1.msra.mxu0 0.0
        %2053 = vmatprep.subr.mxu0 0.0
        %2054 = vmatpush1.msra.mxu0 0.0
        %2055 = vmatprep.subr.mxu0 0.0
        %2056 = vmatpush1.msra.mxu0 0.0
        %2057 = vmatprep.subr.mxu0 0.0
        %2058 = vmatpush1.msra.mxu0 0.0
        %2059 = vmatprep.subr.mxu0 0.0
        %2060 = vmatpush1.msra.mxu0 0.0
        %2061 = vmatprep.subr.mxu0 0.0
        %2062 = vmatpush1.msra.mxu0 0.0
        %2063 = vmatprep.subr.mxu0 0.0
        %2064 = vmatpush1.msra.mxu0 0.0
        %2065 = vmatprep.subr.mxu0 0.0
        %2066 = vmatpush1.msra.mxu0 0.0
        %2067 = vmatprep.subr.mxu0 0.0
        %2068 = vmatpush1.msra.mxu0 0.0
        %2069 = vmatprep.subr.mxu0 0.0
        %2070 = vmatpush1.msra.mxu0 0.0
        %2071 = vmatprep.subr.mxu0 0.0
        %2072 = vmatpush1.msra.mxu0 0.0
        %2073 = vmatprep.subr.mxu0 0.0
        %2074 = vmatpush1.msra.mxu0 0.0
        %2075 = vmatprep.subr.mxu0 0.0
        %2076 = vmatpush1.msra.mxu0 0.0
        %2077 = vmatprep.subr.mxu0 0.0
        %2078 = vmatpush1.msra.mxu0 0.0
        %2079 = vmatprep.subr.mxu0 0.0
        %2080 = vmatpush1.msra.mxu0 0.0
        %2081 = vmatprep.subr.mxu0 0.0
        %2082 = vmatpush1.msra.mxu0 0.0
        %2083 = vmatprep.subr.mxu0 0.0
        %2084 = vmatpush1.msra.mxu0 0.0
        %2085 = vmatprep.subr.mxu0 0.0
        %2086 = vmatpush1.msra.mxu0 0.0
        %2087 = vmatprep.subr.mxu0 0.0
        %2088 = vmatpush1.msra.mxu0 0.0
        %2089 = vmatprep.subr.mxu0 0.0
        %2090 = vmatpush1.msra.mxu0 0.0
        %2091 = vmatprep.subr.mxu0 0.0
        %2092 = vmatpush1.msra.mxu0 0.0
        %2093 = vmatprep.subr.mxu0 0.0
        %2094 = vmatpush1.msra.mxu0 0.0
        %2095 = vmatprep.subr.mxu0 0.0
        %2096 = vmatpush1.msra.mxu0 0.0
        %2097 = vmatprep.subr.mxu0 0.0
        %2098 = vmatpush1.msra.mxu0 0.0
        %2099 = vmatprep.subr.mxu0 0.0
        %2100 = vmatpush1.msra.mxu0 0.0
        %2101 = vmatprep.subr.mxu0 0.0
        %2102 = vmatpush1.msra.mxu0 0.0
        %2103 = vmatprep.subr.mxu0 0.0
        %2104 = vmatpush1.msra.mxu0 0.0
        %2105 = vmatprep.subr.mxu0 0.0
        %2106 = vmatpush1.msra.mxu0 0.0
        %2107 = vmatprep.subr.mxu0 0.0
        %2108 = vmatpush1.msra.mxu0 0.0
        %2109 = vmatprep.subr.mxu0 0.0
        %2110 = vmatpush1.msra.mxu0 0.0
        %2111 = vmatprep.subr.mxu0 0.0
        %2112 = vmatpush1.msra.mxu0 0.0
        %2113 = vmatprep.mubr.f32.mxu0 0.0
        %2114 = vmatmul.mubr.f32.gmra.mrb[0].mxu0 %v2047
        %v2115 = vpop.f32.mrb[0].mxu0
        %v2116 = vadd.f32 %v2044, %v2115
        %v2117 = vpop.f32.mrb[0].mxu0
        %v2118 = vadd.f32 %v2044, %v2117
        %2119 = vdwg.mxu0
        %2120 = vmatprep.subr.mxu0 %v2030
        %2121 = vmatpush1.msra.mxu0 %v2029
        %2122 = vmatprep.subr.mxu0 0.0
        %2123 = vmatpush1.msra.mxu0 0.0
        %2124 = vmatprep.subr.mxu0 0.0
        %2125 = vmatpush1.msra.mxu0 0.0
        %2126 = vmatprep.subr.mxu0 0.0
        %2127 = vmatpush1.msra.mxu0 0.0
        %2128 = vmatprep.subr.mxu0 0.0
        %2129 = vmatpush1.msra.mxu0 0.0
        %2130 = vmatprep.subr.mxu0 0.0
        %2131 = vmatpush1.msra.mxu0 0.0
        %2132 = vmatprep.subr.mxu0 0.0
        %2133 = vmatpush1.msra.mxu0 0.0
        %2134 = vmatprep.subr.mxu0 0.0
        %2135 = vmatpush1.msra.mxu0 0.0
        %2136 = vmatprep.subr.mxu0 0.0
        %2137 = vmatpush1.msra.mxu0 0.0
        %2138 = vmatprep.subr.mxu0 0.0
        %2139 = vmatpush1.msra.mxu0 0.0
        %2140 = vmatprep.subr.mxu0 0.0
        %2141 = vmatpush1.msra.mxu0 0.0
        %2142 = vmatprep.subr.mxu0 0.0
        %2143 = vmatpush1.msra.mxu0 0.0
        %2144 = vmatprep.subr.mxu0 0.0
        %2145 = vmatpush1.msra.mxu0 0.0
        %2146 = vmatprep.subr.mxu0 0.0
        %2147 = vmatpush1.msra.mxu0 0.0
        %2148 = vmatprep.subr.mxu0 0.0
        %2149 = vmatpush1.msra.mxu0 0.0
        %2150 = vmatprep.subr.mxu0 0.0
        %2151 = vmatpush1.msra.mxu0 0.0
        %2152 = vmatprep.subr.mxu0 0.0
        %2153 = vmatpush1.msra.mxu0 0.0
        %2154 = vmatprep.subr.mxu0 0.0
        %2155 = vmatpush1.msra.mxu0 0.0
        %2156 = vmatprep.subr.mxu0 0.0
        %2157 = vmatpush1.msra.mxu0 0.0
        %2158 = vmatprep.subr.mxu0 0.0
        %2159 = vmatpush1.msra.mxu0 0.0
        %2160 = vmatprep.subr.mxu0 0.0
        %2161 = vmatpush1.msra.mxu0 0.0
        %2162 = vmatprep.subr.mxu0 0.0
        %2163 = vmatpush1.msra.mxu0 0.0
        %2164 = vmatprep.subr.mxu0 0.0
        %2165 = vmatpush1.msra.mxu0 0.0
        %2166 = vmatprep.subr.mxu0 0.0
        %2167 = vmatpush1.msra.mxu0 0.0
        %2168 = vmatprep.subr.mxu0 0.0
        %2169 = vmatpush1.msra.mxu0 0.0
        %2170 = vmatprep.subr.mxu0 0.0
        %2171 = vmatpush1.msra.mxu0 0.0
        %2172 = vmatprep.subr.mxu0 0.0
        %2173 = vmatpush1.msra.mxu0 0.0
        %2174 = vmatprep.subr.mxu0 0.0
        %2175 = vmatpush1.msra.mxu0 0.0
        %2176 = vmatprep.subr.mxu0 0.0
        %2177 = vmatpush1.msra.mxu0 0.0
        %2178 = vmatprep.subr.mxu0 0.0
        %2179 = vmatpush1.msra.mxu0 0.0
        %2180 = vmatprep.subr.mxu0 0.0
        %2181 = vmatpush1.msra.mxu0 0.0
        %2182 = vmatprep.subr.mxu0 0.0
        %2183 = vmatpush1.msra.mxu0 0.0
        %2184 = vmatprep.mubr.f32.mxu0 0.0
        %2185 = vmatmul.mubr.f32.gmra.mrb[0].mxu0 %v2047
        %v2186 = vpop.f32.mrb[0].mxu0
        %v2187 = vadd.f32 %v2044, %v2186
        %v2188 = vpop.f32.mrb[0].mxu0
        %v2189 = vadd.f32 %v2044, %v2188
        %2190 = vdwg.mxu0
        %2191 = vmatprep.subr.mxu0 %v2032
        %2192 = vmatpush1.msra.mxu0 %v2031
        %2193 = vmatprep.subr.mxu0 0.0
        %2194 = vmatpush1.msra.mxu0 0.0
        %2195 = vmatprep.subr.mxu0 0.0
        %2196 = vmatpush1.msra.mxu0 0.0
        %2197 = vmatprep.subr.mxu0 0.0
        %2198 = vmatpush1.msra.mxu0 0.0
        %2199 = vmatprep.subr.mxu0 0.0
        %2200 = vmatpush1.msra.mxu0 0.0
        %2201 = vmatprep.subr.mxu0 0.0
        %2202 = vmatpush1.msra.mxu0 0.0
        %2203 = vmatprep.subr.mxu0 0.0
        %2204 = vmatpush1.msra.mxu0 0.0
        %2205 = vmatprep.subr.mxu0 0.0
        %2206 = vmatpush1.msra.mxu0 0.0
        %2207 = vmatprep.subr.mxu0 0.0
        %2208 = vmatpush1.msra.mxu0 0.0
        %2209 = vmatprep.subr.mxu0 0.0
        %2210 = vmatpush1.msra.mxu0 0.0
        %2211 = vmatprep.subr.mxu0 0.0
        %2212 = vmatpush1.msra.mxu0 0.0
        %2213 = vmatprep.subr.mxu0 0.0
        %2214 = vmatpush1.msra.mxu0 0.0
        %2215 = vmatprep.subr.mxu0 0.0
        %2216 = vmatpush1.msra.mxu0 0.0
        %2217 = vmatprep.subr.mxu0 0.0
        %2218 = vmatpush1.msra.mxu0 0.0
        %2219 = vmatprep.subr.mxu0 0.0
        %2220 = vmatpush1.msra.mxu0 0.0
        %2221 = vmatprep.subr.mxu0 0.0
        %2222 = vmatpush1.msra.mxu0 0.0
        %2223 = vmatprep.subr.mxu0 0.0
        %2224 = vmatpush1.msra.mxu0 0.0
        %2225 = vmatprep.subr.mxu0 0.0
        %2226 = vmatpush1.msra.mxu0 0.0
        %2227 = vmatprep.subr.mxu0 0.0
        %2228 = vmatpush1.msra.mxu0 0.0
        %2229 = vmatprep.subr.mxu0 0.0
        %2230 = vmatpush1.msra.mxu0 0.0
        %2231 = vmatprep.subr.mxu0 0.0
        %2232 = vmatpush1.msra.mxu0 0.0
        %2233 = vmatprep.subr.mxu0 0.0
        %2234 = vmatpush1.msra.mxu0 0.0
        %2235 = vmatprep.subr.mxu0 0.0
        %2236 = vmatpush1.msra.mxu0 0.0
        %2237 = vmatprep.subr.mxu0 0.0
        %2238 = vmatpush1.msra.mxu0 0.0
        %2239 = vmatprep.subr.mxu0 0.0
        %2240 = vmatpush1.msra.mxu0 0.0
        %2241 = vmatprep.subr.mxu0 0.0
        %2242 = vmatpush1.msra.mxu0 0.0
        %2243 = vmatprep.subr.mxu0 0.0
        %2244 = vmatpush1.msra.mxu0 0.0
        %2245 = vmatprep.subr.mxu0 0.0
        %2246 = vmatpush1.msra.mxu0 0.0
        %2247 = vmatprep.subr.mxu0 0.0
        %2248 = vmatpush1.msra.mxu0 0.0
        %2249 = vmatprep.subr.mxu0 0.0
        %2250 = vmatpush1.msra.mxu0 0.0
        %2251 = vmatprep.subr.mxu0 0.0
        %2252 = vmatpush1.msra.mxu0 0.0
        %2253 = vmatprep.subr.mxu0 0.0
        %2254 = vmatpush1.msra.mxu0 0.0
        %2255 = vmatprep.mubr.f32.mxu0 0.0
        %2256 = vmatmul.mubr.f32.gmra.mrb[0].mxu0 %v2047
        %v2257 = vpop.f32.mrb[0].mxu0
        %v2258 = vadd.f32 %v2044, %v2257
        %v2259 = vpop.f32.mrb[0].mxu0
        %v2260 = vadd.f32 %v2044, %v2259
        %2261 = vdwg.mxu0
        %2262 = vmatprep.subr.mxu0 0.0
        %2263 = vmatpush1.msra.mxu0 %v2033
        %2264 = vmatprep.subr.mxu0 0.0
        %2265 = vmatpush1.msra.mxu0 0.0
        %2266 = vmatprep.subr.mxu0 0.0
        %2267 = vmatpush1.msra.mxu0 0.0
        %2268 = vmatprep.subr.mxu0 0.0
        %2269 = vmatpush1.msra.mxu0 0.0
        %2270 = vmatprep.subr.mxu0 0.0
        %2271 = vmatpush1.msra.mxu0 0.0
        %2272 = vmatprep.subr.mxu0 0.0
        %2273 = vmatpush1.msra.mxu0 0.0
        %2274 = vmatprep.subr.mxu0 0.0
        %2275 = vmatpush1.msra.mxu0 0.0
        %2276 = vmatprep.subr.mxu0 0.0
        %2277 = vmatpush1.msra.mxu0 0.0
        %2278 = vmatprep.subr.mxu0 0.0
        %2279 = vmatpush1.msra.mxu0 0.0
        %2280 = vmatprep.subr.mxu0 0.0
        %2281 = vmatpush1.msra.mxu0 0.0
        %2282 = vmatprep.subr.mxu0 0.0
        %2283 = vmatpush1.msra.mxu0 0.0
        %2284 = vmatprep.subr.mxu0 0.0
        %2285 = vmatpush1.msra.mxu0 0.0
        %2286 = vmatprep.subr.mxu0 0.0
        %2287 = vmatpush1.msra.mxu0 0.0
        %2288 = vmatprep.subr.mxu0 0.0
        %2289 = vmatpush1.msra.mxu0 0.0
        %2290 = vmatprep.subr.mxu0 0.0
        %2291 = vmatpush1.msra.mxu0 0.0
        %2292 = vmatprep.subr.mxu0 0.0
        %2293 = vmatpush1.msra.mxu0 0.0
        %2294 = vmatprep.subr.mxu0 0.0
        %2295 = vmatpush1.msra.mxu0 0.0
        %2296 = vmatprep.subr.mxu0 0.0
        %2297 = vmatpush1.msra.mxu0 0.0
        %2298 = vmatprep.subr.mxu0 0.0
        %2299 = vmatpush1.msra.mxu0 0.0
        %2300 = vmatprep.subr.mxu0 0.0
        %2301 = vmatpush1.msra.mxu0 0.0
        %2302 = vmatprep.subr.mxu0 0.0
        %2303 = vmatpush1.msra.mxu0 0.0
        %2304 = vmatprep.subr.mxu0 0.0
        %2305 = vmatpush1.msra.mxu0 0.0
        %2306 = vmatprep.subr.mxu0 0.0
        %2307 = vmatpush1.msra.mxu0 0.0
        %2308 = vmatprep.subr.mxu0 0.0
        %2309 = vmatpush1.msra.mxu0 0.0
        %2310 = vmatprep.subr.mxu0 0.0
        %2311 = vmatpush1.msra.mxu0 0.0
        %2312 = vmatprep.subr.mxu0 0.0
        %2313 = vmatpush1.msra.mxu0 0.0
        %2314 = vmatprep.subr.mxu0 0.0
        %2315 = vmatpush1.msra.mxu0 0.0
        %2316 = vmatprep.subr.mxu0 0.0
        %2317 = vmatpush1.msra.mxu0 0.0
        %2318 = vmatprep.subr.mxu0 0.0
        %2319 = vmatpush1.msra.mxu0 0.0
        %2320 = vmatprep.subr.mxu0 0.0
        %2321 = vmatpush1.msra.mxu0 0.0
        %2322 = vmatprep.subr.mxu0 0.0
        %2323 = vmatpush1.msra.mxu0 0.0
        %2324 = vmatprep.subr.mxu0 0.0
        %2325 = vmatpush1.msra.mxu0 0.0
        %2326 = vmatprep.mubr.f32.mxu0 0.0
        %2327 = vmatmul.mubr.f32.gmra.mrb[0].mxu0 %v2047
        %v2328 = vpop.f32.mrb[0].mxu0
        %v2329 = vadd.f32 %v2044, %v2328
        %v2330 = vpop.f32.mrb[0].mxu0
        %2331 = vdwg.mxu0
        %vm2332 = vcmp.ge.f32.partialorder %v2116, 0.0
        %vm2333 = vcmp.ge.f32.partialorder %v2118, 0.0
        %vm2334 = vcmp.ge.f32.partialorder %v2187, 0.0
        %vm2335 = vcmp.ge.f32.partialorder %v2189, 0.0
        %vm2336 = vcmp.ge.f32.partialorder %v2258, 0.0
        %vm2337 = vcmp.ge.f32.partialorder %v2260, 0.0
        %vm2338 = vcmp.ge.f32.partialorder %v2329, 0.0
        %v2339 = vmul.f32 %v2116, 0.3
        %v2340 = vmul.f32 %v2118, 0.3
        %v2341 = vmul.f32 %v2187, 0.3
        %v2342 = vmul.f32 %v2189, 0.3
        %v2343 = vmul.f32 %v2258, 0.3
        %v2344 = vmul.f32 %v2260, 0.3
        %v2345 = vmul.f32 %v2329, 0.3
        %v2346 = vsel %vm2332, %v2116, %v2339
        %v2347 = vsel %vm2333, %v2118, %v2340
        %v2348 = vsel %vm2334, %v2187, %v2341
        %v2349 = vsel %vm2335, %v2189, %v2342
        %v2350 = vsel %vm2336, %v2258, %v2343
        %v2351 = vsel %vm2337, %v2260, %v2344
        %v2352 = vsel %vm2338, %v2329, %v2345
        %v2353 = vld [vmem:[#allocation6] sm:$0x1]
        %v2354 = vld [vmem:[#allocation7] sm:$0x1]
        %2356 = vset.pattern.permute.xlu0 0
        %2357 = vperm.xlu0 %2356, %v2354
        %v2358 = vpop.permute.xlu0 %2357
        %v2360 = vlaneseq
        %v2361 = vshrl.u32 %v2360, 7
        %v2362 = vsub.s32 0, %v2361
        %v2363 = vrot.slane %v2358, %v2362
        %vm2364 = vcmask 7168
        %v2366 = vsel %vm2364, %v2353, 0
        %vm2368 = vcmask 1040384
        %v2370 = vsel %vm2368, %v2346, 0
        %v2373 = vsel %vm2368, %v2347, 0
        %v2376 = vsel %vm2368, %v2348, 0
        %v2379 = vsel %vm2368, %v2349, 0
        %v2382 = vsel %vm2368, %v2350, 0
        %v2385 = vsel %vm2368, %v2351, 0
        %v2388 = vsel %vm2368, %v2352, 0
        %2390 = vmatprep.subr.mxu0 %v2373
        %2391 = vmatpush1.msra.mxu0 %v2370
        %2392 = vmatprep.subr.mxu0 0.0
        %2393 = vmatpush1.msra.mxu0 0.0
        %2394 = vmatprep.subr.mxu0 0.0
        %2395 = vmatpush1.msra.mxu0 0.0
        %2396 = vmatprep.subr.mxu0 0.0
        %2397 = vmatpush1.msra.mxu0 0.0
        %2398 = vmatprep.subr.mxu0 0.0
        %2399 = vmatpush1.msra.mxu0 0.0
        %2400 = vmatprep.subr.mxu0 0.0
        %2401 = vmatpush1.msra.mxu0 0.0
        %2402 = vmatprep.subr.mxu0 0.0
        %2403 = vmatpush1.msra.mxu0 0.0
        %2404 = vmatprep.subr.mxu0 0.0
        %2405 = vmatpush1.msra.mxu0 0.0
        %2406 = vmatprep.subr.mxu0 0.0
        %2407 = vmatpush1.msra.mxu0 0.0
        %2408 = vmatprep.subr.mxu0 0.0
        %2409 = vmatpush1.msra.mxu0 0.0
        %2410 = vmatprep.subr.mxu0 0.0
        %2411 = vmatpush1.msra.mxu0 0.0
        %2412 = vmatprep.subr.mxu0 0.0
        %2413 = vmatpush1.msra.mxu0 0.0
        %2414 = vmatprep.subr.mxu0 0.0
        %2415 = vmatpush1.msra.mxu0 0.0
        %2416 = vmatprep.subr.mxu0 0.0
        %2417 = vmatpush1.msra.mxu0 0.0
        %2418 = vmatprep.subr.mxu0 0.0
        %2419 = vmatpush1.msra.mxu0 0.0
        %2420 = vmatprep.subr.mxu0 0.0
        %2421 = vmatpush1.msra.mxu0 0.0
        %2422 = vmatprep.subr.mxu0 0.0
        %2423 = vmatpush1.msra.mxu0 0.0
        %2424 = vmatprep.subr.mxu0 0.0
        %2425 = vmatpush1.msra.mxu0 0.0
        %2426 = vmatprep.subr.mxu0 0.0
        %2427 = vmatpush1.msra.mxu0 0.0
        %2428 = vmatprep.subr.mxu0 0.0
        %2429 = vmatpush1.msra.mxu0 0.0
        %2430 = vmatprep.subr.mxu0 0.0
        %2431 = vmatpush1.msra.mxu0 0.0
        %2432 = vmatprep.subr.mxu0 0.0
        %2433 = vmatpush1.msra.mxu0 0.0
        %2434 = vmatprep.subr.mxu0 0.0
        %2435 = vmatpush1.msra.mxu0 0.0
        %2436 = vmatprep.subr.mxu0 0.0
        %2437 = vmatpush1.msra.mxu0 0.0
        %2438 = vmatprep.subr.mxu0 0.0
        %2439 = vmatpush1.msra.mxu0 0.0
        %2440 = vmatprep.subr.mxu0 0.0
        %2441 = vmatpush1.msra.mxu0 0.0
        %2442 = vmatprep.subr.mxu0 0.0
        %2443 = vmatpush1.msra.mxu0 0.0
        %2444 = vmatprep.subr.mxu0 0.0
        %2445 = vmatpush1.msra.mxu0 0.0
        %2446 = vmatprep.subr.mxu0 0.0
        %2447 = vmatpush1.msra.mxu0 0.0
        %2448 = vmatprep.subr.mxu0 0.0
        %2449 = vmatpush1.msra.mxu0 0.0
        %2450 = vmatprep.subr.mxu0 0.0
        %2451 = vmatpush1.msra.mxu0 0.0
        %2452 = vmatprep.subr.mxu0 0.0
        %2453 = vmatpush1.msra.mxu0 0.0
        %2454 = vmatprep.mubr.f32.mxu0 0.0
        %2455 = vmatmul.mubr.f32.gmra.mrb[0].mxu0 %v2366
        %v2456 = vpop.f32.mrb[0].mxu0
        %v2457 = vadd.f32 %v2363, %v2456
        %v2458 = vpop.f32.mrb[0].mxu0
        %v2459 = vadd.f32 %v2363, %v2458
        %2460 = vdwg.mxu0
        %2461 = vmatprep.subr.mxu0 %v2379
        %2462 = vmatpush1.msra.mxu0 %v2376
        %2463 = vmatprep.subr.mxu0 0.0
        %2464 = vmatpush1.msra.mxu0 0.0
        %2465 = vmatprep.subr.mxu0 0.0
        %2466 = vmatpush1.msra.mxu0 0.0
        %2467 = vmatprep.subr.mxu0 0.0
        %2468 = vmatpush1.msra.mxu0 0.0
        %2469 = vmatprep.subr.mxu0 0.0
        %2470 = vmatpush1.msra.mxu0 0.0
        %2471 = vmatprep.subr.mxu0 0.0
        %2472 = vmatpush1.msra.mxu0 0.0
        %2473 = vmatprep.subr.mxu0 0.0
        %2474 = vmatpush1.msra.mxu0 0.0
        %2475 = vmatprep.subr.mxu0 0.0
        %2476 = vmatpush1.msra.mxu0 0.0
        %2477 = vmatprep.subr.mxu0 0.0
        %2478 = vmatpush1.msra.mxu0 0.0
        %2479 = vmatprep.subr.mxu0 0.0
        %2480 = vmatpush1.msra.mxu0 0.0
        %2481 = vmatprep.subr.mxu0 0.0
        %2482 = vmatpush1.msra.mxu0 0.0
        %2483 = vmatprep.subr.mxu0 0.0
        %2484 = vmatpush1.msra.mxu0 0.0
        %2485 = vmatprep.subr.mxu0 0.0
        %2486 = vmatpush1.msra.mxu0 0.0
        %2487 = vmatprep.subr.mxu0 0.0
        %2488 = vmatpush1.msra.mxu0 0.0
        %2489 = vmatprep.subr.mxu0 0.0
        %2490 = vmatpush1.msra.mxu0 0.0
        %2491 = vmatprep.subr.mxu0 0.0
        %2492 = vmatpush1.msra.mxu0 0.0
        %2493 = vmatprep.subr.mxu0 0.0
        %2494 = vmatpush1.msra.mxu0 0.0
        %2495 = vmatprep.subr.mxu0 0.0
        %2496 = vmatpush1.msra.mxu0 0.0
        %2497 = vmatprep.subr.mxu0 0.0
        %2498 = vmatpush1.msra.mxu0 0.0
        %2499 = vmatprep.subr.mxu0 0.0
        %2500 = vmatpush1.msra.mxu0 0.0
        %2501 = vmatprep.subr.mxu0 0.0
        %2502 = vmatpush1.msra.mxu0 0.0
        %2503 = vmatprep.subr.mxu0 0.0
        %2504 = vmatpush1.msra.mxu0 0.0
        %2505 = vmatprep.subr.mxu0 0.0
        %2506 = vmatpush1.msra.mxu0 0.0
        %2507 = vmatprep.subr.mxu0 0.0
        %2508 = vmatpush1.msra.mxu0 0.0
        %2509 = vmatprep.subr.mxu0 0.0
        %2510 = vmatpush1.msra.mxu0 0.0
        %2511 = vmatprep.subr.mxu0 0.0
        %2512 = vmatpush1.msra.mxu0 0.0
        %2513 = vmatprep.subr.mxu0 0.0
        %2514 = vmatpush1.msra.mxu0 0.0
        %2515 = vmatprep.subr.mxu0 0.0
        %2516 = vmatpush1.msra.mxu0 0.0
        %2517 = vmatprep.subr.mxu0 0.0
        %2518 = vmatpush1.msra.mxu0 0.0
        %2519 = vmatprep.subr.mxu0 0.0
        %2520 = vmatpush1.msra.mxu0 0.0
        %2521 = vmatprep.subr.mxu0 0.0
        %2522 = vmatpush1.msra.mxu0 0.0
        %2523 = vmatprep.subr.mxu0 0.0
        %2524 = vmatpush1.msra.mxu0 0.0
        %2525 = vmatprep.mubr.f32.mxu0 0.0
        %2526 = vmatmul.mubr.f32.gmra.mrb[0].mxu0 %v2366
        %v2527 = vpop.f32.mrb[0].mxu0
        %v2528 = vadd.f32 %v2363, %v2527
        %v2529 = vpop.f32.mrb[0].mxu0
        %v2530 = vadd.f32 %v2363, %v2529
        %2531 = vdwg.mxu0
        %2532 = vmatprep.subr.mxu0 %v2385
        %2533 = vmatpush1.msra.mxu0 %v2382
        %2534 = vmatprep.subr.mxu0 0.0
        %2535 = vmatpush1.msra.mxu0 0.0
        %2536 = vmatprep.subr.mxu0 0.0
        %2537 = vmatpush1.msra.mxu0 0.0
        %2538 = vmatprep.subr.mxu0 0.0
        %2539 = vmatpush1.msra.mxu0 0.0
        %2540 = vmatprep.subr.mxu0 0.0
        %2541 = vmatpush1.msra.mxu0 0.0
        %2542 = vmatprep.subr.mxu0 0.0
        %2543 = vmatpush1.msra.mxu0 0.0
        %2544 = vmatprep.subr.mxu0 0.0
        %2545 = vmatpush1.msra.mxu0 0.0
        %2546 = vmatprep.subr.mxu0 0.0
        %2547 = vmatpush1.msra.mxu0 0.0
        %2548 = vmatprep.subr.mxu0 0.0
        %2549 = vmatpush1.msra.mxu0 0.0
        %2550 = vmatprep.subr.mxu0 0.0
        %2551 = vmatpush1.msra.mxu0 0.0
        %2552 = vmatprep.subr.mxu0 0.0
        %2553 = vmatpush1.msra.mxu0 0.0
        %2554 = vmatprep.subr.mxu0 0.0
        %2555 = vmatpush1.msra.mxu0 0.0
        %2556 = vmatprep.subr.mxu0 0.0
        %2557 = vmatpush1.msra.mxu0 0.0
        %2558 = vmatprep.subr.mxu0 0.0
        %2559 = vmatpush1.msra.mxu0 0.0
        %2560 = vmatprep.subr.mxu0 0.0
        %2561 = vmatpush1.msra.mxu0 0.0
        %2562 = vmatprep.subr.mxu0 0.0
        %2563 = vmatpush1.msra.mxu0 0.0
        %2564 = vmatprep.subr.mxu0 0.0
        %2565 = vmatpush1.msra.mxu0 0.0
        %2566 = vmatprep.subr.mxu0 0.0
        %2567 = vmatpush1.msra.mxu0 0.0
        %2568 = vmatprep.subr.mxu0 0.0
        %2569 = vmatpush1.msra.mxu0 0.0
        %2570 = vmatprep.subr.mxu0 0.0
        %2571 = vmatpush1.msra.mxu0 0.0
        %2572 = vmatprep.subr.mxu0 0.0
        %2573 = vmatpush1.msra.mxu0 0.0
        %2574 = vmatprep.subr.mxu0 0.0
        %2575 = vmatpush1.msra.mxu0 0.0
        %2576 = vmatprep.subr.mxu0 0.0
        %2577 = vmatpush1.msra.mxu0 0.0
        %2578 = vmatprep.subr.mxu0 0.0
        %2579 = vmatpush1.msra.mxu0 0.0
        %2580 = vmatprep.subr.mxu0 0.0
        %2581 = vmatpush1.msra.mxu0 0.0
        %2582 = vmatprep.subr.mxu0 0.0
        %2583 = vmatpush1.msra.mxu0 0.0
        %2584 = vmatprep.subr.mxu0 0.0
        %2585 = vmatpush1.msra.mxu0 0.0
        %2586 = vmatprep.subr.mxu0 0.0
        %2587 = vmatpush1.msra.mxu0 0.0
        %2588 = vmatprep.subr.mxu0 0.0
        %2589 = vmatpush1.msra.mxu0 0.0
        %2590 = vmatprep.subr.mxu0 0.0
        %2591 = vmatpush1.msra.mxu0 0.0
        %2592 = vmatprep.subr.mxu0 0.0
        %2593 = vmatpush1.msra.mxu0 0.0
        %2594 = vmatprep.subr.mxu0 0.0
        %2595 = vmatpush1.msra.mxu0 0.0
        %2596 = vmatprep.mubr.f32.mxu0 0.0
        %2597 = vmatmul.mubr.f32.gmra.mrb[0].mxu0 %v2366
        %v2598 = vpop.f32.mrb[0].mxu0
        %v2599 = vadd.f32 %v2363, %v2598
        %v2600 = vpop.f32.mrb[0].mxu0
        %v2601 = vadd.f32 %v2363, %v2600
        %2602 = vdwg.mxu0
        %2603 = vmatprep.subr.mxu0 0.0
        %2604 = vmatpush1.msra.mxu0 %v2388
        %2605 = vmatprep.subr.mxu0 0.0
        %2606 = vmatpush1.msra.mxu0 0.0
        %2607 = vmatprep.subr.mxu0 0.0
        %2608 = vmatpush1.msra.mxu0 0.0
        %2609 = vmatprep.subr.mxu0 0.0
        %2610 = vmatpush1.msra.mxu0 0.0
        %2611 = vmatprep.subr.mxu0 0.0
        %2612 = vmatpush1.msra.mxu0 0.0
        %2613 = vmatprep.subr.mxu0 0.0
        %2614 = vmatpush1.msra.mxu0 0.0
        %2615 = vmatprep.subr.mxu0 0.0
        %2616 = vmatpush1.msra.mxu0 0.0
        %2617 = vmatprep.subr.mxu0 0.0
        %2618 = vmatpush1.msra.mxu0 0.0
        %2619 = vmatprep.subr.mxu0 0.0
        %2620 = vmatpush1.msra.mxu0 0.0
        %2621 = vmatprep.subr.mxu0 0.0
        %2622 = vmatpush1.msra.mxu0 0.0
        %2623 = vmatprep.subr.mxu0 0.0
        %2624 = vmatpush1.msra.mxu0 0.0
        %2625 = vmatprep.subr.mxu0 0.0
        %2626 = vmatpush1.msra.mxu0 0.0
        %2627 = vmatprep.subr.mxu0 0.0
        %2628 = vmatpush1.msra.mxu0 0.0
        %2629 = vmatprep.subr.mxu0 0.0
        %2630 = vmatpush1.msra.mxu0 0.0
        %2631 = vmatprep.subr.mxu0 0.0
        %2632 = vmatpush1.msra.mxu0 0.0
        %2633 = vmatprep.subr.mxu0 0.0
        %2634 = vmatpush1.msra.mxu0 0.0
        %2635 = vmatprep.subr.mxu0 0.0
        %2636 = vmatpush1.msra.mxu0 0.0
        %2637 = vmatprep.subr.mxu0 0.0
        %2638 = vmatpush1.msra.mxu0 0.0
        %2639 = vmatprep.subr.mxu0 0.0
        %2640 = vmatpush1.msra.mxu0 0.0
        %2641 = vmatprep.subr.mxu0 0.0
        %2642 = vmatpush1.msra.mxu0 0.0
        %2643 = vmatprep.subr.mxu0 0.0
        %2644 = vmatpush1.msra.mxu0 0.0
        %2645 = vmatprep.subr.mxu0 0.0
        %2646 = vmatpush1.msra.mxu0 0.0
        %2647 = vmatprep.subr.mxu0 0.0
        %2648 = vmatpush1.msra.mxu0 0.0
        %2649 = vmatprep.subr.mxu0 0.0
        %2650 = vmatpush1.msra.mxu0 0.0
        %2651 = vmatprep.subr.mxu0 0.0
        %2652 = vmatpush1.msra.mxu0 0.0
        %2653 = vmatprep.subr.mxu0 0.0
        %2654 = vmatpush1.msra.mxu0 0.0
        %2655 = vmatprep.subr.mxu0 0.0
        %2656 = vmatpush1.msra.mxu0 0.0
        %2657 = vmatprep.subr.mxu0 0.0
        %2658 = vmatpush1.msra.mxu0 0.0
        %2659 = vmatprep.subr.mxu0 0.0
        %2660 = vmatpush1.msra.mxu0 0.0
        %2661 = vmatprep.subr.mxu0 0.0
        %2662 = vmatpush1.msra.mxu0 0.0
        %2663 = vmatprep.subr.mxu0 0.0
        %2664 = vmatpush1.msra.mxu0 0.0
        %2665 = vmatprep.subr.mxu0 0.0
        %2666 = vmatpush1.msra.mxu0 0.0
        %2667 = vmatprep.mubr.f32.mxu0 0.0
        %2668 = vmatmul.mubr.f32.gmra.mrb[0].mxu0 %v2366
        %v2669 = vpop.f32.mrb[0].mxu0
        %v2670 = vadd.f32 %v2363, %v2669
        %v2671 = vpop.f32.mrb[0].mxu0
        %2672 = vdwg.mxu0
        %2674 = vrot.lane.b32.xlu0 %v2457, 121
        %v2675 = vpop.permute.xlu0 %2674
        %vm2677 = vcmask 778240
        %2678 = vst.msk [vmem:[#allocation4] sm:$0x1] %vm2677, %v2675
        %2680 = vrot.lane.b32.xlu0 %v2457, 11
        %v2681 = vpop.permute.xlu0 %2680
        %2682 = vrot.lane.b32.xlu0 %v2459, 11
        %v2683 = vpop.permute.xlu0 %2682
        %vm2684 = vcmask 89088
        %v2685 = vsel %vm2684, %v2681, %v2683
        %2687 = vst.msk [vmem:[#allocation4 + $0x1] sm:$0x1] %vm2677, %v2685
        %2689 = vrot.lane.b32.xlu0 %v2459, 29
        %v2690 = vpop.permute.xlu0 %2689
        %2691 = vrot.lane.b32.xlu0 %v2528, 29
        %v2692 = vpop.permute.xlu0 %2691
        %vm2693 = vcmask 236544
        %v2694 = vsel %vm2693, %v2690, %v2692
        %2696 = vst.msk [vmem:[#allocation4 + $0x2] sm:$0x1] %vm2677, %v2694
        %2698 = vrot.lane.b32.xlu0 %v2528, 47
        %v2699 = vpop.permute.xlu0 %2698
        %2700 = vrot.lane.b32.xlu0 %v2530, 47
        %v2701 = vpop.permute.xlu0 %2700
        %vm2702 = vcmask 384000
        %v2703 = vsel %vm2702, %v2699, %v2701
        %2705 = vst.msk [vmem:[#allocation4 + $0x3] sm:$0x1] %vm2677, %v2703
        %2707 = vrot.lane.b32.xlu0 %v2530, 65
        %v2708 = vpop.permute.xlu0 %2707
        %2709 = vrot.lane.b32.xlu0 %v2599, 65
        %v2710 = vpop.permute.xlu0 %2709
        %vm2711 = vcmask 531456
        %v2712 = vsel %vm2711, %v2708, %v2710
        %2714 = vst.msk [vmem:[#allocation4 + $0x4] sm:$0x1] %vm2677, %v2712
        %2716 = vrot.lane.b32.xlu0 %v2599, 83
        %v2717 = vpop.permute.xlu0 %2716
        %2718 = vrot.lane.b32.xlu0 %v2601, 83
        %v2719 = vpop.permute.xlu0 %2718
        %vm2720 = vcmask 678912
        %v2721 = vsel %vm2720, %v2717, %v2719
        %2723 = vst.msk [vmem:[#allocation4 + $0x5] sm:$0x1] %vm2677, %v2721
        %2724 = vrot.lane.b32.xlu0 %v2601, 101
        %v2725 = vpop.permute.xlu0 %2724
        %2727 = vst.msk [vmem:[#allocation4 + $0x6] sm:$0x1] %vm2677, %v2725
        %2729 = vrot.lane.b32.xlu0 %v2670, 119
        %v2730 = vpop.permute.xlu0 %2729
        %2732 = vst.msk [vmem:[#allocation4 + $0x7] sm:$0x1] %vm2677, %v2730
        %v2733 = vld [vmem:[#allocation4] sm:$0xff]
        %v2734 = vld [vmem:[%s14] sm:$0xff]
        %v2735 = vld [vmem:[%s14 + $0x8] sm:$0xff]
        %v2736 = vld [vmem:[%s14 + $0x10] sm:$0xff]
        %v2737 = vld [vmem:[%s14 + $0x18] sm:$0xff]
        %v2738 = vld [vmem:[%s14 + $0x20] sm:$0xff]
        %v2739 = vld [vmem:[%s14 + $0x28] sm:$0xff]
        %v2740 = vld [vmem:[%s14 + $0x30] sm:$0xff]
        %v2741 = vld [vmem:[%s14 + $0x38] sm:$0xff]
        %v2742 = vld [vmem:[%s14 + $0x40] sm:$0xff]
        %v2743 = vld [vmem:[%s14 + $0x48] sm:$0xff]
        %v2744 = vld [vmem:[%s14 + $0x50] sm:$0xff]
        %v2745 = vld [vmem:[%s14 + $0x58] sm:$0xff]
        %v2747 = vsel %vm497, %v2733, 0
        %2749 = vmatprep.subr.mxu0 0.0
        %2750 = vmatpush1.msra.mxu0 %v2734
        %2751 = vmatprep.subr.mxu0 0.0
        %2752 = vmatpush1.msra.mxu0 %v2735
        %2753 = vmatprep.subr.mxu0 0.0
        %2754 = vmatpush1.msra.mxu0 %v2736
        %2755 = vmatprep.subr.mxu0 0.0
        %2756 = vmatpush1.msra.mxu0 %v2737
        %2757 = vmatprep.subr.mxu0 0.0
        %2758 = vmatpush1.msra.mxu0 %v2738
        %2759 = vmatprep.subr.mxu0 0.0
        %2760 = vmatpush1.msra.mxu0 %v2739
        %2761 = vmatprep.subr.mxu0 0.0
        %2762 = vmatpush1.msra.mxu0 %v2740
        %2763 = vmatprep.subr.mxu0 0.0
        %2764 = vmatpush1.msra.mxu0 %v2741
        %2765 = vmatprep.subr.mxu0 0.0
        %2766 = vmatpush1.msra.mxu0 %v2742
        %2767 = vmatprep.subr.mxu0 0.0
        %2768 = vmatpush1.msra.mxu0 %v2743
        %2769 = vmatprep.subr.mxu0 0.0
        %2770 = vmatpush1.msra.mxu0 %v2744
        %2771 = vmatprep.subr.mxu0 0.0
        %2772 = vmatpush1.msra.mxu0 %v2745
        %2773 = vmatprep.subr.mxu0 0.0
        %2774 = vmatpush1.msra.mxu0 0.0
        %2775 = vmatprep.subr.mxu0 0.0
        %2776 = vmatpush1.msra.mxu0 0.0
        %2777 = vmatprep.subr.mxu0 0.0
        %2778 = vmatpush1.msra.mxu0 0.0
        %2779 = vmatprep.subr.mxu0 0.0
        %2780 = vmatpush1.msra.mxu0 0.0
        %2781 = vmatprep.subr.mxu0 0.0
        %2782 = vmatpush1.msra.mxu0 0.0
        %2783 = vmatprep.subr.mxu0 0.0
        %2784 = vmatpush1.msra.mxu0 0.0
        %2785 = vmatprep.subr.mxu0 0.0
        %2786 = vmatpush1.msra.mxu0 0.0
        %2787 = vmatprep.subr.mxu0 0.0
        %2788 = vmatpush1.msra.mxu0 0.0
        %2789 = vmatprep.subr.mxu0 0.0
        %2790 = vmatpush1.msra.mxu0 0.0
        %2791 = vmatprep.subr.mxu0 0.0
        %2792 = vmatpush1.msra.mxu0 0.0
        %2793 = vmatprep.subr.mxu0 0.0
        %2794 = vmatpush1.msra.mxu0 0.0
        %2795 = vmatprep.subr.mxu0 0.0
        %2796 = vmatpush1.msra.mxu0 0.0
        %2797 = vmatprep.subr.mxu0 0.0
        %2798 = vmatpush1.msra.mxu0 0.0
        %2799 = vmatprep.subr.mxu0 0.0
        %2800 = vmatpush1.msra.mxu0 0.0
        %2801 = vmatprep.subr.mxu0 0.0
        %2802 = vmatpush1.msra.mxu0 0.0
        %2803 = vmatprep.subr.mxu0 0.0
        %2804 = vmatpush1.msra.mxu0 0.0
        %2805 = vmatprep.subr.mxu0 0.0
        %2806 = vmatpush1.msra.mxu0 0.0
        %2807 = vmatprep.subr.mxu0 0.0
        %2808 = vmatpush1.msra.mxu0 0.0
        %2809 = vmatprep.subr.mxu0 0.0
        %2810 = vmatpush1.msra.mxu0 0.0
        %2811 = vmatprep.subr.mxu0 0.0
        %2812 = vmatpush1.msra.mxu0 0.0
        %2813 = vmatprep.mubr.f32.mxu0 0.0
        %2814 = vmatmul.mubr.f32.gmra.mrb[0].mxu0 %v2747
        %v2815 = vpop.f32.mrb[0].mxu0
        %v2816 = vadd.f32 0.0, %v2815
        %v2817 = vpop.f32.mrb[0].mxu0
        %2818 = vdwg.mxu0
        %vm2819 = vcmask 523264
        %v2820 = vsel %vm2819, %v2816, -inf
        %2821 = vmax.xlane.f32.xlu0 %v2820
        %v2822 = vpop.xlane.xlu0 %2821
        %v2823 = vsub.f32 %v2816, %v2822
        %v2824 = vmul.f32 %v2823, 1.442695
        %v2825 = vpow.pop %v2824
        %v2826 = vsel %vm2819, %v2825, 0.0
        %2827 = vadd.xlane.f32.xlu0 %v2826
        %v2828 = vpop.xlane.xlu0 %2827
        %v2829 = vrcp.pop %v2828
        %v2830 = vmul.f32 %v2825, %v2829
        %2831 = vst.msk [vmem:[%s491] sm:$0xff] %vm2819, %v2830
        %s2832 = sand.u32 %s363, 1
        %s2833 = scalar_lea.sflag [#allocation9], %s2832
        %s2834 = sand.u32 %s363, 1
        %s2835 = smul.addr %s2834, 8
        %s2836 = scalar_lea.vmem [#allocation8], %s2835
        // Predicated region
        $region81: #{tpu_custom_call.1} parent=79 // pred_check
          %p2837 = pneg %p373
        $region82: #{tpu_custom_call.1} parent=79 // pred_check_branch
          %2839 = sbr.rel (%p2837) target = $region84
        $region83: #{tpu_custom_call.1} parent=79 // pred_region
          %s2841 = ssub.s32 128, 128
          %2842 = vsyncadd %s2833, %s2841
          %s2843 = smul.addr %s35, 128
          %s2844 = scalar_lea.hbm %s15, %s2843
          %s2846 = sshll.u32 %s2836, 4
          %s2847 = int_to_ptr.vmem [resolvable:$true] %s2846
          %2849 = dma.vmem_to_hbm [thread:$0]  %s2847, 128, %s2844, %s2833
        $region84: #{tpu_custom_call.1} parent=79 // pred_fallthru
          _
      $region80: #{tpu_custom_call.1} parent=5 // pred_fallthru
        _
      %p2850 = scmp.le.s32.totalorder 2, %s30
      // Predicated region
      $region85: #{tpu_custom_call.1} parent=5 // pred_check
        %p2851 = pneg %p2850
      $region86: #{tpu_custom_call.1} parent=5 // pred_check_branch
        %2853 = sbr.rel (%p2851) target = $region88
      $region87: #{tpu_custom_call.1} parent=5 // pred_region
        %s2854 = ssub.s32 %s30, 2
        // Predicated region
        $region89: #{tpu_custom_call.1} parent=87 // pred_check
          %p2855 = pneg %p379
        $region90: #{tpu_custom_call.1} parent=87 // pred_check_branch
          %2857 = sbr.rel (%p2855) target = $region92
        $region91: #{tpu_custom_call.1} parent=87 // pred_region
          %s2858 = sand.u32 %s364, 1
          %s2859 = scalar_lea.sflag [#allocation9], %s2858
          %s2860 = sand.u32 %s364, 1
          %s2861 = smul.addr %s2860, 8
          %s2862 = scalar_lea.vmem [#allocation8], %s2861
          %2863 = dma.done %s2859, 128
        $region92: #{tpu_custom_call.1} parent=87 // pred_fallthru
          _
      $region88: #{tpu_custom_call.1} parent=5 // pred_fallthru
        _
    $region6: #{tpu_custom_call.1} parent=1 // loop_footer
      %s34 = sadd.s32 1, %s30
    $region7: #{tpu_custom_call.1} parent=1 // loop_footer_branch
      %29 = sbr.rel target = $region3
    $region8: #{tpu_custom_call.1} parent=1 // loop_exit
      _
    %2864 = vsyncpa [#allocation9], 1
    %s2865 = scalar_lea.sflag [#allocation9], 1
    %2866 = vsyncpa %s2865, 1

</llo_original>
